<compile_context>
chip_gen: v5e
topology: v5e:2x2
jax: 0.10.0
libtpu: 0.0.40
codegen_flags: <defaults>
</compile_context>

<pallas_src>
import functools
import math

import jax
import jax.numpy as jnp
from jax.experimental import pallas as pl
from jax.experimental.pallas import tpu as pltpu


# ----------------------------------------------------------------------------
# in-kernel helpers
# ----------------------------------------------------------------------------

def _dot(a, b):
    """MXU matmul: bf16 operands, f32 accumulation."""
    return jnp.dot(a.astype(jnp.bfloat16), b.astype(jnp.bfloat16),
                   preferred_element_type=jnp.float32)


def _dot_nt(a, b):
    """a[m,d] . b[n,d] -> [m,n] (contract last dims, no explicit transpose)."""
    return jnp.einsum('md,nd->mn', a.astype(jnp.bfloat16),
                      b.astype(jnp.bfloat16),
                      preferred_element_type=jnp.float32)


def _ln(x, g, b, eps=1e-5):
    mu = jnp.mean(x, axis=-1, keepdims=True)
    var = jnp.mean(jnp.square(x - mu), axis=-1, keepdims=True)
    return (x - mu) * jax.lax.rsqrt(var + eps) * g + b


def _softmax_last(s):
    m = jnp.max(s, axis=-1, keepdims=True)
    e = jnp.exp(s - m)
    return e * pl.reciprocal(jnp.sum(e, axis=-1, keepdims=True), approx=True)


# ----------------------------------------------------------------------------
# pallas_call plumbing (single whole-array block; shapes are tiny)
# ----------------------------------------------------------------------------

_CP = pltpu.CompilerParams(dimension_semantics=("arbitrary",))
# TODO(synk): set vmem_limit_bytes here once tiles/shapes are realistic.


def _spec(shape):
    n = len(shape)
    return pl.BlockSpec(shape, lambda i, _n=n: (0,) * _n)


def _call(kernel, out_shapes, inputs):
    return pl.pallas_call(
        kernel,
        out_shape=tuple(jax.ShapeDtypeStruct(s, jnp.float32) for s in out_shapes),
        grid=(1,),
        in_specs=[_spec(tuple(x.shape)) for x in inputs],
        out_specs=tuple(_spec(s) for s in out_shapes),
        compiler_params=_CP,
    )(*inputs)


# ----------------------------------------------------------------------------
# K1: backbone stub + res_l1/res_l2 + AttentionPool2d + decoder (fused)
# ----------------------------------------------------------------------------

def _mavl_encoder_kernel(
        patches_ref, pw_ref, pb_ref, r1w_ref, r1b_ref, r2w_ref, r2b_ref,
        posc_ref, posb_ref,
        pwq_ref, pbq_ref, pwk_ref, pbk_ref, pwv_ref, pbv_ref, pwc_ref, pbc_ref,
        avg_ref, sel_ref, selt_ref,
        cbook_ref, dw_ref, db_ref,
        ln1g_ref, ln1b_ref, dwq_ref, dbq_ref, dwk_ref, dbk_ref, dwv_ref, dbv_ref,
        dwo_ref, dbo_ref, hmask_ref,
        ln2g_ref, ln2b_ref, ff1w_ref, ff1b_ref, ff2w_ref, ff2b_ref,
        lnfg_ref, lnfb_ref,
        xg_ref, feats_ref, qe_ref,
        *, B, HW, n_dec_heads, pool_scale, dec_scale, alpha):
    # ---------------- visual backbone stub + res_l1 (+PReLU) + res_l2 -------
    feat = _dot(patches_ref[...], pw_ref[...]) + pb_ref[...]          # [B*HW, C]
    r1 = _dot(feat, r1w_ref[...]) + r1b_ref[...]
    r1 = jnp.where(r1 >= 0.0, r1, alpha * r1)                         # PReLU
    xmap = _dot(r1, r2w_ref[...]) + r2b_ref[...]                      # [B*HW, D]

    # ---------------- AttentionPool2d (CLS query only), batched over B ------
    sel = sel_ref[...]                                                # [C, nHp]
    selt = selt_ref[...]                                              # [nHp, C]
    means = _dot(avg_ref[...], feat)                                  # [B, C]
    cls_in = means + posc_ref[...]                                    # [B, C]
    q_cls = _dot(cls_in, pwq_ref[...]) + pbq_ref[...]                 # [B, C]
    k_cls = _dot(cls_in, pwk_ref[...]) + pbk_ref[...]                 # [B, C]
    v_cls = _dot(cls_in, pwv_ref[...]) + pbv_ref[...]                 # [B, C]
    # body projections: (feat + pos) @ W == feat@W + (pos@W + b), so the big
    # matmuls stay fully batched over B*HW and pos is added per batch slice.
    k_feat = _dot(feat, pwk_ref[...])                                 # [B*HW, C]
    v_feat = _dot(feat, pwv_ref[...])                                 # [B*HW, C]
    pos_k = _dot(posb_ref[...], pwk_ref[...]) + pbk_ref[...]          # [HW, C]
    pos_v = _dot(posb_ref[...], pwv_ref[...]) + pbv_ref[...]          # [HW, C]
    s_cls_all = _dot(k_cls * q_cls, sel) * pool_scale                 # [B, nHp]

    attn_rows = []
    for b in range(B):                                                # B small
        qb = q_cls[b:b + 1]                                           # [1, C]
        kb = k_feat[b * HW:(b + 1) * HW] + pos_k                      # [HW, C]
        vb = v_feat[b * HW:(b + 1) * HW] + pos_v                      # [HW, C]
        s_body = _dot(kb * qb, sel) * pool_scale                      # [HW, nHp]
        s_cls = s_cls_all[b:b + 1]                                    # [1, nHp]
        m = jnp.maximum(jnp.max(s_body, axis=0, keepdims=True), s_cls)
        e_body = jnp.exp(s_body - m)
        e_cls = jnp.exp(s_cls - m)
        inv = pl.reciprocal(e_cls + jnp.sum(e_body, axis=0, keepdims=True),
                            approx=True)                              # [1, nHp]
        pc_body = _dot(e_body * inv, selt)                            # [HW, C]
        pc_cls = _dot(e_cls * inv, selt)                              # [1, C]
        attn_rows.append(pc_cls * v_cls[b:b + 1]
                         + jnp.sum(pc_body * vb, axis=0, keepdims=True))
    attn = jnp.concatenate(attn_rows, axis=0)                         # [B, C]
    xg_ref[...] = _dot(attn, pwc_ref[...]) + pbc_ref[...]             # [B, D]

    # ---------------- disease embedding + cross-attention decoder ----------
    # TODO(synk): single pre-norm cross-attention + ReLU FFN layer (+ final LN)
    # stands in for the DETR-style TransformerDecoder (source not provided).
    qe = _dot(cbook_ref[...], dw_ref[...]) + db_ref[...]              # [Q, D]
    qe_ref[...] = qe

    t2 = _ln(qe, ln1g_ref[...], ln1b_ref[...])                        # batch-invariant
    qp = _dot(t2, dwq_ref[...]) + dbq_ref[...]                        # [Q, D]
    k_all = _dot(xmap, dwk_ref[...]) + dbk_ref[...]                   # [B*HW, D]
    v_all = _dot(xmap, dwv_ref[...]) + dbv_ref[...]                   # [B*HW, D]
    hmask = hmask_ref[...]                                            # [nHd, 1, D]
    qms = [qp * hmask[h] for h in range(n_dec_heads)]                 # masked Q per head

    blocks = []
    for b in range(B):
        kb = k_all[b * HW:(b + 1) * HW]                               # [HW, D]
        vb = v_all[b * HW:(b + 1) * HW]                               # [HW, D]
        acc = jnp.zeros_like(qp)                                      # [Q, D]
        for h in range(n_dec_heads):
            # full-D contraction (masked channels contribute zero) and
            # full-D output (masked afterwards): no dh-wide matmuls.
            s = _dot_nt(qms[h], kb) * dec_scale                       # [Q, HW]
            p = _softmax_last(s)
            acc = acc + _dot(p, vb) * hmask[h]                        # [Q, D]
        blocks.append(acc)
    attn_d = jnp.concatenate(blocks, axis=0)                          # [B*Q, D]

    # single full-width out-projection + residual, then FFN (all batched)
    tgt = jnp.concatenate([qe] * B, axis=0) \
        + _dot(attn_d, dwo_ref[...]) + dbo_ref[...]                   # [B*Q, D]
    t2b = _ln(tgt, ln2g_ref[...], ln2b_ref[...])
    ff = jnp.maximum(_dot(t2b, ff1w_ref[...]) + ff1b_ref[...], 0.0)
    tgt = tgt + _dot(ff, ff2w_ref[...]) + ff2b_ref[...]
    feats_ref[...] = _ln(tgt, lnfg_ref[...], lnfb_ref[...])           # [B*Q, D]


def pallas_mavl_encoder(patches, p, B, HW, pool_heads, dec_heads):
    C = p['patch_w'].shape[1]
    D = p['res2_w'].shape[1]
    Qn = p['concept_book'].shape[0]
    dh_pool = C // pool_heads
    dh_dec = D // dec_heads

    bf = lambda w: w.astype(jnp.bfloat16)
    r2 = lambda v: v.reshape(1, -1)

    # channel -> head 0/1 selector for the pool attention (matmul operands)
    head_of_c = jnp.arange(C) // dh_pool
    sel = (head_of_c[:, None] == jnp.arange(pool_heads)[None, :]).astype(jnp.bfloat16)
    selt = sel.T
    # per-batch mean over HW rows as a selector matmul  [B, B*HW]
    avg = (jnp.arange(B)[:, None]
           == (jnp.arange(B * HW)[None, :] // HW)).astype(jnp.bfloat16) / HW
    # decoder per-head channel masks  [nHd, 1, D]
    hmask = (jnp.arange(dec_heads)[:, None, None]
             == (jnp.arange(D)[None, None, :] // dh_dec)).astype(jnp.float32)

    pos = p['pool_pos']
    inputs = [
        patches, bf(p['patch_w']), r2(p['patch_b']),
        bf(p['res1_w']), r2(p['res1_b']),
        bf(p['res2_w']), r2(p['res2_b']),
        pos[0:1], pos[1:],
        bf(p['pool_wq']), r2(p['pool_bq']),
        bf(p['pool_wk']), r2(p['pool_bk']),
        bf(p['pool_wv']), r2(p['pool_bv']),
        bf(p['pool_wc']), r2(p['pool_bc']),
        avg, sel, selt,
        p['concept_book'], bf(p['demb_w']), r2(p['demb_b']),
        r2(p['dec_ln1_g']), r2(p['dec_ln1_b']),
        bf(p['dec_wq']), r2(p['dec_bq']),
        bf(p['dec_wk']), r2(p['dec_bk']),
        bf(p['dec_wv']), r2(p['dec_bv']),
        bf(p['dec_wo']), r2(p['dec_bo']),
        hmask,
        r2(p['dec_ln2_g']), r2(p['dec_ln2_b']),
        bf(p['dec_ff1_w']), r2(p['dec_ff1_b']),
        bf(p['dec_ff2_w']), r2(p['dec_ff2_b']),
        r2(p['dec_lnf_g']), r2(p['dec_lnf_b']),
    ]
    kern = functools.partial(
        _mavl_encoder_kernel, B=B, HW=HW, n_dec_heads=dec_heads,
        pool_scale=1.0 / math.sqrt(dh_pool),
        dec_scale=1.0 / math.sqrt(dh_dec),
        alpha=0.25)  # TODO(synk): learned PReLU alpha baked as a constant.
    x_global, feats, qe = _call(kern, [(B, D), (B * Qn, D), (Qn, D)], inputs)
    return x_global, feats, qe


# ----------------------------------------------------------------------------
# K2: classifier + location_emb/sim + concept group-sum + logits (lane-packed)
# ----------------------------------------------------------------------------

def _mavl_head_kernel(of_ref, xg_ref, qe_ref, wall_ref, ball_ref,
                      packed_ref, log_ref):
    # classifier | (location_emb folded with ana_book) | concept group-sum,
    # all as one lane-packed matmul + single store.
    packed_ref[...] = _dot(of_ref[...], wall_ref[...]) + ball_ref[...]

    # logits with l2-normalisation fused in (F.normalize semantics, eps=1e-12)
    def l2n(t):
        n = jnp.sqrt(jnp.sum(t * t, axis=-1, keepdims=True))
        return t / jnp.maximum(n, 1e-12)

    log_ref[...] = _dot_nt(l2n(xg_ref[...]), l2n(qe_ref[...]))         # [B, Q]


def pallas_mavl_head(out_feats, x_global, qe, p, n_con, D):
    R, F = out_feats.shape
    B = x_global.shape[0]
    Qn = qe.shape[0]
    n_ana = p['ana_book'].shape[0]
    A = p['cls_w'].shape[1]

    # weight-only folds (constant-sized work, done in f32 then cast to bf16):
    #  sim  = (of @ loc_w + loc_b) @ ana_book.T  ->  of @ (loc_w @ ana_book.T) + ...
    #  con  = concept group-sum with classifier.weight[1] folded into a selector
    w_sim = p['loc_w'] @ p['ana_book'].T                               # [F, n_ana]
    b_sim = p['loc_b'] @ p['ana_book'].T                               # [n_ana]
    weight1 = p['cls_w'][:, 1:2]                                       # [F, 1]
    selw = jnp.where(jnp.arange(F)[:, None] // D
                     == jnp.arange(n_con)[None, :], weight1, 0.0)      # [F, n_con]
    w_all = jnp.concatenate([p['cls_w'], w_sim, selw], axis=1).astype(jnp.bfloat16)
    b_all = jnp.concatenate(
        [p['cls_b'], b_sim, jnp.zeros((n_con,), jnp.float32)]).reshape(1, -1)

    packed, logits = _call(_mavl_head_kernel,
                           [(R, A + n_ana + n_con), (B, Qn)],
                           [out_feats, x_global, qe, w_all, b_all])
    x_cls = packed[:, :A]
    sim = packed[:, A:A + n_ana]
    con = packed[:, A + n_ana:]
    return x_cls, sim, con, logits


# ----------------------------------------------------------------------------
# Parameters (deterministic synthetic init)
# ----------------------------------------------------------------------------

def init_mavl_params(key, cfg):
    C = cfg['num_ftrs']; D = cfg['d_model']; P = cfg['patch']; img = cfg['img']
    T = cfg['text_dim']; Fd = cfg['dim_ff']
    n_dis, n_con = cfg['n_disease'], cfg['n_concepts']
    n_ana = cfg['n_ana']
    HW = (img // P) ** 2
    keys = iter(jax.random.split(key, 32))

    def nrm(shape, std=0.02):
        return std * jax.random.normal(next(keys), shape, dtype=jnp.float32)

    z = lambda *s: jnp.zeros(s, jnp.float32)
    o = lambda *s: jnp.ones(s, jnp.float32)

    p = {}
    # TODO(synk): pretrained timm/efficientnet visual backbone replaced by a
    # deterministic patch-embed stub (stride-P PxP conv expressed as a matmul).
    p['patch_w'] = nrm((3 * P * P, C)); p['patch_b'] = z(C)

    # AttentionPool2d
    p['pool_pos'] = nrm((HW + 1, C), std=1.0 / math.sqrt(C))
    p['pool_wq'] = nrm((C, C)); p['pool_bq'] = z(C)
    p['pool_wk'] = nrm((C, C)); p['pool_bk'] = z(C)
    p['pool_wv'] = nrm((C, C)); p['pool_bv'] = z(C)
    p['pool_wc'] = nrm((C, D)); p['pool_bc'] = z(D)

    # disease_embedding_layer (768 -> d_model)
    p['demb_w'] = nrm((T, D)); p['demb_b'] = z(D)

    # res_l1 (1x1 conv + PReLU), res_l2 (1x1 conv)
    p['res1_w'] = nrm((C, C)); p['res1_b'] = z(C)
    p['res2_w'] = nrm((C, D)); p['res2_b'] = z(D)

    # cross-attention decoder (N=1, pre-norm)
    p['dec_ln1_g'] = o(D); p['dec_ln1_b'] = z(D)
    p['dec_wq'] = nrm((D, D)); p['dec_bq'] = z(D)
    p['dec_wk'] = nrm((D, D)); p['dec_bk'] = z(D)
    p['dec_wv'] = nrm((D, D)); p['dec_bv'] = z(D)
    p['dec_wo'] = nrm((D, D)); p['dec_bo'] = z(D)
    p['dec_ln2_g'] = o(D); p['dec_ln2_b'] = z(D)
    p['dec_ff1_w'] = nrm((D, Fd)); p['dec_ff1_b'] = z(Fd)
    p['dec_ff2_w'] = nrm((Fd, D)); p['dec_ff2_b'] = z(D)
    p['dec_lnf_g'] = o(D); p['dec_lnf_b'] = z(D)

    # location_emb: Conv1d(D -> 768, kernel=n_con, stride=n_con) as a matmul;
    # weight stored pre-permuted so its row index = concept*D + channel.
    p['loc_w'] = nrm((n_con * D, T)); p['loc_b'] = z(T)

    # classifier: Linear(d_model * n_concepts, attribute_set_size), stored
    # (in, out); PyTorch classifier.weight[1] == p['cls_w'][:, 1].
    p['cls_w'] = nrm((n_con * D, cfg['attribute_set_size']))
    p['cls_b'] = z(cfg['attribute_set_size'])

    # TODO(synk): BERT text-encoder CLS embeddings (ana/disease/concept books)
    # replaced by deterministic random embeddings of the same shape.
    p['ana_book'] = nrm((n_ana, T), std=1.0)
    p['concept_book'] = nrm((n_dis * n_con, T), std=1.0)
    return p


# ----------------------------------------------------------------------------
# MAVL forward (eval mode, decoder='cross', same_feature=False, bottneck=False)
# ----------------------------------------------------------------------------

def mavl_forward(params, images, cfg):
    B = images.shape[0]
    P = cfg['patch']; D = cfg['d_model']
    n_dis, n_con = cfg['n_disease'], cfg['n_concepts']
    Bh, Bw = images.shape[2] // P, images.shape[3] // P
    HW = Bh * Bw

    # patch extraction for the backbone stub (pure layout op in the wrapper)
    patches = (images.reshape(B, 3, Bh, P, Bw, P)
                     .transpose(0, 2, 4, 1, 3, 5).reshape(B * HW, 3 * P * P))

    # ----- K1: backbone + res_l1/l2 + AttentionPool2d + decoder (fused) -----
    # dropout_feas: eval mode -> identity.
    x_global, feats, query_embed = pallas_mavl_encoder(
        patches, params, B, HW, cfg['pool_heads'], cfg['dec_heads'])

    # rows of `feats` are ordered (batch, disease, concept); a pure row-major
    # reshape yields the [B*n_dis, n_con*D] layout with column = concept*D + d.
    out_feats = feats.reshape(B * n_dis, n_con * D)

    # ----- K2: classifier + sim + concept group-sum + logits -----
    x_cls, sim, concept_features, logits = pallas_mavl_head(
        out_feats, x_global, query_embed, params, n_con, D)

    x_cls = x_cls.reshape(B, n_dis, -1)
    sim = sim.reshape(B, n_dis, -1)
    concept_features = concept_features.reshape(B, n_dis, n_con)
    logits = logits.reshape(B, n_dis, n_con).transpose(0, 2, 1)  # [B, n_con, n_dis]
    out = out_feats.reshape(B, n_dis, n_con * D)
    return x_cls, sim, concept_features, logits, out


# ----------------------------------------------------------------------------

if __name__ == "__main__":
    cfg = dict(d_model=32, num_ftrs=64, img=32, patch=8,
               pool_heads=8, dec_heads=4,
               n_disease=3, n_concepts=4, n_ana=8,
               attribute_set_size=2, dim_ff=64, text_dim=768)

    key = jax.random.PRNGKey(0)
    pkey, xkey = jax.random.split(key)
    params = init_mavl_params(pkey, cfg)
    images = jax.random.normal(xkey, (2, 3, 32, 32), dtype=jnp.float32)

    fwd = jax.jit(lambda p, im: mavl_forward(p, im, cfg))
    outs = jax.block_until_ready(fwd(params, images))

    x_cls, sim, concept_features, logits, out = outs
    assert x_cls.shape == (2, 3, 2)
    assert sim.shape == (2, 3, 8)
    assert concept_features.shape == (2, 3, 4)
    assert logits.shape == (2, 4, 3)
    assert out.shape == (2, 3, 128)
    assert all(bool(jnp.all(jnp.isfinite(t))) for t in outs)
    print("KERNEL_OK")
</pallas_src>

<mosaic_0001>
module attributes {stable_mosaic.version = 11 : i64} {
  func.func @_mavl_encoder_kernel(%arg0: i32, %arg1: memref<32x192xf32, #tpu.memory_space<vmem>>, %arg2: memref<192x64xbf16, #tpu.memory_space<vmem>>, %arg3: memref<1x64xf32, #tpu.memory_space<vmem>>, %arg4: memref<64x64xbf16, #tpu.memory_space<vmem>>, %arg5: memref<1x64xf32, #tpu.memory_space<vmem>>, %arg6: memref<64x32xbf16, #tpu.memory_space<vmem>>, %arg7: memref<1x32xf32, #tpu.memory_space<vmem>>, %arg8: memref<1x64xf32, #tpu.memory_space<vmem>>, %arg9: memref<16x64xf32, #tpu.memory_space<vmem>>, %arg10: memref<64x64xbf16, #tpu.memory_space<vmem>>, %arg11: memref<1x64xf32, #tpu.memory_space<vmem>>, %arg12: memref<64x64xbf16, #tpu.memory_space<vmem>>, %arg13: memref<1x64xf32, #tpu.memory_space<vmem>>, %arg14: memref<64x64xbf16, #tpu.memory_space<vmem>>, %arg15: memref<1x64xf32, #tpu.memory_space<vmem>>, %arg16: memref<64x32xbf16, #tpu.memory_space<vmem>>, %arg17: memref<1x32xf32, #tpu.memory_space<vmem>>, %arg18: memref<2x32xbf16, #tpu.memory_space<vmem>>, %arg19: memref<64x8xbf16, #tpu.memory_space<vmem>>, %arg20: memref<8x64xbf16, #tpu.memory_space<vmem>>, %arg21: memref<12x768xf32, #tpu.memory_space<vmem>>, %arg22: memref<768x32xbf16, #tpu.memory_space<vmem>>, %arg23: memref<1x32xf32, #tpu.memory_space<vmem>>, %arg24: memref<1x32xf32, #tpu.memory_space<vmem>>, %arg25: memref<1x32xf32, #tpu.memory_space<vmem>>, %arg26: memref<32x32xbf16, #tpu.memory_space<vmem>>, %arg27: memref<1x32xf32, #tpu.memory_space<vmem>>, %arg28: memref<32x32xbf16, #tpu.memory_space<vmem>>, %arg29: memref<1x32xf32, #tpu.memory_space<vmem>>, %arg30: memref<32x32xbf16, #tpu.memory_space<vmem>>, %arg31: memref<1x32xf32, #tpu.memory_space<vmem>>, %arg32: memref<32x32xbf16, #tpu.memory_space<vmem>>, %arg33: memref<1x32xf32, #tpu.memory_space<vmem>>, %arg34: memref<4x1x32xf32, #tpu.memory_space<vmem>>, %arg35: memref<1x32xf32, #tpu.memory_space<vmem>>, %arg36: memref<1x32xf32, #tpu.memory_space<vmem>>, %arg37: memref<32x64xbf16, #tpu.memory_space<vmem>>, %arg38: memref<1x64xf32, #tpu.memory_space<vmem>>, %arg39: memref<64x32xbf16, #tpu.memory_space<vmem>>, %arg40: memref<1x32xf32, #tpu.memory_space<vmem>>, %arg41: memref<1x32xf32, #tpu.memory_space<vmem>>, %arg42: memref<1x32xf32, #tpu.memory_space<vmem>>, %arg43: memref<2x32xf32, #tpu.memory_space<vmem>>, %arg44: memref<24x32xf32, #tpu.memory_space<vmem>>, %arg45: memref<12x32xf32, #tpu.memory_space<vmem>>) attributes {dimension_semantics = [#tpu.dimension_semantics<arbitrary>], iteration_bounds = array<i64: 1>, scalar_prefetch = 0 : i64, scratch_operands = 0 : i64, tpu.core_type = #tpu.core_type<tc>, window_params = [{pipeline_mode = #tpu.pipeline_mode<synchronous>, transform_indices = @transform_0, window_bounds = array<i64: 32, 192>}, {pipeline_mode = #tpu.pipeline_mode<synchronous>, transform_indices = @transform_1, window_bounds = array<i64: 192, 64>}, {pipeline_mode = #tpu.pipeline_mode<synchronous>, transform_indices = @transform_2, window_bounds = array<i64: 1, 64>}, {pipeline_mode = #tpu.pipeline_mode<synchronous>, transform_indices = @transform_3, window_bounds = array<i64: 64, 64>}, {pipeline_mode = #tpu.pipeline_mode<synchronous>, transform_indices = @transform_4, window_bounds = array<i64: 1, 64>}, {pipeline_mode = #tpu.pipeline_mode<synchronous>, transform_indices = @transform_5, window_bounds = array<i64: 64, 32>}, {pipeline_mode = #tpu.pipeline_mode<synchronous>, transform_indices = @transform_6, window_bounds = array<i64: 1, 32>}, {pipeline_mode = #tpu.pipeline_mode<synchronous>, transform_indices = @transform_7, window_bounds = array<i64: 1, 64>}, {pipeline_mode = #tpu.pipeline_mode<synchronous>, transform_indices = @transform_8, window_bounds = array<i64: 16, 64>}, {pipeline_mode = #tpu.pipeline_mode<synchronous>, transform_indices = @transform_9, window_bounds = array<i64: 64, 64>}, {pipeline_mode = #tpu.pipeline_mode<synchronous>, transform_indices = @transform_10, window_bounds = array<i64: 1, 64>}, {pipeline_mode = #tpu.pipeline_mode<synchronous>, transform_indices = @transform_11, window_bounds = array<i64: 64, 64>}, {pipeline_mode = #tpu.pipeline_mode<synchronous>, transform_indices = @transform_12, window_bounds = array<i64: 1, 64>}, {pipeline_mode = #tpu.pipeline_mode<synchronous>, transform_indices = @transform_13, window_bounds = array<i64: 64, 64>}, {pipeline_mode = #tpu.pipeline_mode<synchronous>, transform_indices = @transform_14, window_bounds = array<i64: 1, 64>}, {pipeline_mode = #tpu.pipeline_mode<synchronous>, transform_indices = @transform_15, window_bounds = array<i64: 64, 32>}, {pipeline_mode = #tpu.pipeline_mode<synchronous>, transform_indices = @transform_16, window_bounds = array<i64: 1, 32>}, {pipeline_mode = #tpu.pipeline_mode<synchronous>, transform_indices = @transform_17, window_bounds = array<i64: 2, 32>}, {pipeline_mode = #tpu.pipeline_mode<synchronous>, transform_indices = @transform_18, window_bounds = array<i64: 64, 8>}, {pipeline_mode = #tpu.pipeline_mode<synchronous>, transform_indices = @transform_19, window_bounds = array<i64: 8, 64>}, {pipeline_mode = #tpu.pipeline_mode<synchronous>, transform_indices = @transform_20, window_bounds = array<i64: 12, 768>}, {pipeline_mode = #tpu.pipeline_mode<synchronous>, transform_indices = @transform_21, window_bounds = array<i64: 768, 32>}, {pipeline_mode = #tpu.pipeline_mode<synchronous>, transform_indices = @transform_22, window_bounds = array<i64: 1, 32>}, {pipeline_mode = #tpu.pipeline_mode<synchronous>, transform_indices = @transform_23, window_bounds = array<i64: 1, 32>}, {pipeline_mode = #tpu.pipeline_mode<synchronous>, transform_indices = @transform_24, window_bounds = array<i64: 1, 32>}, {pipeline_mode = #tpu.pipeline_mode<synchronous>, transform_indices = @transform_25, window_bounds = array<i64: 32, 32>}, {pipeline_mode = #tpu.pipeline_mode<synchronous>, transform_indices = @transform_26, window_bounds = array<i64: 1, 32>}, {pipeline_mode = #tpu.pipeline_mode<synchronous>, transform_indices = @transform_27, window_bounds = array<i64: 32, 32>}, {pipeline_mode = #tpu.pipeline_mode<synchronous>, transform_indices = @transform_28, window_bounds = array<i64: 1, 32>}, {pipeline_mode = #tpu.pipeline_mode<synchronous>, transform_indices = @transform_29, window_bounds = array<i64: 32, 32>}, {pipeline_mode = #tpu.pipeline_mode<synchronous>, transform_indices = @transform_30, window_bounds = array<i64: 1, 32>}, {pipeline_mode = #tpu.pipeline_mode<synchronous>, transform_indices = @transform_31, window_bounds = array<i64: 32, 32>}, {pipeline_mode = #tpu.pipeline_mode<synchronous>, transform_indices = @transform_32, window_bounds = array<i64: 1, 32>}, {pipeline_mode = #tpu.pipeline_mode<synchronous>, transform_indices = @transform_33, window_bounds = array<i64: 4, 1, 32>}, {pipeline_mode = #tpu.pipeline_mode<synchronous>, transform_indices = @transform_34, window_bounds = array<i64: 1, 32>}, {pipeline_mode = #tpu.pipeline_mode<synchronous>, transform_indices = @transform_35, window_bounds = array<i64: 1, 32>}, {pipeline_mode = #tpu.pipeline_mode<synchronous>, transform_indices = @transform_36, window_bounds = array<i64: 32, 64>}, {pipeline_mode = #tpu.pipeline_mode<synchronous>, transform_indices = @transform_37, window_bounds = array<i64: 1, 64>}, {pipeline_mode = #tpu.pipeline_mode<synchronous>, transform_indices = @transform_38, window_bounds = array<i64: 64, 32>}, {pipeline_mode = #tpu.pipeline_mode<synchronous>, transform_indices = @transform_39, window_bounds = array<i64: 1, 32>}, {pipeline_mode = #tpu.pipeline_mode<synchronous>, transform_indices = @transform_40, window_bounds = array<i64: 1, 32>}, {pipeline_mode = #tpu.pipeline_mode<synchronous>, transform_indices = @transform_41, window_bounds = array<i64: 1, 32>}, {pipeline_mode = #tpu.pipeline_mode<synchronous>, transform_indices = @transform_42, window_bounds = array<i64: 2, 32>}, {pipeline_mode = #tpu.pipeline_mode<synchronous>, transform_indices = @transform_43, window_bounds = array<i64: 24, 32>}, {pipeline_mode = #tpu.pipeline_mode<synchronous>, transform_indices = @transform_44, window_bounds = array<i64: 12, 32>}]} {
    %c0 = arith.constant 0 : index
    %c0_0 = arith.constant 0 : index
    %0 = vector.load %arg1[%c0, %c0_0] : memref<32x192xf32, #tpu.memory_space<vmem>>, vector<32x192xf32>
    %c0_1 = arith.constant 0 : index
    %c0_2 = arith.constant 0 : index
    %1 = vector.load %arg2[%c0_1, %c0_2] : memref<192x64xbf16, #tpu.memory_space<vmem>>, vector<192x64xbf16>
    %2 = arith.truncf %0 : vector<32x192xf32> to vector<32x192xbf16>
    %cst = arith.constant dense<0.000000e+00> : vector<32x64xf32>
    %3 = tpu.matmul %2, %1, %cst {dimension_numbers = #tpu.dot_dimension_numbers<[1], [0], [0], [1], [0, 0, 1, 1], [], []>} : vector<32x192xbf16>, vector<192x64xbf16>, vector<32x64xf32> -> vector<32x64xf32>
    %c0_3 = arith.constant 0 : index
    %c0_4 = arith.constant 0 : index
    %4 = vector.load %arg3[%c0_3, %c0_4] : memref<1x64xf32, #tpu.memory_space<vmem>>, vector<1x64xf32>
    %5 = vector.broadcast %4 : vector<1x64xf32> to vector<32x64xf32>
    %6 = arith.addf %3, %5 : vector<32x64xf32>
    %c0_5 = arith.constant 0 : index
    %c0_6 = arith.constant 0 : index
    %7 = vector.load %arg4[%c0_5, %c0_6] : memref<64x64xbf16, #tpu.memory_space<vmem>>, vector<64x64xbf16>
    %8 = arith.truncf %6 : vector<32x64xf32> to vector<32x64xbf16>
    %cst_7 = arith.constant dense<0.000000e+00> : vector<32x64xf32>
    %9 = tpu.matmul %8, %7, %cst_7 {dimension_numbers = #tpu.dot_dimension_numbers<[1], [0], [0], [1], [0, 0, 1, 1], [], []>} : vector<32x64xbf16>, vector<64x64xbf16>, vector<32x64xf32> -> vector<32x64xf32>
    %c0_8 = arith.constant 0 : index
    %c0_9 = arith.constant 0 : index
    %10 = vector.load %arg5[%c0_8, %c0_9] : memref<1x64xf32, #tpu.memory_space<vmem>>, vector<1x64xf32>
    %11 = vector.broadcast %10 : vector<1x64xf32> to vector<32x64xf32>
    %12 = arith.addf %9, %11 : vector<32x64xf32>
    %cst_10 = arith.constant 0.000000e+00 : f32
    %13 = vector.broadcast %cst_10 : f32 to vector<32x64xf32>
    %14 = arith.cmpf oge, %12, %13 : vector<32x64xf32>
    %cst_11 = arith.constant 2.500000e-01 : f32
    %15 = vector.broadcast %cst_11 : f32 to vector<32x64xf32>
    %16 = arith.mulf %15, %12 : vector<32x64xf32>
    %17 = arith.select %14, %12, %16 : vector<32x64xi1>, vector<32x64xf32>
    %c0_12 = arith.constant 0 : index
    %c0_13 = arith.constant 0 : index
    %18 = vector.load %arg6[%c0_12, %c0_13] : memref<64x32xbf16, #tpu.memory_space<vmem>>, vector<64x32xbf16>
    %19 = arith.truncf %17 : vector<32x64xf32> to vector<32x64xbf16>
    %cst_14 = arith.constant dense<0.000000e+00> : vector<32x32xf32>
    %20 = tpu.matmul %19, %18, %cst_14 {dimension_numbers = #tpu.dot_dimension_numbers<[1], [0], [0], [1], [0, 0, 1, 1], [], []>} : vector<32x64xbf16>, vector<64x32xbf16>, vector<32x32xf32> -> vector<32x32xf32>
    %c0_15 = arith.constant 0 : index
    %c0_16 = arith.constant 0 : index
    %21 = vector.load %arg7[%c0_15, %c0_16] : memref<1x32xf32, #tpu.memory_space<vmem>>, vector<1x32xf32>
    %22 = vector.broadcast %21 : vector<1x32xf32> to vector<32x32xf32>
    %23 = arith.addf %20, %22 : vector<32x32xf32>
    %c0_17 = arith.constant 0 : index
    %c0_18 = arith.constant 0 : index
    %24 = vector.load %arg19[%c0_17, %c0_18] : memref<64x8xbf16, #tpu.memory_space<vmem>>, vector<64x8xbf16>
    %c0_19 = arith.constant 0 : index
    %c0_20 = arith.constant 0 : index
    %25 = vector.load %arg20[%c0_19, %c0_20] : memref<8x64xbf16, #tpu.memory_space<vmem>>, vector<8x64xbf16>
    %c0_21 = arith.constant 0 : index
    %c0_22 = arith.constant 0 : index
    %26 = vector.load %arg18[%c0_21, %c0_22] : memref<2x32xbf16, #tpu.memory_space<vmem>>, vector<2x32xbf16>
    %27 = arith.truncf %6 : vector<32x64xf32> to vector<32x64xbf16>
    %cst_23 = arith.constant dense<0.000000e+00> : vector<2x64xf32>
    %28 = tpu.matmul %26, %27, %cst_23 {dimension_numbers = #tpu.dot_dimension_numbers<[1], [0], [0], [1], [0, 0, 1, 1], [], []>} : vector<2x32xbf16>, vector<32x64xbf16>, vector<2x64xf32> -> vector<2x64xf32>
    %c0_24 = arith.constant 0 : index
    %c0_25 = arith.constant 0 : index
    %29 = vector.load %arg8[%c0_24, %c0_25] : memref<1x64xf32, #tpu.memory_space<vmem>>, vector<1x64xf32>
    %30 = vector.broadcast %29 : vector<1x64xf32> to vector<2x64xf32>
    %31 = arith.addf %28, %30 : vector<2x64xf32>
    %c0_26 = arith.constant 0 : index
    %c0_27 = arith.constant 0 : index
    %32 = vector.load %arg10[%c0_26, %c0_27] : memref<64x64xbf16, #tpu.memory_space<vmem>>, vector<64x64xbf16>
    %33 = arith.truncf %31 : vector<2x64xf32> to vector<2x64xbf16>
    %cst_28 = arith.constant dense<0.000000e+00> : vector<2x64xf32>
    %34 = tpu.matmul %33, %32, %cst_28 {dimension_numbers = #tpu.dot_dimension_numbers<[1], [0], [0], [1], [0, 0, 1, 1], [], []>} : vector<2x64xbf16>, vector<64x64xbf16>, vector<2x64xf32> -> vector<2x64xf32>
    %c0_29 = arith.constant 0 : index
    %c0_30 = arith.constant 0 : index
    %35 = vector.load %arg11[%c0_29, %c0_30] : memref<1x64xf32, #tpu.memory_space<vmem>>, vector<1x64xf32>
    %36 = vector.broadcast %35 : vector<1x64xf32> to vector<2x64xf32>
    %37 = arith.addf %34, %36 : vector<2x64xf32>
    %c0_31 = arith.constant 0 : index
    %c0_32 = arith.constant 0 : index
    %38 = vector.load %arg12[%c0_31, %c0_32] : memref<64x64xbf16, #tpu.memory_space<vmem>>, vector<64x64xbf16>
    %39 = arith.truncf %31 : vector<2x64xf32> to vector<2x64xbf16>
    %cst_33 = arith.constant dense<0.000000e+00> : vector<2x64xf32>
    %40 = tpu.matmul %39, %38, %cst_33 {dimension_numbers = #tpu.dot_dimension_numbers<[1], [0], [0], [1], [0, 0, 1, 1], [], []>} : vector<2x64xbf16>, vector<64x64xbf16>, vector<2x64xf32> -> vector<2x64xf32>
    %c0_34 = arith.constant 0 : index
    %c0_35 = arith.constant 0 : index
    %41 = vector.load %arg13[%c0_34, %c0_35] : memref<1x64xf32, #tpu.memory_space<vmem>>, vector<1x64xf32>
    %42 = vector.broadcast %41 : vector<1x64xf32> to vector<2x64xf32>
    %43 = arith.addf %40, %42 : vector<2x64xf32>
    %c0_36 = arith.constant 0 : index
    %c0_37 = arith.constant 0 : index
    %44 = vector.load %arg14[%c0_36, %c0_37] : memref<64x64xbf16, #tpu.memory_space<vmem>>, vector<64x64xbf16>
    %45 = arith.truncf %31 : vector<2x64xf32> to vector<2x64xbf16>
    %cst_38 = arith.constant dense<0.000000e+00> : vector<2x64xf32>
    %46 = tpu.matmul %45, %44, %cst_38 {dimension_numbers = #tpu.dot_dimension_numbers<[1], [0], [0], [1], [0, 0, 1, 1], [], []>} : vector<2x64xbf16>, vector<64x64xbf16>, vector<2x64xf32> -> vector<2x64xf32>
    %c0_39 = arith.constant 0 : index
    %c0_40 = arith.constant 0 : index
    %47 = vector.load %arg15[%c0_39, %c0_40] : memref<1x64xf32, #tpu.memory_space<vmem>>, vector<1x64xf32>
    %48 = vector.broadcast %47 : vector<1x64xf32> to vector<2x64xf32>
    %49 = arith.addf %46, %48 : vector<2x64xf32>
    %c0_41 = arith.constant 0 : index
    %c0_42 = arith.constant 0 : index
    %50 = vector.load %arg12[%c0_41, %c0_42] : memref<64x64xbf16, #tpu.memory_space<vmem>>, vector<64x64xbf16>
    %51 = arith.truncf %6 : vector<32x64xf32> to vector<32x64xbf16>
    %cst_43 = arith.constant dense<0.000000e+00> : vector<32x64xf32>
    %52 = tpu.matmul %51, %50, %cst_43 {dimension_numbers = #tpu.dot_dimension_numbers<[1], [0], [0], [1], [0, 0, 1, 1], [], []>} : vector<32x64xbf16>, vector<64x64xbf16>, vector<32x64xf32> -> vector<32x64xf32>
    %c0_44 = arith.constant 0 : index
    %c0_45 = arith.constant 0 : index
    %53 = vector.load %arg14[%c0_44, %c0_45] : memref<64x64xbf16, #tpu.memory_space<vmem>>, vector<64x64xbf16>
    %54 = arith.truncf %6 : vector<32x64xf32> to vector<32x64xbf16>
    %cst_46 = arith.constant dense<0.000000e+00> : vector<32x64xf32>
    %55 = tpu.matmul %54, %53, %cst_46 {dimension_numbers = #tpu.dot_dimension_numbers<[1], [0], [0], [1], [0, 0, 1, 1], [], []>} : vector<32x64xbf16>, vector<64x64xbf16>, vector<32x64xf32> -> vector<32x64xf32>
    %c0_47 = arith.constant 0 : index
    %c0_48 = arith.constant 0 : index
    %56 = vector.load %arg9[%c0_47, %c0_48] : memref<16x64xf32, #tpu.memory_space<vmem>>, vector<16x64xf32>
    %c0_49 = arith.constant 0 : index
    %c0_50 = arith.constant 0 : index
    %57 = vector.load %arg12[%c0_49, %c0_50] : memref<64x64xbf16, #tpu.memory_space<vmem>>, vector<64x64xbf16>
    %58 = arith.truncf %56 : vector<16x64xf32> to vector<16x64xbf16>
    %cst_51 = arith.constant dense<0.000000e+00> : vector<16x64xf32>
    %59 = tpu.matmul %58, %57, %cst_51 {dimension_numbers = #tpu.dot_dimension_numbers<[1], [0], [0], [1], [0, 0, 1, 1], [], []>} : vector<16x64xbf16>, vector<64x64xbf16>, vector<16x64xf32> -> vector<16x64xf32>
    %c0_52 = arith.constant 0 : index
    %c0_53 = arith.constant 0 : index
    %60 = vector.load %arg13[%c0_52, %c0_53] : memref<1x64xf32, #tpu.memory_space<vmem>>, vector<1x64xf32>
    %61 = vector.broadcast %60 : vector<1x64xf32> to vector<16x64xf32>
    %62 = arith.addf %59, %61 : vector<16x64xf32>
    %c0_54 = arith.constant 0 : index
    %c0_55 = arith.constant 0 : index
    %63 = vector.load %arg9[%c0_54, %c0_55] : memref<16x64xf32, #tpu.memory_space<vmem>>, vector<16x64xf32>
    %c0_56 = arith.constant 0 : index
    %c0_57 = arith.constant 0 : index
    %64 = vector.load %arg14[%c0_56, %c0_57] : memref<64x64xbf16, #tpu.memory_space<vmem>>, vector<64x64xbf16>
    %65 = arith.truncf %63 : vector<16x64xf32> to vector<16x64xbf16>
    %cst_58 = arith.constant dense<0.000000e+00> : vector<16x64xf32>
    %66 = tpu.matmul %65, %64, %cst_58 {dimension_numbers = #tpu.dot_dimension_numbers<[1], [0], [0], [1], [0, 0, 1, 1], [], []>} : vector<16x64xbf16>, vector<64x64xbf16>, vector<16x64xf32> -> vector<16x64xf32>
    %c0_59 = arith.constant 0 : index
    %c0_60 = arith.constant 0 : index
    %67 = vector.load %arg15[%c0_59, %c0_60] : memref<1x64xf32, #tpu.memory_space<vmem>>, vector<1x64xf32>
    %68 = vector.broadcast %67 : vector<1x64xf32> to vector<16x64xf32>
    %69 = arith.addf %66, %68 : vector<16x64xf32>
    %70 = arith.mulf %43, %37 : vector<2x64xf32>
    %71 = arith.truncf %70 : vector<2x64xf32> to vector<2x64xbf16>
    %cst_61 = arith.constant dense<0.000000e+00> : vector<2x8xf32>
    %72 = tpu.matmul %71, %24, %cst_61 {dimension_numbers = #tpu.dot_dimension_numbers<[1], [0], [0], [1], [0, 0, 1, 1], [], []>} : vector<2x64xbf16>, vector<64x8xbf16>, vector<2x8xf32> -> vector<2x8xf32>
    %cst_62 = arith.constant 0.353553385 : f32
    %73 = vector.broadcast %cst_62 : f32 to vector<2x8xf32>
    %74 = arith.mulf %72, %73 : vector<2x8xf32>
    %75 = vector.extract_strided_slice %37 {offsets = [0, 0], sizes = [1, 64], strides = [1, 1]} : vector<2x64xf32> to vector<1x64xf32>
    %76 = vector.extract_strided_slice %52 {offsets = [0, 0], sizes = [16, 64], strides = [1, 1]} : vector<32x64xf32> to vector<16x64xf32>
    %77 = arith.addf %76, %62 : vector<16x64xf32>
    %78 = vector.extract_strided_slice %55 {offsets = [0, 0], sizes = [16, 64], strides = [1, 1]} : vector<32x64xf32> to vector<16x64xf32>
    %79 = arith.addf %78, %69 : vector<16x64xf32>
    %80 = vector.broadcast %75 : vector<1x64xf32> to vector<16x64xf32>
    %81 = arith.mulf %77, %80 : vector<16x64xf32>
    %82 = arith.truncf %81 : vector<16x64xf32> to vector<16x64xbf16>
    %cst_63 = arith.constant dense<0.000000e+00> : vector<16x8xf32>
    %83 = tpu.matmul %82, %24, %cst_63 {dimension_numbers = #tpu.dot_dimension_numbers<[1], [0], [0], [1], [0, 0, 1, 1], [], []>} : vector<16x64xbf16>, vector<64x8xbf16>, vector<16x8xf32> -> vector<16x8xf32>
    %cst_64 = arith.constant 0.353553385 : f32
    %84 = vector.broadcast %cst_64 : f32 to vector<16x8xf32>
    %85 = arith.mulf %83, %84 : vector<16x8xf32>
    %86 = vector.extract_strided_slice %74 {offsets = [0, 0], sizes = [1, 8], strides = [1, 1]} : vector<2x8xf32> to vector<1x8xf32>
    %cst_65 = arith.constant dense<0xFF800000> : vector<8xf32>
    %87 = vector.multi_reduction <maximumf>, %85, %cst_65 [0] : vector<16x8xf32> to vector<8xf32>
    %88 = vector.shape_cast %87 : vector<8xf32> to vector<1x8xf32>
    %89 = arith.maximumf %88, %86 : vector<1x8xf32>
    %90 = vector.broadcast %89 : vector<1x8xf32> to vector<16x8xf32>
    %91 = arith.subf %85, %90 : vector<16x8xf32>
    %92 = math.exp %91 : vector<16x8xf32>
    %93 = arith.subf %86, %89 : vector<1x8xf32>
    %94 = math.exp %93 : vector<1x8xf32>
    %cst_66 = arith.constant dense<0.000000e+00> : vector<8xf32>
    %95 = vector.multi_reduction <add>, %92, %cst_66 [0] : vector<16x8xf32> to vector<8xf32>
    %96 = vector.shape_cast %95 : vector<8xf32> to vector<1x8xf32>
    %97 = arith.addf %94, %96 : vector<1x8xf32>
    %98 = tpu.reciprocal %97 {approx = true} : vector<1x8xf32> -> vector<1x8xf32>
    %99 = vector.broadcast %98 : vector<1x8xf32> to vector<16x8xf32>
    %100 = arith.mulf %92, %99 : vector<16x8xf32>
    %101 = arith.truncf %100 : vector<16x8xf32> to vector<16x8xbf16>
    %cst_67 = arith.constant dense<0.000000e+00> : vector<16x64xf32>
    %102 = tpu.matmul %101, %25, %cst_67 {dimension_numbers = #tpu.dot_dimension_numbers<[1], [0], [0], [1], [0, 0, 1, 1], [], []>} : vector<16x8xbf16>, vector<8x64xbf16>, vector<16x64xf32> -> vector<16x64xf32>
    %103 = arith.mulf %94, %98 : vector<1x8xf32>
    %104 = arith.truncf %103 : vector<1x8xf32> to vector<1x8xbf16>
    %cst_68 = arith.constant dense<0.000000e+00> : vector<1x64xf32>
    %105 = tpu.matmul %104, %25, %cst_68 {dimension_numbers = #tpu.dot_dimension_numbers<[1], [0], [0], [1], [0, 0, 1, 1], [], []>} : vector<1x8xbf16>, vector<8x64xbf16>, vector<1x64xf32> -> vector<1x64xf32>
    %106 = vector.extract_strided_slice %49 {offsets = [0, 0], sizes = [1, 64], strides = [1, 1]} : vector<2x64xf32> to vector<1x64xf32>
    %107 = arith.mulf %105, %106 : vector<1x64xf32>
    %108 = arith.mulf %102, %79 : vector<16x64xf32>
    %cst_69 = arith.constant dense<0.000000e+00> : vector<64xf32>
    %109 = vector.multi_reduction <add>, %108, %cst_69 [0] : vector<16x64xf32> to vector<64xf32>
    %110 = vector.shape_cast %109 : vector<64xf32> to vector<1x64xf32>
    %111 = arith.addf %107, %110 : vector<1x64xf32>
    %112 = vector.extract_strided_slice %37 {offsets = [1, 0], sizes = [1, 64], strides = [1, 1]} : vector<2x64xf32> to vector<1x64xf32>
    %113 = vector.extract_strided_slice %52 {offsets = [16, 0], sizes = [16, 64], strides = [1, 1]} : vector<32x64xf32> to vector<16x64xf32>
    %114 = arith.addf %113, %62 : vector<16x64xf32>
    %115 = vector.extract_strided_slice %55 {offsets = [16, 0], sizes = [16, 64], strides = [1, 1]} : vector<32x64xf32> to vector<16x64xf32>
    %116 = arith.addf %115, %69 : vector<16x64xf32>
    %117 = vector.broadcast %112 : vector<1x64xf32> to vector<16x64xf32>
    %118 = arith.mulf %114, %117 : vector<16x64xf32>
    %119 = arith.truncf %118 : vector<16x64xf32> to vector<16x64xbf16>
    %cst_70 = arith.constant dense<0.000000e+00> : vector<16x8xf32>
    %120 = tpu.matmul %119, %24, %cst_70 {dimension_numbers = #tpu.dot_dimension_numbers<[1], [0], [0], [1], [0, 0, 1, 1], [], []>} : vector<16x64xbf16>, vector<64x8xbf16>, vector<16x8xf32> -> vector<16x8xf32>
    %cst_71 = arith.constant 0.353553385 : f32
    %121 = vector.broadcast %cst_71 : f32 to vector<16x8xf32>
    %122 = arith.mulf %120, %121 : vector<16x8xf32>
    %123 = vector.extract_strided_slice %74 {offsets = [1, 0], sizes = [1, 8], strides = [1, 1]} : vector<2x8xf32> to vector<1x8xf32>
    %cst_72 = arith.constant dense<0xFF800000> : vector<8xf32>
    %124 = vector.multi_reduction <maximumf>, %122, %cst_72 [0] : vector<16x8xf32> to vector<8xf32>
    %125 = vector.shape_cast %124 : vector<8xf32> to vector<1x8xf32>
    %126 = arith.maximumf %125, %123 : vector<1x8xf32>
    %127 = vector.broadcast %126 : vector<1x8xf32> to vector<16x8xf32>
    %128 = arith.subf %122, %127 : vector<16x8xf32>
    %129 = math.exp %128 : vector<16x8xf32>
    %130 = arith.subf %123, %126 : vector<1x8xf32>
    %131 = math.exp %130 : vector<1x8xf32>
    %cst_73 = arith.constant dense<0.000000e+00> : vector<8xf32>
    %132 = vector.multi_reduction <add>, %129, %cst_73 [0] : vector<16x8xf32> to vector<8xf32>
    %133 = vector.shape_cast %132 : vector<8xf32> to vector<1x8xf32>
    %134 = arith.addf %131, %133 : vector<1x8xf32>
    %135 = tpu.reciprocal %134 {approx = true} : vector<1x8xf32> -> vector<1x8xf32>
    %136 = vector.broadcast %135 : vector<1x8xf32> to vector<16x8xf32>
    %137 = arith.mulf %129, %136 : vector<16x8xf32>
    %138 = arith.truncf %137 : vector<16x8xf32> to vector<16x8xbf16>
    %cst_74 = arith.constant dense<0.000000e+00> : vector<16x64xf32>
    %139 = tpu.matmul %138, %25, %cst_74 {dimension_numbers = #tpu.dot_dimension_numbers<[1], [0], [0], [1], [0, 0, 1, 1], [], []>} : vector<16x8xbf16>, vector<8x64xbf16>, vector<16x64xf32> -> vector<16x64xf32>
    %140 = arith.mulf %131, %135 : vector<1x8xf32>
    %141 = arith.truncf %140 : vector<1x8xf32> to vector<1x8xbf16>
    %cst_75 = arith.constant dense<0.000000e+00> : vector<1x64xf32>
    %142 = tpu.matmul %141, %25, %cst_75 {dimension_numbers = #tpu.dot_dimension_numbers<[1], [0], [0], [1], [0, 0, 1, 1], [], []>} : vector<1x8xbf16>, vector<8x64xbf16>, vector<1x64xf32> -> vector<1x64xf32>
    %143 = vector.extract_strided_slice %49 {offsets = [1, 0], sizes = [1, 64], strides = [1, 1]} : vector<2x64xf32> to vector<1x64xf32>
    %144 = arith.mulf %142, %143 : vector<1x64xf32>
    %145 = arith.mulf %139, %116 : vector<16x64xf32>
    %cst_76 = arith.constant dense<0.000000e+00> : vector<64xf32>
    %146 = vector.multi_reduction <add>, %145, %cst_76 [0] : vector<16x64xf32> to vector<64xf32>
    %147 = vector.shape_cast %146 : vector<64xf32> to vector<1x64xf32>
    %148 = arith.addf %144, %147 : vector<1x64xf32>
    %149 = tpu.concatenate %111, %148 in 0 : vector<1x64xf32>, vector<1x64xf32> -> vector<2x64xf32>
    %c0_77 = arith.constant 0 : index
    %c0_78 = arith.constant 0 : index
    %150 = vector.load %arg16[%c0_77, %c0_78] : memref<64x32xbf16, #tpu.memory_space<vmem>>, vector<64x32xbf16>
    %151 = arith.truncf %149 : vector<2x64xf32> to vector<2x64xbf16>
    %cst_79 = arith.constant dense<0.000000e+00> : vector<2x32xf32>
    %152 = tpu.matmul %151, %150, %cst_79 {dimension_numbers = #tpu.dot_dimension_numbers<[1], [0], [0], [1], [0, 0, 1, 1], [], []>} : vector<2x64xbf16>, vector<64x32xbf16>, vector<2x32xf32> -> vector<2x32xf32>
    %c0_80 = arith.constant 0 : index
    %c0_81 = arith.constant 0 : index
    %153 = vector.load %arg17[%c0_80, %c0_81] : memref<1x32xf32, #tpu.memory_space<vmem>>, vector<1x32xf32>
    %154 = vector.broadcast %153 : vector<1x32xf32> to vector<2x32xf32>
    %155 = arith.addf %152, %154 : vector<2x32xf32>
    %c0_82 = arith.constant 0 : index
    %c0_83 = arith.constant 0 : index
    %156 = vector.load %arg43[%c0_82, %c0_83] : memref<2x32xf32, #tpu.memory_space<vmem>>, vector<2x32xf32>
    tpu.vector_store %arg43[%c0_82, %c0_83], %155 {strides = array<i32>} : memref<2x32xf32, #tpu.memory_space<vmem>>, vector<2x32xf32>,
    %c0_84 = arith.constant 0 : index
    %c0_85 = arith.constant 0 : index
    %157 = vector.load %arg21[%c0_84, %c0_85] : memref<12x768xf32, #tpu.memory_space<vmem>>, vector<12x768xf32>
    %c0_86 = arith.constant 0 : index
    %c0_87 = arith.constant 0 : index
    %158 = vector.load %arg22[%c0_86, %c0_87] : memref<768x32xbf16, #tpu.memory_space<vmem>>, vector<768x32xbf16>
    %159 = arith.truncf %157 : vector<12x768xf32> to vector<12x768xbf16>
    %cst_88 = arith.constant dense<0.000000e+00> : vector<12x32xf32>
    %160 = tpu.matmul %159, %158, %cst_88 {dimension_numbers = #tpu.dot_dimension_numbers<[1], [0], [0], [1], [0, 0, 1, 1], [], []>} : vector<12x768xbf16>, vector<768x32xbf16>, vector<12x32xf32> -> vector<12x32xf32>
    %c0_89 = arith.constant 0 : index
    %c0_90 = arith.constant 0 : index
    %161 = vector.load %arg23[%c0_89, %c0_90] : memref<1x32xf32, #tpu.memory_space<vmem>>, vector<1x32xf32>
    %162 = vector.broadcast %161 : vector<1x32xf32> to vector<12x32xf32>
    %163 = arith.addf %160, %162 : vector<12x32xf32>
    %c0_91 = arith.constant 0 : index
    %c0_92 = arith.constant 0 : index
    %164 = vector.load %arg45[%c0_91, %c0_92] : memref<12x32xf32, #tpu.memory_space<vmem>>, vector<12x32xf32>
    tpu.vector_store %arg45[%c0_91, %c0_92], %163 {strides = array<i32>} : memref<12x32xf32, #tpu.memory_space<vmem>>, vector<12x32xf32>,
    %c0_93 = arith.constant 0 : index
    %c0_94 = arith.constant 0 : index
    %165 = vector.load %arg24[%c0_93, %c0_94] : memref<1x32xf32, #tpu.memory_space<vmem>>, vector<1x32xf32>
    %c0_95 = arith.constant 0 : index
    %c0_96 = arith.constant 0 : index
    %166 = vector.load %arg25[%c0_95, %c0_96] : memref<1x32xf32, #tpu.memory_space<vmem>>, vector<1x32xf32>
    %cst_97 = arith.constant dense<0.000000e+00> : vector<12xf32>
    %167 = vector.multi_reduction <add>, %163, %cst_97 [1] : vector<12x32xf32> to vector<12xf32>
    %168 = vector.shape_cast %167 : vector<12xf32> to vector<12x1xf32>
    %cst_98 = arith.constant 3.200000e+01 : f32
    %169 = vector.broadcast %cst_98 : f32 to vector<12x1xf32>
    %170 = arith.divf %168, %169 : vector<12x1xf32>
    %171 = vector.broadcast %170 : vector<12x1xf32> to vector<12x32xf32>
    %172 = arith.subf %163, %171 : vector<12x32xf32>
    %173 = arith.mulf %172, %172 : vector<12x32xf32>
    %cst_99 = arith.constant dense<0.000000e+00> : vector<12xf32>
    %174 = vector.multi_reduction <add>, %173, %cst_99 [1] : vector<12x32xf32> to vector<12xf32>
    %175 = vector.shape_cast %174 : vector<12xf32> to vector<12x1xf32>
    %cst_100 = arith.constant 3.200000e+01 : f32
    %176 = vector.broadcast %cst_100 : f32 to vector<12x1xf32>
    %177 = arith.divf %175, %176 : vector<12x1xf32>
    %178 = vector.broadcast %170 : vector<12x1xf32> to vector<12x32xf32>
    %179 = arith.subf %163, %178 : vector<12x32xf32>
    %cst_101 = arith.constant 9.99999974E-6 : f32
    %180 = vector.broadcast %cst_101 : f32 to vector<12x1xf32>
    %181 = arith.addf %177, %180 : vector<12x1xf32>
    %182 = math.rsqrt %181 : vector<12x1xf32>
    %183 = vector.broadcast %182 : vector<12x1xf32> to vector<12x32xf32>
    %184 = arith.mulf %179, %183 : vector<12x32xf32>
    %185 = vector.broadcast %165 : vector<1x32xf32> to vector<12x32xf32>
    %186 = arith.mulf %184, %185 : vector<12x32xf32>
    %187 = vector.broadcast %166 : vector<1x32xf32> to vector<12x32xf32>
    %188 = arith.addf %186, %187 : vector<12x32xf32>
    %c0_102 = arith.constant 0 : index
    %c0_103 = arith.constant 0 : index
    %189 = vector.load %arg26[%c0_102, %c0_103] : memref<32x32xbf16, #tpu.memory_space<vmem>>, vector<32x32xbf16>
    %190 = arith.truncf %188 : vector<12x32xf32> to vector<12x32xbf16>
    %cst_104 = arith.constant dense<0.000000e+00> : vector<12x32xf32>
    %191 = tpu.matmul %190, %189, %cst_104 {dimension_numbers = #tpu.dot_dimension_numbers<[1], [0], [0], [1], [0, 0, 1, 1], [], []>} : vector<12x32xbf16>, vector<32x32xbf16>, vector<12x32xf32> -> vector<12x32xf32>
    %c0_105 = arith.constant 0 : index
    %c0_106 = arith.constant 0 : index
    %192 = vector.load %arg27[%c0_105, %c0_106] : memref<1x32xf32, #tpu.memory_space<vmem>>, vector<1x32xf32>
    %193 = vector.broadcast %192 : vector<1x32xf32> to vector<12x32xf32>
    %194 = arith.addf %191, %193 : vector<12x32xf32>
    %c0_107 = arith.constant 0 : index
    %c0_108 = arith.constant 0 : index
    %195 = vector.load %arg28[%c0_107, %c0_108] : memref<32x32xbf16, #tpu.memory_space<vmem>>, vector<32x32xbf16>
    %196 = arith.truncf %23 : vector<32x32xf32> to vector<32x32xbf16>
    %cst_109 = arith.constant dense<0.000000e+00> : vector<32x32xf32>
    %197 = tpu.matmul %196, %195, %cst_109 {dimension_numbers = #tpu.dot_dimension_numbers<[1], [0], [0], [1], [0, 0, 1, 1], [], []>} : vector<32x32xbf16>, vector<32x32xbf16>, vector<32x32xf32> -> vector<32x32xf32>
    %c0_110 = arith.constant 0 : index
    %c0_111 = arith.constant 0 : index
    %198 = vector.load %arg29[%c0_110, %c0_111] : memref<1x32xf32, #tpu.memory_space<vmem>>, vector<1x32xf32>
    %199 = vector.broadcast %198 : vector<1x32xf32> to vector<32x32xf32>
    %200 = arith.addf %197, %199 : vector<32x32xf32>
    %c0_112 = arith.constant 0 : index
    %c0_113 = arith.constant 0 : index
    %201 = vector.load %arg30[%c0_112, %c0_113] : memref<32x32xbf16, #tpu.memory_space<vmem>>, vector<32x32xbf16>
    %202 = arith.truncf %23 : vector<32x32xf32> to vector<32x32xbf16>
    %cst_114 = arith.constant dense<0.000000e+00> : vector<32x32xf32>
    %203 = tpu.matmul %202, %201, %cst_114 {dimension_numbers = #tpu.dot_dimension_numbers<[1], [0], [0], [1], [0, 0, 1, 1], [], []>} : vector<32x32xbf16>, vector<32x32xbf16>, vector<32x32xf32> -> vector<32x32xf32>
    %c0_115 = arith.constant 0 : index
    %c0_116 = arith.constant 0 : index
    %204 = vector.load %arg31[%c0_115, %c0_116] : memref<1x32xf32, #tpu.memory_space<vmem>>, vector<1x32xf32>
    %205 = vector.broadcast %204 : vector<1x32xf32> to vector<32x32xf32>
    %206 = arith.addf %203, %205 : vector<32x32xf32>
    %c0_117 = arith.constant 0 : index
    %c0_118 = arith.constant 0 : index
    %c0_119 = arith.constant 0 : index
    %207 = vector.load %arg34[%c0_117, %c0_118, %c0_119] : memref<4x1x32xf32, #tpu.memory_space<vmem>>, vector<4x1x32xf32>
    %208 = vector.extract_strided_slice %207 {offsets = [0, 0, 0], sizes = [1, 1, 32], strides = [1, 1, 1]} : vector<4x1x32xf32> to vector<1x1x32xf32>
    %209 = vector.shape_cast %208 : vector<1x1x32xf32> to vector<1x32xf32>
    %210 = vector.broadcast %209 : vector<1x32xf32> to vector<12x32xf32>
    %211 = arith.mulf %194, %210 : vector<12x32xf32>
    %212 = vector.extract_strided_slice %207 {offsets = [1, 0, 0], sizes = [1, 1, 32], strides = [1, 1, 1]} : vector<4x1x32xf32> to vector<1x1x32xf32>
    %213 = vector.shape_cast %212 : vector<1x1x32xf32> to vector<1x32xf32>
    %214 = vector.broadcast %213 : vector<1x32xf32> to vector<12x32xf32>
    %215 = arith.mulf %194, %214 : vector<12x32xf32>
    %216 = vector.extract_strided_slice %207 {offsets = [2, 0, 0], sizes = [1, 1, 32], strides = [1, 1, 1]} : vector<4x1x32xf32> to vector<1x1x32xf32>
    %217 = vector.shape_cast %216 : vector<1x1x32xf32> to vector<1x32xf32>
    %218 = vector.broadcast %217 : vector<1x32xf32> to vector<12x32xf32>
    %219 = arith.mulf %194, %218 : vector<12x32xf32>
    %220 = vector.extract_strided_slice %207 {offsets = [3, 0, 0], sizes = [1, 1, 32], strides = [1, 1, 1]} : vector<4x1x32xf32> to vector<1x1x32xf32>
    %221 = vector.shape_cast %220 : vector<1x1x32xf32> to vector<1x32xf32>
    %222 = vector.broadcast %221 : vector<1x32xf32> to vector<12x32xf32>
    %223 = arith.mulf %194, %222 : vector<12x32xf32>
    %224 = vector.extract_strided_slice %200 {offsets = [0, 0], sizes = [16, 32], strides = [1, 1]} : vector<32x32xf32> to vector<16x32xf32>
    %225 = vector.extract_strided_slice %206 {offsets = [0, 0], sizes = [16, 32], strides = [1, 1]} : vector<32x32xf32> to vector<16x32xf32>
    %cst_120 = arith.constant 0.000000e+00 : f32
    %226 = vector.broadcast %cst_120 : f32 to vector<12x32xf32>
    %227 = arith.truncf %211 : vector<12x32xf32> to vector<12x32xbf16>
    %228 = arith.truncf %224 : vector<16x32xf32> to vector<16x32xbf16>
    "tpu.trace_start"() <{level = 10 : i32, message = "md,nd->mn"}> : () -> ()
    %cst_121 = arith.constant dense<0.000000e+00> : vector<12x16xf32>
    %229 = tpu.matmul %227, %228, %cst_121 {dimension_numbers = #tpu.dot_dimension_numbers<[1], [1], [0], [0], [0, 0, 1, 0], [], []>} : vector<12x32xbf16>, vector<16x32xbf16>, vector<12x16xf32> -> vector<12x16xf32>
    "tpu.trace_stop"() : () -> ()
    %cst_122 = arith.constant 0.353553385 : f32
    %230 = vector.broadcast %cst_122 : f32 to vector<12x16xf32>
    %231 = arith.mulf %229, %230 : vector<12x16xf32>
    %cst_123 = arith.constant dense<0xFF800000> : vector<12xf32>
    %232 = vector.multi_reduction <maximumf>, %231, %cst_123 [1] : vector<12x16xf32> to vector<12xf32>
    %233 = vector.shape_cast %232 : vector<12xf32> to vector<12x1xf32>
    %234 = vector.broadcast %233 : vector<12x1xf32> to vector<12x16xf32>
    %235 = arith.subf %231, %234 : vector<12x16xf32>
    %236 = math.exp %235 : vector<12x16xf32>
    %cst_124 = arith.constant dense<0.000000e+00> : vector<12xf32>
    %237 = vector.multi_reduction <add>, %236, %cst_124 [1] : vector<12x16xf32> to vector<12xf32>
    %238 = vector.shape_cast %237 : vector<12xf32> to vector<12x1xf32>
    %239 = tpu.reciprocal %238 {approx = true} : vector<12x1xf32> -> vector<12x1xf32>
    %240 = vector.broadcast %239 : vector<12x1xf32> to vector<12x16xf32>
    %241 = arith.mulf %236, %240 : vector<12x16xf32>
    %242 = arith.truncf %241 : vector<12x16xf32> to vector<12x16xbf16>
    %243 = arith.truncf %225 : vector<16x32xf32> to vector<16x32xbf16>
    %cst_125 = arith.constant dense<0.000000e+00> : vector<12x32xf32>
    %244 = tpu.matmul %242, %243, %cst_125 {dimension_numbers = #tpu.dot_dimension_numbers<[1], [0], [0], [1], [0, 0, 1, 1], [], []>} : vector<12x16xbf16>, vector<16x32xbf16>, vector<12x32xf32> -> vector<12x32xf32>
    %245 = vector.extract_strided_slice %207 {offsets = [0, 0, 0], sizes = [1, 1, 32], strides = [1, 1, 1]} : vector<4x1x32xf32> to vector<1x1x32xf32>
    %246 = vector.shape_cast %245 : vector<1x1x32xf32> to vector<1x32xf32>
    %247 = vector.broadcast %246 : vector<1x32xf32> to vector<12x32xf32>
    %248 = arith.mulf %244, %247 : vector<12x32xf32>
    %249 = arith.addf %226, %248 : vector<12x32xf32>
    %250 = arith.truncf %215 : vector<12x32xf32> to vector<12x32xbf16>
    %251 = arith.truncf %224 : vector<16x32xf32> to vector<16x32xbf16>
    "tpu.trace_start"() <{level = 10 : i32, message = "md,nd->mn"}> : () -> ()
    %cst_126 = arith.constant dense<0.000000e+00> : vector<12x16xf32>
    %252 = tpu.matmul %250, %251, %cst_126 {dimension_numbers = #tpu.dot_dimension_numbers<[1], [1], [0], [0], [0, 0, 1, 0], [], []>} : vector<12x32xbf16>, vector<16x32xbf16>, vector<12x16xf32> -> vector<12x16xf32>
    "tpu.trace_stop"() : () -> ()
    %cst_127 = arith.constant 0.353553385 : f32
    %253 = vector.broadcast %cst_127 : f32 to vector<12x16xf32>
    %254 = arith.mulf %252, %253 : vector<12x16xf32>
    %cst_128 = arith.constant dense<0xFF800000> : vector<12xf32>
    %255 = vector.multi_reduction <maximumf>, %254, %cst_128 [1] : vector<12x16xf32> to vector<12xf32>
    %256 = vector.shape_cast %255 : vector<12xf32> to vector<12x1xf32>
    %257 = vector.broadcast %256 : vector<12x1xf32> to vector<12x16xf32>
    %258 = arith.subf %254, %257 : vector<12x16xf32>
    %259 = math.exp %258 : vector<12x16xf32>
    %cst_129 = arith.constant dense<0.000000e+00> : vector<12xf32>
    %260 = vector.multi_reduction <add>, %259, %cst_129 [1] : vector<12x16xf32> to vector<12xf32>
    %261 = vector.shape_cast %260 : vector<12xf32> to vector<12x1xf32>
    %262 = tpu.reciprocal %261 {approx = true} : vector<12x1xf32> -> vector<12x1xf32>
    %263 = vector.broadcast %262 : vector<12x1xf32> to vector<12x16xf32>
    %264 = arith.mulf %259, %263 : vector<12x16xf32>
    %265 = arith.truncf %264 : vector<12x16xf32> to vector<12x16xbf16>
    %266 = arith.truncf %225 : vector<16x32xf32> to vector<16x32xbf16>
    %cst_130 = arith.constant dense<0.000000e+00> : vector<12x32xf32>
    %267 = tpu.matmul %265, %266, %cst_130 {dimension_numbers = #tpu.dot_dimension_numbers<[1], [0], [0], [1], [0, 0, 1, 1], [], []>} : vector<12x16xbf16>, vector<16x32xbf16>, vector<12x32xf32> -> vector<12x32xf32>
    %268 = vector.extract_strided_slice %207 {offsets = [1, 0, 0], sizes = [1, 1, 32], strides = [1, 1, 1]} : vector<4x1x32xf32> to vector<1x1x32xf32>
    %269 = vector.shape_cast %268 : vector<1x1x32xf32> to vector<1x32xf32>
    %270 = vector.broadcast %269 : vector<1x32xf32> to vector<12x32xf32>
    %271 = arith.mulf %267, %270 : vector<12x32xf32>
    %272 = arith.addf %249, %271 : vector<12x32xf32>
    %273 = arith.truncf %219 : vector<12x32xf32> to vector<12x32xbf16>
    %274 = arith.truncf %224 : vector<16x32xf32> to vector<16x32xbf16>
    "tpu.trace_start"() <{level = 10 : i32, message = "md,nd->mn"}> : () -> ()
    %cst_131 = arith.constant dense<0.000000e+00> : vector<12x16xf32>
    %275 = tpu.matmul %273, %274, %cst_131 {dimension_numbers = #tpu.dot_dimension_numbers<[1], [1], [0], [0], [0, 0, 1, 0], [], []>} : vector<12x32xbf16>, vector<16x32xbf16>, vector<12x16xf32> -> vector<12x16xf32>
    "tpu.trace_stop"() : () -> ()
    %cst_132 = arith.constant 0.353553385 : f32
    %276 = vector.broadcast %cst_132 : f32 to vector<12x16xf32>
    %277 = arith.mulf %275, %276 : vector<12x16xf32>
    %cst_133 = arith.constant dense<0xFF800000> : vector<12xf32>
    %278 = vector.multi_reduction <maximumf>, %277, %cst_133 [1] : vector<12x16xf32> to vector<12xf32>
    %279 = vector.shape_cast %278 : vector<12xf32> to vector<12x1xf32>
    %280 = vector.broadcast %279 : vector<12x1xf32> to vector<12x16xf32>
    %281 = arith.subf %277, %280 : vector<12x16xf32>
    %282 = math.exp %281 : vector<12x16xf32>
    %cst_134 = arith.constant dense<0.000000e+00> : vector<12xf32>
    %283 = vector.multi_reduction <add>, %282, %cst_134 [1] : vector<12x16xf32> to vector<12xf32>
    %284 = vector.shape_cast %283 : vector<12xf32> to vector<12x1xf32>
    %285 = tpu.reciprocal %284 {approx = true} : vector<12x1xf32> -> vector<12x1xf32>
    %286 = vector.broadcast %285 : vector<12x1xf32> to vector<12x16xf32>
    %287 = arith.mulf %282, %286 : vector<12x16xf32>
    %288 = arith.truncf %287 : vector<12x16xf32> to vector<12x16xbf16>
    %289 = arith.truncf %225 : vector<16x32xf32> to vector<16x32xbf16>
    %cst_135 = arith.constant dense<0.000000e+00> : vector<12x32xf32>
    %290 = tpu.matmul %288, %289, %cst_135 {dimension_numbers = #tpu.dot_dimension_numbers<[1], [0], [0], [1], [0, 0, 1, 1], [], []>} : vector<12x16xbf16>, vector<16x32xbf16>, vector<12x32xf32> -> vector<12x32xf32>
    %291 = vector.extract_strided_slice %207 {offsets = [2, 0, 0], sizes = [1, 1, 32], strides = [1, 1, 1]} : vector<4x1x32xf32> to vector<1x1x32xf32>
    %292 = vector.shape_cast %291 : vector<1x1x32xf32> to vector<1x32xf32>
    %293 = vector.broadcast %292 : vector<1x32xf32> to vector<12x32xf32>
    %294 = arith.mulf %290, %293 : vector<12x32xf32>
    %295 = arith.addf %272, %294 : vector<12x32xf32>
    %296 = arith.truncf %223 : vector<12x32xf32> to vector<12x32xbf16>
    %297 = arith.truncf %224 : vector<16x32xf32> to vector<16x32xbf16>
    "tpu.trace_start"() <{level = 10 : i32, message = "md,nd->mn"}> : () -> ()
    %cst_136 = arith.constant dense<0.000000e+00> : vector<12x16xf32>
    %298 = tpu.matmul %296, %297, %cst_136 {dimension_numbers = #tpu.dot_dimension_numbers<[1], [1], [0], [0], [0, 0, 1, 0], [], []>} : vector<12x32xbf16>, vector<16x32xbf16>, vector<12x16xf32> -> vector<12x16xf32>
    "tpu.trace_stop"() : () -> ()
    %cst_137 = arith.constant 0.353553385 : f32
    %299 = vector.broadcast %cst_137 : f32 to vector<12x16xf32>
    %300 = arith.mulf %298, %299 : vector<12x16xf32>
    %cst_138 = arith.constant dense<0xFF800000> : vector<12xf32>
    %301 = vector.multi_reduction <maximumf>, %300, %cst_138 [1] : vector<12x16xf32> to vector<12xf32>
    %302 = vector.shape_cast %301 : vector<12xf32> to vector<12x1xf32>
    %303 = vector.broadcast %302 : vector<12x1xf32> to vector<12x16xf32>
    %304 = arith.subf %300, %303 : vector<12x16xf32>
    %305 = math.exp %304 : vector<12x16xf32>
    %cst_139 = arith.constant dense<0.000000e+00> : vector<12xf32>
    %306 = vector.multi_reduction <add>, %305, %cst_139 [1] : vector<12x16xf32> to vector<12xf32>
    %307 = vector.shape_cast %306 : vector<12xf32> to vector<12x1xf32>
    %308 = tpu.reciprocal %307 {approx = true} : vector<12x1xf32> -> vector<12x1xf32>
    %309 = vector.broadcast %308 : vector<12x1xf32> to vector<12x16xf32>
    %310 = arith.mulf %305, %309 : vector<12x16xf32>
    %311 = arith.truncf %310 : vector<12x16xf32> to vector<12x16xbf16>
    %312 = arith.truncf %225 : vector<16x32xf32> to vector<16x32xbf16>
    %cst_140 = arith.constant dense<0.000000e+00> : vector<12x32xf32>
    %313 = tpu.matmul %311, %312, %cst_140 {dimension_numbers = #tpu.dot_dimension_numbers<[1], [0], [0], [1], [0, 0, 1, 1], [], []>} : vector<12x16xbf16>, vector<16x32xbf16>, vector<12x32xf32> -> vector<12x32xf32>
    %314 = vector.extract_strided_slice %207 {offsets = [3, 0, 0], sizes = [1, 1, 32], strides = [1, 1, 1]} : vector<4x1x32xf32> to vector<1x1x32xf32>
    %315 = vector.shape_cast %314 : vector<1x1x32xf32> to vector<1x32xf32>
    %316 = vector.broadcast %315 : vector<1x32xf32> to vector<12x32xf32>
    %317 = arith.mulf %313, %316 : vector<12x32xf32>
    %318 = arith.addf %295, %317 : vector<12x32xf32>
    %319 = vector.extract_strided_slice %200 {offsets = [16, 0], sizes = [16, 32], strides = [1, 1]} : vector<32x32xf32> to vector<16x32xf32>
    %320 = vector.extract_strided_slice %206 {offsets = [16, 0], sizes = [16, 32], strides = [1, 1]} : vector<32x32xf32> to vector<16x32xf32>
    %cst_141 = arith.constant 0.000000e+00 : f32
    %321 = vector.broadcast %cst_141 : f32 to vector<12x32xf32>
    %322 = arith.truncf %211 : vector<12x32xf32> to vector<12x32xbf16>
    %323 = arith.truncf %319 : vector<16x32xf32> to vector<16x32xbf16>
    "tpu.trace_start"() <{level = 10 : i32, message = "md,nd->mn"}> : () -> ()
    %cst_142 = arith.constant dense<0.000000e+00> : vector<12x16xf32>
    %324 = tpu.matmul %322, %323, %cst_142 {dimension_numbers = #tpu.dot_dimension_numbers<[1], [1], [0], [0], [0, 0, 1, 0], [], []>} : vector<12x32xbf16>, vector<16x32xbf16>, vector<12x16xf32> -> vector<12x16xf32>
    "tpu.trace_stop"() : () -> ()
    %cst_143 = arith.constant 0.353553385 : f32
    %325 = vector.broadcast %cst_143 : f32 to vector<12x16xf32>
    %326 = arith.mulf %324, %325 : vector<12x16xf32>
    %cst_144 = arith.constant dense<0xFF800000> : vector<12xf32>
    %327 = vector.multi_reduction <maximumf>, %326, %cst_144 [1] : vector<12x16xf32> to vector<12xf32>
    %328 = vector.shape_cast %327 : vector<12xf32> to vector<12x1xf32>
    %329 = vector.broadcast %328 : vector<12x1xf32> to vector<12x16xf32>
    %330 = arith.subf %326, %329 : vector<12x16xf32>
    %331 = math.exp %330 : vector<12x16xf32>
    %cst_145 = arith.constant dense<0.000000e+00> : vector<12xf32>
    %332 = vector.multi_reduction <add>, %331, %cst_145 [1] : vector<12x16xf32> to vector<12xf32>
    %333 = vector.shape_cast %332 : vector<12xf32> to vector<12x1xf32>
    %334 = tpu.reciprocal %333 {approx = true} : vector<12x1xf32> -> vector<12x1xf32>
    %335 = vector.broadcast %334 : vector<12x1xf32> to vector<12x16xf32>
    %336 = arith.mulf %331, %335 : vector<12x16xf32>
    %337 = arith.truncf %336 : vector<12x16xf32> to vector<12x16xbf16>
    %338 = arith.truncf %320 : vector<16x32xf32> to vector<16x32xbf16>
    %cst_146 = arith.constant dense<0.000000e+00> : vector<12x32xf32>
    %339 = tpu.matmul %337, %338, %cst_146 {dimension_numbers = #tpu.dot_dimension_numbers<[1], [0], [0], [1], [0, 0, 1, 1], [], []>} : vector<12x16xbf16>, vector<16x32xbf16>, vector<12x32xf32> -> vector<12x32xf32>
    %340 = vector.extract_strided_slice %207 {offsets = [0, 0, 0], sizes = [1, 1, 32], strides = [1, 1, 1]} : vector<4x1x32xf32> to vector<1x1x32xf32>
    %341 = vector.shape_cast %340 : vector<1x1x32xf32> to vector<1x32xf32>
    %342 = vector.broadcast %341 : vector<1x32xf32> to vector<12x32xf32>
    %343 = arith.mulf %339, %342 : vector<12x32xf32>
    %344 = arith.addf %321, %343 : vector<12x32xf32>
    %345 = arith.truncf %215 : vector<12x32xf32> to vector<12x32xbf16>
    %346 = arith.truncf %319 : vector<16x32xf32> to vector<16x32xbf16>
    "tpu.trace_start"() <{level = 10 : i32, message = "md,nd->mn"}> : () -> ()
    %cst_147 = arith.constant dense<0.000000e+00> : vector<12x16xf32>
    %347 = tpu.matmul %345, %346, %cst_147 {dimension_numbers = #tpu.dot_dimension_numbers<[1], [1], [0], [0], [0, 0, 1, 0], [], []>} : vector<12x32xbf16>, vector<16x32xbf16>, vector<12x16xf32> -> vector<12x16xf32>
    "tpu.trace_stop"() : () -> ()
    %cst_148 = arith.constant 0.353553385 : f32
    %348 = vector.broadcast %cst_148 : f32 to vector<12x16xf32>
    %349 = arith.mulf %347, %348 : vector<12x16xf32>
    %cst_149 = arith.constant dense<0xFF800000> : vector<12xf32>
    %350 = vector.multi_reduction <maximumf>, %349, %cst_149 [1] : vector<12x16xf32> to vector<12xf32>
    %351 = vector.shape_cast %350 : vector<12xf32> to vector<12x1xf32>
    %352 = vector.broadcast %351 : vector<12x1xf32> to vector<12x16xf32>
    %353 = arith.subf %349, %352 : vector<12x16xf32>
    %354 = math.exp %353 : vector<12x16xf32>
    %cst_150 = arith.constant dense<0.000000e+00> : vector<12xf32>
    %355 = vector.multi_reduction <add>, %354, %cst_150 [1] : vector<12x16xf32> to vector<12xf32>
    %356 = vector.shape_cast %355 : vector<12xf32> to vector<12x1xf32>
    %357 = tpu.reciprocal %356 {approx = true} : vector<12x1xf32> -> vector<12x1xf32>
    %358 = vector.broadcast %357 : vector<12x1xf32> to vector<12x16xf32>
    %359 = arith.mulf %354, %358 : vector<12x16xf32>
    %360 = arith.truncf %359 : vector<12x16xf32> to vector<12x16xbf16>
    %361 = arith.truncf %320 : vector<16x32xf32> to vector<16x32xbf16>
    %cst_151 = arith.constant dense<0.000000e+00> : vector<12x32xf32>
    %362 = tpu.matmul %360, %361, %cst_151 {dimension_numbers = #tpu.dot_dimension_numbers<[1], [0], [0], [1], [0, 0, 1, 1], [], []>} : vector<12x16xbf16>, vector<16x32xbf16>, vector<12x32xf32> -> vector<12x32xf32>
    %363 = vector.extract_strided_slice %207 {offsets = [1, 0, 0], sizes = [1, 1, 32], strides = [1, 1, 1]} : vector<4x1x32xf32> to vector<1x1x32xf32>
    %364 = vector.shape_cast %363 : vector<1x1x32xf32> to vector<1x32xf32>
    %365 = vector.broadcast %364 : vector<1x32xf32> to vector<12x32xf32>
    %366 = arith.mulf %362, %365 : vector<12x32xf32>
    %367 = arith.addf %344, %366 : vector<12x32xf32>
    %368 = arith.truncf %219 : vector<12x32xf32> to vector<12x32xbf16>
    %369 = arith.truncf %319 : vector<16x32xf32> to vector<16x32xbf16>
    "tpu.trace_start"() <{level = 10 : i32, message = "md,nd->mn"}> : () -> ()
    %cst_152 = arith.constant dense<0.000000e+00> : vector<12x16xf32>
    %370 = tpu.matmul %368, %369, %cst_152 {dimension_numbers = #tpu.dot_dimension_numbers<[1], [1], [0], [0], [0, 0, 1, 0], [], []>} : vector<12x32xbf16>, vector<16x32xbf16>, vector<12x16xf32> -> vector<12x16xf32>
    "tpu.trace_stop"() : () -> ()
    %cst_153 = arith.constant 0.353553385 : f32
    %371 = vector.broadcast %cst_153 : f32 to vector<12x16xf32>
    %372 = arith.mulf %370, %371 : vector<12x16xf32>
    %cst_154 = arith.constant dense<0xFF800000> : vector<12xf32>
    %373 = vector.multi_reduction <maximumf>, %372, %cst_154 [1] : vector<12x16xf32> to vector<12xf32>
    %374 = vector.shape_cast %373 : vector<12xf32> to vector<12x1xf32>
    %375 = vector.broadcast %374 : vector<12x1xf32> to vector<12x16xf32>
    %376 = arith.subf %372, %375 : vector<12x16xf32>
    %377 = math.exp %376 : vector<12x16xf32>
    %cst_155 = arith.constant dense<0.000000e+00> : vector<12xf32>
    %378 = vector.multi_reduction <add>, %377, %cst_155 [1] : vector<12x16xf32> to vector<12xf32>
    %379 = vector.shape_cast %378 : vector<12xf32> to vector<12x1xf32>
    %380 = tpu.reciprocal %379 {approx = true} : vector<12x1xf32> -> vector<12x1xf32>
    %381 = vector.broadcast %380 : vector<12x1xf32> to vector<12x16xf32>
    %382 = arith.mulf %377, %381 : vector<12x16xf32>
    %383 = arith.truncf %382 : vector<12x16xf32> to vector<12x16xbf16>
    %384 = arith.truncf %320 : vector<16x32xf32> to vector<16x32xbf16>
    %cst_156 = arith.constant dense<0.000000e+00> : vector<12x32xf32>
    %385 = tpu.matmul %383, %384, %cst_156 {dimension_numbers = #tpu.dot_dimension_numbers<[1], [0], [0], [1], [0, 0, 1, 1], [], []>} : vector<12x16xbf16>, vector<16x32xbf16>, vector<12x32xf32> -> vector<12x32xf32>
    %386 = vector.extract_strided_slice %207 {offsets = [2, 0, 0], sizes = [1, 1, 32], strides = [1, 1, 1]} : vector<4x1x32xf32> to vector<1x1x32xf32>
    %387 = vector.shape_cast %386 : vector<1x1x32xf32> to vector<1x32xf32>
    %388 = vector.broadcast %387 : vector<1x32xf32> to vector<12x32xf32>
    %389 = arith.mulf %385, %388 : vector<12x32xf32>
    %390 = arith.addf %367, %389 : vector<12x32xf32>
    %391 = arith.truncf %223 : vector<12x32xf32> to vector<12x32xbf16>
    %392 = arith.truncf %319 : vector<16x32xf32> to vector<16x32xbf16>
    "tpu.trace_start"() <{level = 10 : i32, message = "md,nd->mn"}> : () -> ()
    %cst_157 = arith.constant dense<0.000000e+00> : vector<12x16xf32>
    %393 = tpu.matmul %391, %392, %cst_157 {dimension_numbers = #tpu.dot_dimension_numbers<[1], [1], [0], [0], [0, 0, 1, 0], [], []>} : vector<12x32xbf16>, vector<16x32xbf16>, vector<12x16xf32> -> vector<12x16xf32>
    "tpu.trace_stop"() : () -> ()
    %cst_158 = arith.constant 0.353553385 : f32
    %394 = vector.broadcast %cst_158 : f32 to vector<12x16xf32>
    %395 = arith.mulf %393, %394 : vector<12x16xf32>
    %cst_159 = arith.constant dense<0xFF800000> : vector<12xf32>
    %396 = vector.multi_reduction <maximumf>, %395, %cst_159 [1] : vector<12x16xf32> to vector<12xf32>
    %397 = vector.shape_cast %396 : vector<12xf32> to vector<12x1xf32>
    %398 = vector.broadcast %397 : vector<12x1xf32> to vector<12x16xf32>
    %399 = arith.subf %395, %398 : vector<12x16xf32>
    %400 = math.exp %399 : vector<12x16xf32>
    %cst_160 = arith.constant dense<0.000000e+00> : vector<12xf32>
    %401 = vector.multi_reduction <add>, %400, %cst_160 [1] : vector<12x16xf32> to vector<12xf32>
    %402 = vector.shape_cast %401 : vector<12xf32> to vector<12x1xf32>
    %403 = tpu.reciprocal %402 {approx = true} : vector<12x1xf32> -> vector<12x1xf32>
    %404 = vector.broadcast %403 : vector<12x1xf32> to vector<12x16xf32>
    %405 = arith.mulf %400, %404 : vector<12x16xf32>
    %406 = arith.truncf %405 : vector<12x16xf32> to vector<12x16xbf16>
    %407 = arith.truncf %320 : vector<16x32xf32> to vector<16x32xbf16>
    %cst_161 = arith.constant dense<0.000000e+00> : vector<12x32xf32>
    %408 = tpu.matmul %406, %407, %cst_161 {dimension_numbers = #tpu.dot_dimension_numbers<[1], [0], [0], [1], [0, 0, 1, 1], [], []>} : vector<12x16xbf16>, vector<16x32xbf16>, vector<12x32xf32> -> vector<12x32xf32>
    %409 = vector.extract_strided_slice %207 {offsets = [3, 0, 0], sizes = [1, 1, 32], strides = [1, 1, 1]} : vector<4x1x32xf32> to vector<1x1x32xf32>
    %410 = vector.shape_cast %409 : vector<1x1x32xf32> to vector<1x32xf32>
    %411 = vector.broadcast %410 : vector<1x32xf32> to vector<12x32xf32>
    %412 = arith.mulf %408, %411 : vector<12x32xf32>
    %413 = arith.addf %390, %412 : vector<12x32xf32>
    %414 = tpu.concatenate %318, %413 in 0 : vector<12x32xf32>, vector<12x32xf32> -> vector<24x32xf32>
    %415 = tpu.concatenate %163, %163 in 0 : vector<12x32xf32>, vector<12x32xf32> -> vector<24x32xf32>
    %c0_162 = arith.constant 0 : index
    %c0_163 = arith.constant 0 : index
    %416 = vector.load %arg32[%c0_162, %c0_163] : memref<32x32xbf16, #tpu.memory_space<vmem>>, vector<32x32xbf16>
    %417 = arith.truncf %414 : vector<24x32xf32> to vector<24x32xbf16>
    %cst_164 = arith.constant dense<0.000000e+00> : vector<24x32xf32>
    %418 = tpu.matmul %417, %416, %cst_164 {dimension_numbers = #tpu.dot_dimension_numbers<[1], [0], [0], [1], [0, 0, 1, 1], [], []>} : vector<24x32xbf16>, vector<32x32xbf16>, vector<24x32xf32> -> vector<24x32xf32>
    %419 = arith.addf %415, %418 : vector<24x32xf32>
    %c0_165 = arith.constant 0 : index
    %c0_166 = arith.constant 0 : index
    %420 = vector.load %arg33[%c0_165, %c0_166] : memref<1x32xf32, #tpu.memory_space<vmem>>, vector<1x32xf32>
    %421 = vector.broadcast %420 : vector<1x32xf32> to vector<24x32xf32>
    %422 = arith.addf %419, %421 : vector<24x32xf32>
    %c0_167 = arith.constant 0 : index
    %c0_168 = arith.constant 0 : index
    %423 = vector.load %arg35[%c0_167, %c0_168] : memref<1x32xf32, #tpu.memory_space<vmem>>, vector<1x32xf32>
    %c0_169 = arith.constant 0 : index
    %c0_170 = arith.constant 0 : index
    %424 = vector.load %arg36[%c0_169, %c0_170] : memref<1x32xf32, #tpu.memory_space<vmem>>, vector<1x32xf32>
    %cst_171 = arith.constant dense<0.000000e+00> : vector<24xf32>
    %425 = vector.multi_reduction <add>, %422, %cst_171 [1] : vector<24x32xf32> to vector<24xf32>
    %426 = vector.shape_cast %425 : vector<24xf32> to vector<24x1xf32>
    %cst_172 = arith.constant 3.200000e+01 : f32
    %427 = vector.broadcast %cst_172 : f32 to vector<24x1xf32>
    %428 = arith.divf %426, %427 : vector<24x1xf32>
    %429 = vector.broadcast %428 : vector<24x1xf32> to vector<24x32xf32>
    %430 = arith.subf %422, %429 : vector<24x32xf32>
    %431 = arith.mulf %430, %430 : vector<24x32xf32>
    %cst_173 = arith.constant dense<0.000000e+00> : vector<24xf32>
    %432 = vector.multi_reduction <add>, %431, %cst_173 [1] : vector<24x32xf32> to vector<24xf32>
    %433 = vector.shape_cast %432 : vector<24xf32> to vector<24x1xf32>
    %cst_174 = arith.constant 3.200000e+01 : f32
    %434 = vector.broadcast %cst_174 : f32 to vector<24x1xf32>
    %435 = arith.divf %433, %434 : vector<24x1xf32>
    %436 = vector.broadcast %428 : vector<24x1xf32> to vector<24x32xf32>
    %437 = arith.subf %422, %436 : vector<24x32xf32>
    %cst_175 = arith.constant 9.99999974E-6 : f32
    %438 = vector.broadcast %cst_175 : f32 to vector<24x1xf32>
    %439 = arith.addf %435, %438 : vector<24x1xf32>
    %440 = math.rsqrt %439 : vector<24x1xf32>
    %441 = vector.broadcast %440 : vector<24x1xf32> to vector<24x32xf32>
    %442 = arith.mulf %437, %441 : vector<24x32xf32>
    %443 = vector.broadcast %423 : vector<1x32xf32> to vector<24x32xf32>
    %444 = arith.mulf %442, %443 : vector<24x32xf32>
    %445 = vector.broadcast %424 : vector<1x32xf32> to vector<24x32xf32>
    %446 = arith.addf %444, %445 : vector<24x32xf32>
    %c0_176 = arith.constant 0 : index
    %c0_177 = arith.constant 0 : index
    %447 = vector.load %arg37[%c0_176, %c0_177] : memref<32x64xbf16, #tpu.memory_space<vmem>>, vector<32x64xbf16>
    %448 = arith.truncf %446 : vector<24x32xf32> to vector<24x32xbf16>
    %cst_178 = arith.constant dense<0.000000e+00> : vector<24x64xf32>
    %449 = tpu.matmul %448, %447, %cst_178 {dimension_numbers = #tpu.dot_dimension_numbers<[1], [0], [0], [1], [0, 0, 1, 1], [], []>} : vector<24x32xbf16>, vector<32x64xbf16>, vector<24x64xf32> -> vector<24x64xf32>
    %c0_179 = arith.constant 0 : index
    %c0_180 = arith.constant 0 : index
    %450 = vector.load %arg38[%c0_179, %c0_180] : memref<1x64xf32, #tpu.memory_space<vmem>>, vector<1x64xf32>
    %451 = vector.broadcast %450 : vector<1x64xf32> to vector<24x64xf32>
    %452 = arith.addf %449, %451 : vector<24x64xf32>
    %cst_181 = arith.constant 0.000000e+00 : f32
    %453 = vector.broadcast %cst_181 : f32 to vector<24x64xf32>
    %454 = arith.maximumf %452, %453 : vector<24x64xf32>
    %c0_182 = arith.constant 0 : index
    %c0_183 = arith.constant 0 : index
    %455 = vector.load %arg39[%c0_182, %c0_183] : memref<64x32xbf16, #tpu.memory_space<vmem>>, vector<64x32xbf16>
    %456 = arith.truncf %454 : vector<24x64xf32> to vector<24x64xbf16>
    %cst_184 = arith.constant dense<0.000000e+00> : vector<24x32xf32>
    %457 = tpu.matmul %456, %455, %cst_184 {dimension_numbers = #tpu.dot_dimension_numbers<[1], [0], [0], [1], [0, 0, 1, 1], [], []>} : vector<24x64xbf16>, vector<64x32xbf16>, vector<24x32xf32> -> vector<24x32xf32>
    %458 = arith.addf %422, %457 : vector<24x32xf32>
    %c0_185 = arith.constant 0 : index
    %c0_186 = arith.constant 0 : index
    %459 = vector.load %arg40[%c0_185, %c0_186] : memref<1x32xf32, #tpu.memory_space<vmem>>, vector<1x32xf32>
    %460 = vector.broadcast %459 : vector<1x32xf32> to vector<24x32xf32>
    %461 = arith.addf %458, %460 : vector<24x32xf32>
    %c0_187 = arith.constant 0 : index
    %c0_188 = arith.constant 0 : index
    %462 = vector.load %arg41[%c0_187, %c0_188] : memref<1x32xf32, #tpu.memory_space<vmem>>, vector<1x32xf32>
    %c0_189 = arith.constant 0 : index
    %c0_190 = arith.constant 0 : index
    %463 = vector.load %arg42[%c0_189, %c0_190] : memref<1x32xf32, #tpu.memory_space<vmem>>, vector<1x32xf32>
    %cst_191 = arith.constant dense<0.000000e+00> : vector<24xf32>
    %464 = vector.multi_reduction <add>, %461, %cst_191 [1] : vector<24x32xf32> to vector<24xf32>
    %465 = vector.shape_cast %464 : vector<24xf32> to vector<24x1xf32>
    %cst_192 = arith.constant 3.200000e+01 : f32
    %466 = vector.broadcast %cst_192 : f32 to vector<24x1xf32>
    %467 = arith.divf %465, %466 : vector<24x1xf32>
    %468 = vector.broadcast %467 : vector<24x1xf32> to vector<24x32xf32>
    %469 = arith.subf %461, %468 : vector<24x32xf32>
    %470 = arith.mulf %469, %469 : vector<24x32xf32>
    %cst_193 = arith.constant dense<0.000000e+00> : vector<24xf32>
    %471 = vector.multi_reduction <add>, %470, %cst_193 [1] : vector<24x32xf32> to vector<24xf32>
    %472 = vector.shape_cast %471 : vector<24xf32> to vector<24x1xf32>
    %cst_194 = arith.constant 3.200000e+01 : f32
    %473 = vector.broadcast %cst_194 : f32 to vector<24x1xf32>
    %474 = arith.divf %472, %473 : vector<24x1xf32>
    %475 = vector.broadcast %467 : vector<24x1xf32> to vector<24x32xf32>
    %476 = arith.subf %461, %475 : vector<24x32xf32>
    %cst_195 = arith.constant 9.99999974E-6 : f32
    %477 = vector.broadcast %cst_195 : f32 to vector<24x1xf32>
    %478 = arith.addf %474, %477 : vector<24x1xf32>
    %479 = math.rsqrt %478 : vector<24x1xf32>
    %480 = vector.broadcast %479 : vector<24x1xf32> to vector<24x32xf32>
    %481 = arith.mulf %476, %480 : vector<24x32xf32>
    %482 = vector.broadcast %462 : vector<1x32xf32> to vector<24x32xf32>
    %483 = arith.mulf %481, %482 : vector<24x32xf32>
    %484 = vector.broadcast %463 : vector<1x32xf32> to vector<24x32xf32>
    %485 = arith.addf %483, %484 : vector<24x32xf32>
    %c0_196 = arith.constant 0 : index
    %c0_197 = arith.constant 0 : index
    %486 = vector.load %arg44[%c0_196, %c0_197] : memref<24x32xf32, #tpu.memory_space<vmem>>, vector<24x32xf32>
    tpu.vector_store %arg44[%c0_196, %c0_197], %485 {strides = array<i32>} : memref<24x32xf32, #tpu.memory_space<vmem>>, vector<24x32xf32>,
    return
  }
  func.func @transform_0(%arg0: i32) -> (i32, i32) {
    %c0_i32 = arith.constant 0 : i32
    %c0_i32_0 = arith.constant 0 : i32
    %c0_i32_1 = arith.constant 0 : i32
    return %c0_i32, %c0_i32_0 : i32, i32
  }
  func.func @transform_1(%arg0: i32) -> (i32, i32) {
    %c0_i32 = arith.constant 0 : i32
    %c0_i32_0 = arith.constant 0 : i32
    %c0_i32_1 = arith.constant 0 : i32
    return %c0_i32, %c0_i32_0 : i32, i32
  }
  func.func @transform_2(%arg0: i32) -> (i32, i32) {
    %c0_i32 = arith.constant 0 : i32
    %c0_i32_0 = arith.constant 0 : i32
    %c0_i32_1 = arith.constant 0 : i32
    return %c0_i32, %c0_i32_0 : i32, i32
  }
  func.func @transform_3(%arg0: i32) -> (i32, i32) {
    %c0_i32 = arith.constant 0 : i32
    %c0_i32_0 = arith.constant 0 : i32
    %c0_i32_1 = arith.constant 0 : i32
    return %c0_i32, %c0_i32_0 : i32, i32
  }
  func.func @transform_4(%arg0: i32) -> (i32, i32) {
    %c0_i32 = arith.constant 0 : i32
    %c0_i32_0 = arith.constant 0 : i32
    %c0_i32_1 = arith.constant 0 : i32
    return %c0_i32, %c0_i32_0 : i32, i32
  }
  func.func @transform_5(%arg0: i32) -> (i32, i32) {
    %c0_i32 = arith.constant 0 : i32
    %c0_i32_0 = arith.constant 0 : i32
    %c0_i32_1 = arith.constant 0 : i32
    return %c0_i32, %c0_i32_0 : i32, i32
  }
  func.func @transform_6(%arg0: i32) -> (i32, i32) {
    %c0_i32 = arith.constant 0 : i32
    %c0_i32_0 = arith.constant 0 : i32
    %c0_i32_1 = arith.constant 0 : i32
    return %c0_i32, %c0_i32_0 : i32, i32
  }
  func.func @transform_7(%arg0: i32) -> (i32, i32) {
    %c0_i32 = arith.constant 0 : i32
    %c0_i32_0 = arith.constant 0 : i32
    %c0_i32_1 = arith.constant 0 : i32
    return %c0_i32, %c0_i32_0 : i32, i32
  }
  func.func @transform_8(%arg0: i32) -> (i32, i32) {
    %c0_i32 = arith.constant 0 : i32
    %c0_i32_0 = arith.constant 0 : i32
    %c0_i32_1 = arith.constant 0 : i32
    return %c0_i32, %c0_i32_0 : i32, i32
  }
  func.func @transform_9(%arg0: i32) -> (i32, i32) {
    %c0_i32 = arith.constant 0 : i32
    %c0_i32_0 = arith.constant 0 : i32
    %c0_i32_1 = arith.constant 0 : i32
    return %c0_i32, %c0_i32_0 : i32, i32
  }
  func.func @transform_10(%arg0: i32) -> (i32, i32) {
    %c0_i32 = arith.constant 0 : i32
    %c0_i32_0 = arith.constant 0 : i32
    %c0_i32_1 = arith.constant 0 : i32
    return %c0_i32, %c0_i32_0 : i32, i32
  }
  func.func @transform_11(%arg0: i32) -> (i32, i32) {
    %c0_i32 = arith.constant 0 : i32
    %c0_i32_0 = arith.constant 0 : i32
    %c0_i32_1 = arith.constant 0 : i32
    return %c0_i32, %c0_i32_0 : i32, i32
  }
  func.func @transform_12(%arg0: i32) -> (i32, i32) {
    %c0_i32 = arith.constant 0 : i32
    %c0_i32_0 = arith.constant 0 : i32
    %c0_i32_1 = arith.constant 0 : i32
    return %c0_i32, %c0_i32_0 : i32, i32
  }
  func.func @transform_13(%arg0: i32) -> (i32, i32) {
    %c0_i32 = arith.constant 0 : i32
    %c0_i32_0 = arith.constant 0 : i32
    %c0_i32_1 = arith.constant 0 : i32
    return %c0_i32, %c0_i32_0 : i32, i32
  }
  func.func @transform_14(%arg0: i32) -> (i32, i32) {
    %c0_i32 = arith.constant 0 : i32
    %c0_i32_0 = arith.constant 0 : i32
    %c0_i32_1 = arith.constant 0 : i32
    return %c0_i32, %c0_i32_0 : i32, i32
  }
  func.func @transform_15(%arg0: i32) -> (i32, i32) {
    %c0_i32 = arith.constant 0 : i32
    %c0_i32_0 = arith.constant 0 : i32
    %c0_i32_1 = arith.constant 0 : i32
    return %c0_i32, %c0_i32_0 : i32, i32
  }
  func.func @transform_16(%arg0: i32) -> (i32, i32) {
    %c0_i32 = arith.constant 0 : i32
    %c0_i32_0 = arith.constant 0 : i32
    %c0_i32_1 = arith.constant 0 : i32
    return %c0_i32, %c0_i32_0 : i32, i32
  }
  func.func @transform_17(%arg0: i32) -> (i32, i32) {
    %c0_i32 = arith.constant 0 : i32
    %c0_i32_0 = arith.constant 0 : i32
    %c0_i32_1 = arith.constant 0 : i32
    return %c0_i32, %c0_i32_0 : i32, i32
  }
  func.func @transform_18(%arg0: i32) -> (i32, i32) {
    %c0_i32 = arith.constant 0 : i32
    %c0_i32_0 = arith.constant 0 : i32
    %c0_i32_1 = arith.constant 0 : i32
    return %c0_i32, %c0_i32_0 : i32, i32
  }
  func.func @transform_19(%arg0: i32) -> (i32, i32) {
    %c0_i32 = arith.constant 0 : i32
    %c0_i32_0 = arith.constant 0 : i32
    %c0_i32_1 = arith.constant 0 : i32
    return %c0_i32, %c0_i32_0 : i32, i32
  }
  func.func @transform_20(%arg0: i32) -> (i32, i32) {
    %c0_i32 = arith.constant 0 : i32
    %c0_i32_0 = arith.constant 0 : i32
    %c0_i32_1 = arith.constant 0 : i32
    return %c0_i32, %c0_i32_0 : i32, i32
  }
  func.func @transform_21(%arg0: i32) -> (i32, i32) {
    %c0_i32 = arith.constant 0 : i32
    %c0_i32_0 = arith.constant 0 : i32
    %c0_i32_1 = arith.constant 0 : i32
    return %c0_i32, %c0_i32_0 : i32, i32
  }
  func.func @transform_22(%arg0: i32) -> (i32, i32) {
    %c0_i32 = arith.constant 0 : i32
    %c0_i32_0 = arith.constant 0 : i32
    %c0_i32_1 = arith.constant 0 : i32
    return %c0_i32, %c0_i32_0 : i32, i32
  }
  func.func @transform_23(%arg0: i32) -> (i32, i32) {
    %c0_i32 = arith.constant 0 : i32
    %c0_i32_0 = arith.constant 0 : i32
    %c0_i32_1 = arith.constant 0 : i32
    return %c0_i32, %c0_i32_0 : i32, i32
  }
  func.func @transform_24(%arg0: i32) -> (i32, i32) {
    %c0_i32 = arith.constant 0 : i32
    %c0_i32_0 = arith.constant 0 : i32
    %c0_i32_1 = arith.constant 0 : i32
    return %c0_i32, %c0_i32_0 : i32, i32
  }
  func.func @transform_25(%arg0: i32) -> (i32, i32) {
    %c0_i32 = arith.constant 0 : i32
    %c0_i32_0 = arith.constant 0 : i32
    %c0_i32_1 = arith.constant 0 : i32
    return %c0_i32, %c0_i32_0 : i32, i32
  }
  func.func @transform_26(%arg0: i32) -> (i32, i32) {
    %c0_i32 = arith.constant 0 : i32
    %c0_i32_0 = arith.constant 0 : i32
    %c0_i32_1 = arith.constant 0 : i32
    return %c0_i32, %c0_i32_0 : i32, i32
  }
  func.func @transform_27(%arg0: i32) -> (i32, i32) {
    %c0_i32 = arith.constant 0 : i32
    %c0_i32_0 = arith.constant 0 : i32
    %c0_i32_1 = arith.constant 0 : i32
    return %c0_i32, %c0_i32_0 : i32, i32
  }
  func.func @transform_28(%arg0: i32) -> (i32, i32) {
    %c0_i32 = arith.constant 0 : i32
    %c0_i32_0 = arith.constant 0 : i32
    %c0_i32_1 = arith.constant 0 : i32
    return %c0_i32, %c0_i32_0 : i32, i32
  }
  func.func @transform_29(%arg0: i32) -> (i32, i32) {
    %c0_i32 = arith.constant 0 : i32
    %c0_i32_0 = arith.constant 0 : i32
    %c0_i32_1 = arith.constant 0 : i32
    return %c0_i32, %c0_i32_0 : i32, i32
  }
  func.func @transform_30(%arg0: i32) -> (i32, i32) {
    %c0_i32 = arith.constant 0 : i32
    %c0_i32_0 = arith.constant 0 : i32
    %c0_i32_1 = arith.constant 0 : i32
    return %c0_i32, %c0_i32_0 : i32, i32
  }
  func.func @transform_31(%arg0: i32) -> (i32, i32) {
    %c0_i32 = arith.constant 0 : i32
    %c0_i32_0 = arith.constant 0 : i32
    %c0_i32_1 = arith.constant 0 : i32
    return %c0_i32, %c0_i32_0 : i32, i32
  }
  func.func @transform_32(%arg0: i32) -> (i32, i32) {
    %c0_i32 = arith.constant 0 : i32
    %c0_i32_0 = arith.constant 0 : i32
    %c0_i32_1 = arith.constant 0 : i32
    return %c0_i32, %c0_i32_0 : i32, i32
  }
  func.func @transform_33(%arg0: i32) -> (i32, i32, i32) {
    %c0_i32 = arith.constant 0 : i32
    %c0_i32_0 = arith.constant 0 : i32
    %c0_i32_1 = arith.constant 0 : i32
    %c0_i32_2 = arith.constant 0 : i32
    return %c0_i32, %c0_i32_0, %c0_i32_1 : i32, i32, i32
  }
  func.func @transform_34(%arg0: i32) -> (i32, i32) {
    %c0_i32 = arith.constant 0 : i32
    %c0_i32_0 = arith.constant 0 : i32
    %c0_i32_1 = arith.constant 0 : i32
    return %c0_i32, %c0_i32_0 : i32, i32
  }
  func.func @transform_35(%arg0: i32) -> (i32, i32) {
    %c0_i32 = arith.constant 0 : i32
    %c0_i32_0 = arith.constant 0 : i32
    %c0_i32_1 = arith.constant 0 : i32
    return %c0_i32, %c0_i32_0 : i32, i32
  }
  func.func @transform_36(%arg0: i32) -> (i32, i32) {
    %c0_i32 = arith.constant 0 : i32
    %c0_i32_0 = arith.constant 0 : i32
    %c0_i32_1 = arith.constant 0 : i32
    return %c0_i32, %c0_i32_0 : i32, i32
  }
  func.func @transform_37(%arg0: i32) -> (i32, i32) {
    %c0_i32 = arith.constant 0 : i32
    %c0_i32_0 = arith.constant 0 : i32
    %c0_i32_1 = arith.constant 0 : i32
    return %c0_i32, %c0_i32_0 : i32, i32
  }
  func.func @transform_38(%arg0: i32) -> (i32, i32) {
    %c0_i32 = arith.constant 0 : i32
    %c0_i32_0 = arith.constant 0 : i32
    %c0_i32_1 = arith.constant 0 : i32
    return %c0_i32, %c0_i32_0 : i32, i32
  }
  func.func @transform_39(%arg0: i32) -> (i32, i32) {
    %c0_i32 = arith.constant 0 : i32
    %c0_i32_0 = arith.constant 0 : i32
    %c0_i32_1 = arith.constant 0 : i32
    return %c0_i32, %c0_i32_0 : i32, i32
  }
  func.func @transform_40(%arg0: i32) -> (i32, i32) {
    %c0_i32 = arith.constant 0 : i32
    %c0_i32_0 = arith.constant 0 : i32
    %c0_i32_1 = arith.constant 0 : i32
    return %c0_i32, %c0_i32_0 : i32, i32
  }
  func.func @transform_41(%arg0: i32) -> (i32, i32) {
    %c0_i32 = arith.constant 0 : i32
    %c0_i32_0 = arith.constant 0 : i32
    %c0_i32_1 = arith.constant 0 : i32
    return %c0_i32, %c0_i32_0 : i32, i32
  }
  func.func @transform_42(%arg0: i32) -> (i32, i32) {
    %c0_i32 = arith.constant 0 : i32
    %c0_i32_0 = arith.constant 0 : i32
    %c0_i32_1 = arith.constant 0 : i32
    return %c0_i32, %c0_i32_0 : i32, i32
  }
  func.func @transform_43(%arg0: i32) -> (i32, i32) {
    %c0_i32 = arith.constant 0 : i32
    %c0_i32_0 = arith.constant 0 : i32
    %c0_i32_1 = arith.constant 0 : i32
    return %c0_i32, %c0_i32_0 : i32, i32
  }
  func.func @transform_44(%arg0: i32) -> (i32, i32) {
    %c0_i32 = arith.constant 0 : i32
    %c0_i32_0 = arith.constant 0 : i32
    %c0_i32_1 = arith.constant 0 : i32
    return %c0_i32, %c0_i32_0 : i32, i32
  }
}

module attributes {stable_mosaic.version = 11 : i64} {
  func.func @_mavl_head_kernel(%arg0: i32, %arg1: memref<6x128xf32, #tpu.memory_space<vmem>>, %arg2: memref<2x32xf32, #tpu.memory_space<vmem>>, %arg3: memref<12x32xf32, #tpu.memory_space<vmem>>, %arg4: memref<128x14xbf16, #tpu.memory_space<vmem>>, %arg5: memref<1x14xf32, #tpu.memory_space<vmem>>, %arg6: memref<6x14xf32, #tpu.memory_space<vmem>>, %arg7: memref<2x12xf32, #tpu.memory_space<vmem>>) attributes {dimension_semantics = [#tpu.dimension_semantics<arbitrary>], iteration_bounds = array<i64: 1>, scalar_prefetch = 0 : i64, scratch_operands = 0 : i64, tpu.core_type = #tpu.core_type<tc>, window_params = [{pipeline_mode = #tpu.pipeline_mode<synchronous>, transform_indices = @transform_0, window_bounds = array<i64: 6, 128>}, {pipeline_mode = #tpu.pipeline_mode<synchronous>, transform_indices = @transform_1, window_bounds = array<i64: 2, 32>}, {pipeline_mode = #tpu.pipeline_mode<synchronous>, transform_indices = @transform_2, window_bounds = array<i64: 12, 32>}, {pipeline_mode = #tpu.pipeline_mode<synchronous>, transform_indices = @transform_3, window_bounds = array<i64: 128, 14>}, {pipeline_mode = #tpu.pipeline_mode<synchronous>, transform_indices = @transform_4, window_bounds = array<i64: 1, 14>}, {pipeline_mode = #tpu.pipeline_mode<synchronous>, transform_indices = @transform_5, window_bounds = array<i64: 6, 14>}, {pipeline_mode = #tpu.pipeline_mode<synchronous>, transform_indices = @transform_6, window_bounds = array<i64: 2, 12>}]} {
    %c0 = arith.constant 0 : index
    %c0_0 = arith.constant 0 : index
    %0 = vector.load %arg1[%c0, %c0_0] : memref<6x128xf32, #tpu.memory_space<vmem>>, vector<6x128xf32>
    %c0_1 = arith.constant 0 : index
    %c0_2 = arith.constant 0 : index
    %1 = vector.load %arg4[%c0_1, %c0_2] : memref<128x14xbf16, #tpu.memory_space<vmem>>, vector<128x14xbf16>
    %2 = arith.truncf %0 : vector<6x128xf32> to vector<6x128xbf16>
    %cst = arith.constant dense<0.000000e+00> : vector<6x14xf32>
    %3 = tpu.matmul %2, %1, %cst {dimension_numbers = #tpu.dot_dimension_numbers<[1], [0], [0], [1], [0, 0, 1, 1], [], []>} : vector<6x128xbf16>, vector<128x14xbf16>, vector<6x14xf32> -> vector<6x14xf32>
    %c0_3 = arith.constant 0 : index
    %c0_4 = arith.constant 0 : index
    %4 = vector.load %arg5[%c0_3, %c0_4] : memref<1x14xf32, #tpu.memory_space<vmem>>, vector<1x14xf32>
    %5 = vector.broadcast %4 : vector<1x14xf32> to vector<6x14xf32>
    %6 = arith.addf %3, %5 : vector<6x14xf32>
    %c0_5 = arith.constant 0 : index
    %c0_6 = arith.constant 0 : index
    %7 = vector.load %arg6[%c0_5, %c0_6] : memref<6x14xf32, #tpu.memory_space<vmem>>, vector<6x14xf32>
    tpu.vector_store %arg6[%c0_5, %c0_6], %6 {strides = array<i32>} : memref<6x14xf32, #tpu.memory_space<vmem>>, vector<6x14xf32>,
    %c0_7 = arith.constant 0 : index
    %c0_8 = arith.constant 0 : index
    %8 = vector.load %arg2[%c0_7, %c0_8] : memref<2x32xf32, #tpu.memory_space<vmem>>, vector<2x32xf32>
    %9 = arith.mulf %8, %8 : vector<2x32xf32>
    %cst_9 = arith.constant dense<0.000000e+00> : vector<2xf32>
    %10 = vector.multi_reduction <add>, %9, %cst_9 [1] : vector<2x32xf32> to vector<2xf32>
    %11 = vector.shape_cast %10 : vector<2xf32> to vector<2x1xf32>
    %12 = math.sqrt %11 : vector<2x1xf32>
    %cst_10 = arith.constant 9.99999996E-13 : f32
    %13 = vector.broadcast %cst_10 : f32 to vector<2x1xf32>
    %14 = arith.maximumf %12, %13 : vector<2x1xf32>
    %15 = vector.broadcast %14 : vector<2x1xf32> to vector<2x32xf32>
    %16 = arith.divf %8, %15 : vector<2x32xf32>
    %c0_11 = arith.constant 0 : index
    %c0_12 = arith.constant 0 : index
    %17 = vector.load %arg3[%c0_11, %c0_12] : memref<12x32xf32, #tpu.memory_space<vmem>>, vector<12x32xf32>
    %18 = arith.mulf %17, %17 : vector<12x32xf32>
    %cst_13 = arith.constant dense<0.000000e+00> : vector<12xf32>
    %19 = vector.multi_reduction <add>, %18, %cst_13 [1] : vector<12x32xf32> to vector<12xf32>
    %20 = vector.shape_cast %19 : vector<12xf32> to vector<12x1xf32>
    %21 = math.sqrt %20 : vector<12x1xf32>
    %cst_14 = arith.constant 9.99999996E-13 : f32
    %22 = vector.broadcast %cst_14 : f32 to vector<12x1xf32>
    %23 = arith.maximumf %21, %22 : vector<12x1xf32>
    %24 = vector.broadcast %23 : vector<12x1xf32> to vector<12x32xf32>
    %25 = arith.divf %17, %24 : vector<12x32xf32>
    %26 = arith.truncf %16 : vector<2x32xf32> to vector<2x32xbf16>
    %27 = arith.truncf %25 : vector<12x32xf32> to vector<12x32xbf16>
    "tpu.trace_start"() <{level = 10 : i32, message = "md,nd->mn"}> : () -> ()
    %cst_15 = arith.constant dense<0.000000e+00> : vector<2x12xf32>
    %28 = tpu.matmul %26, %27, %cst_15 {dimension_numbers = #tpu.dot_dimension_numbers<[1], [1], [0], [0], [0, 0, 1, 0], [], []>} : vector<2x32xbf16>, vector<12x32xbf16>, vector<2x12xf32> -> vector<2x12xf32>
    "tpu.trace_stop"() : () -> ()
    %c0_16 = arith.constant 0 : index
    %c0_17 = arith.constant 0 : index
    %29 = vector.load %arg7[%c0_16, %c0_17] : memref<2x12xf32, #tpu.memory_space<vmem>>, vector<2x12xf32>
    tpu.vector_store %arg7[%c0_16, %c0_17], %28 {strides = array<i32>} : memref<2x12xf32, #tpu.memory_space<vmem>>, vector<2x12xf32>,
    return
  }
  func.func @transform_0(%arg0: i32) -> (i32, i32) {
    %c0_i32 = arith.constant 0 : i32
    %c0_i32_0 = arith.constant 0 : i32
    %c0_i32_1 = arith.constant 0 : i32
    return %c0_i32, %c0_i32_0 : i32, i32
  }
  func.func @transform_1(%arg0: i32) -> (i32, i32) {
    %c0_i32 = arith.constant 0 : i32
    %c0_i32_0 = arith.constant 0 : i32
    %c0_i32_1 = arith.constant 0 : i32
    return %c0_i32, %c0_i32_0 : i32, i32
  }
  func.func @transform_2(%arg0: i32) -> (i32, i32) {
    %c0_i32 = arith.constant 0 : i32
    %c0_i32_0 = arith.constant 0 : i32
    %c0_i32_1 = arith.constant 0 : i32
    return %c0_i32, %c0_i32_0 : i32, i32
  }
  func.func @transform_3(%arg0: i32) -> (i32, i32) {
    %c0_i32 = arith.constant 0 : i32
    %c0_i32_0 = arith.constant 0 : i32
    %c0_i32_1 = arith.constant 0 : i32
    return %c0_i32, %c0_i32_0 : i32, i32
  }
  func.func @transform_4(%arg0: i32) -> (i32, i32) {
    %c0_i32 = arith.constant 0 : i32
    %c0_i32_0 = arith.constant 0 : i32
    %c0_i32_1 = arith.constant 0 : i32
    return %c0_i32, %c0_i32_0 : i32, i32
  }
  func.func @transform_5(%arg0: i32) -> (i32, i32) {
    %c0_i32 = arith.constant 0 : i32
    %c0_i32_0 = arith.constant 0 : i32
    %c0_i32_1 = arith.constant 0 : i32
    return %c0_i32, %c0_i32_0 : i32, i32
  }
  func.func @transform_6(%arg0: i32) -> (i32, i32) {
    %c0_i32 = arith.constant 0 : i32
    %c0_i32_0 = arith.constant 0 : i32
    %c0_i32_1 = arith.constant 0 : i32
    return %c0_i32, %c0_i32_0 : i32, i32
  }
}

</mosaic_0001>

<llo_original>
// kernel: _lambda_.3
$region0: #{_lambda_.3}
  #allocation0 [shape = 'u32[]', space=smem, size = 0x4, offset = 0x4, fixed_abs, tag = 'smem constant byte address 0x4 - core index']
  #allocation1 [shape = 'u32[72,128]{1,0:T(1,128)}', space=vmem, size = 0x9000, scoped, tag = 'internal scratch']
  %s0 = inlined_call_operand.vmem [shape: f32[6,128], index: 0, kind: input, shape index: {}]
  %s1 = inlined_call_operand.vmem [shape: f32[2,32], index: 1, kind: input, shape index: {}]
  %s2 = inlined_call_operand.vmem [shape: f32[12,32], index: 2, kind: input, shape index: {}]
  %s3 = inlined_call_operand.vmem [shape: bf16[128,14], index: 3, kind: input, shape index: {}]
  %s4 = inlined_call_operand.vmem [shape: f32[1,14], index: 4, kind: input, shape index: {}]
  %s5 = inlined_call_operand.vmem [shape: f32[6,14], index: 5, kind: output, shape index: {0}]
  %s6 = inlined_call_operand.vmem [shape: f32[2,12], index: 6, kind: output, shape index: {1}]
  %7 = xla_tuple %s5, %s6
  %s8 = sld [smem:[#allocation0]]
  $region38: #{_lambda_.3} parent=0
    _
  %s10 = ssub.s32 1, %s8
  %s11 = scalar_select 0, %s10, %s8
  // Predicated region
  $region2: #{_lambda_.3} parent=0 // pred_check
    _
  $region3: #{_lambda_.3} parent=0 // pred_check_branch
    %13 = sbr.rel (0) target = $region5
  $region4: #{_lambda_.3} parent=0 // pred_region
    _
  $region5: #{_lambda_.3} parent=0 // pred_fallthru
    _
  // Predicated region
  $region6: #{_lambda_.3} parent=0 // pred_check
    _
  $region7: #{_lambda_.3} parent=0 // pred_check_branch
    %15 = sbr.rel (0) target = $region9
  $region8: #{_lambda_.3} parent=0 // pred_region
    _
  $region9: #{_lambda_.3} parent=0 // pred_fallthru
    _
  // Predicated region
  $region10: #{_lambda_.3} parent=0 // pred_check
    _
  $region11: #{_lambda_.3} parent=0 // pred_check_branch
    %17 = sbr.rel (0) target = $region13
  $region12: #{_lambda_.3} parent=0 // pred_region
    _
  $region13: #{_lambda_.3} parent=0 // pred_fallthru
    _
  // Predicated region
  $region14: #{_lambda_.3} parent=0 // pred_check
    _
  $region15: #{_lambda_.3} parent=0 // pred_check_branch
    %19 = sbr.rel (0) target = $region17
  $region16: #{_lambda_.3} parent=0 // pred_region
    _
  $region17: #{_lambda_.3} parent=0 // pred_fallthru
    _
  // Predicated region
  $region18: #{_lambda_.3} parent=0 // pred_check
    _
  $region19: #{_lambda_.3} parent=0 // pred_check_branch
    %21 = sbr.rel (0) target = $region21
  $region20: #{_lambda_.3} parent=0 // pred_region
    _
  $region21: #{_lambda_.3} parent=0 // pred_fallthru
    _
  %v23 = vld [vmem:[%s0] sm:$0x3f]
  %v24 = vld [vmem:[%s3] sm:$0xf]
  %v25 = vld [vmem:[%s3 + $0x4] sm:$0xf]
  %v26 = vld [vmem:[%s3 + $0x8] sm:$0xf]
  %v27 = vld [vmem:[%s3 + $0xc] sm:$0xf]
  %v28 = vld [vmem:[%s3 + $0x10] sm:$0xf]
  %v29 = vld [vmem:[%s3 + $0x14] sm:$0xf]
  %v30 = vld [vmem:[%s3 + $0x18] sm:$0xf]
  %v31 = vld [vmem:[%s3 + $0x1c] sm:$0xf]
  %v32 = vld [vmem:[%s3 + $0x20] sm:$0xf]
  %v33 = vld [vmem:[%s3 + $0x24] sm:$0xf]
  %v34 = vld [vmem:[%s3 + $0x28] sm:$0xf]
  %v35 = vld [vmem:[%s3 + $0x2c] sm:$0xf]
  %v36 = vld [vmem:[%s3 + $0x30] sm:$0xf]
  %v37 = vld [vmem:[%s3 + $0x34] sm:$0xf]
  %v38 = vld [vmem:[%s3 + $0x38] sm:$0xf]
  %v39 = vld [vmem:[%s3 + $0x3c] sm:$0xf]
  %v40 = vpack.c.bf16 %v23, %v23
  %v41 = vld [vmem:[%s4] sm:$0x1]
  %v43 = vperm.slane %v41, 0
  %v61 = vunpack.c.l.b16 %v24
  %v62 = vunpack.c.l.b16 %v25
  %v63 = vunpack.c.l.b16 %v26
  %v64 = vunpack.c.l.b16 %v27
  %v65 = vunpack.c.l.b16 %v28
  %v66 = vunpack.c.l.b16 %v29
  %v67 = vunpack.c.l.b16 %v30
  %v68 = vunpack.c.l.b16 %v31
  %v69 = vunpack.c.l.b16 %v32
  %v70 = vunpack.c.l.b16 %v33
  %v71 = vunpack.c.l.b16 %v34
  %v72 = vunpack.c.l.b16 %v35
  %v73 = vunpack.c.l.b16 %v36
  %v74 = vunpack.c.l.b16 %v37
  %v75 = vunpack.c.l.b16 %v38
  %v76 = vunpack.c.l.b16 %v39
  %v77 = vpack.c.b16 %v62, %v61
  %v78 = vpack.c.b16 %v64, %v63
  %v79 = vpack.c.b16 %v66, %v65
  %v80 = vpack.c.b16 %v68, %v67
  %v81 = vpack.c.b16 %v70, %v69
  %v82 = vpack.c.b16 %v72, %v71
  %v83 = vpack.c.b16 %v74, %v73
  %v84 = vpack.c.b16 %v76, %v75
  %93 = vmatpush.bf16.msra.mxu0 %v84
  %94 = vmatpush.bf16.msra.mxu0 %v83
  %95 = vmatpush.bf16.msra.mxu0 %v82
  %96 = vmatpush.bf16.msra.mxu0 %v81
  %97 = vmatpush.bf16.msra.mxu0 %v80
  %98 = vmatpush.bf16.msra.mxu0 %v79
  %99 = vmatpush.bf16.msra.mxu0 %v78
  %100 = vmatpush.bf16.msra.mxu0 %v77
  %101 = vmatmul.bf16.gmra.mxu0 %v40
  %v102 = vpop.f32.mrf.mxu0
  %v103 = vadd.f32 %v43, %v102
  %v104 = vpop.f32.mrf.mxu0
  %105 = vdwg.mxu0
  %vm106 = vcmask 111616
  %107 = vst.msk [vmem:[%s5] sm:$0x3f] %vm106, %v103
  %v108 = vld [vmem:[%s1] sm:$0x3]
  %v109 = vmul.f32 %v108, %v108
  %vm110 = vcmask 254976
  %v111 = vsel %vm110, %v109, 0.0
  %112 = vadd.xlane.f32.xlu0 %v111
  %v113 = vpop.xlane.xlu0 %112
  %v114 = vrsqrt.pop %v113
  %v115 = vmul.f32 %v114, %v113
  %v116 = vmul.f32 %v115, %v114
  %v117 = vmul.f32 0.5, %v116
  %v118 = vsub.f32 1.5, %v117
  %v119 = vmul.f32 %v114, %v118
  %v120 = vmul.f32 %v113, %v119
  %vm121 = vcmp.eq.f32.partialorder %v113, inf
  %v122 = vsel %vm121, %v113, %v120
  %vm123 = vcmp.eq.f32.partialorder %v113, 0.0
  %v124 = vand.u32 %v113, 2147483648
  %v125 = vsel %vm123, %v124, %v122
  %v126 = vmax.f32 %v125, 1e-12
  %v127 = vrcp.pop %v126
  %v128 = vmul.f32 %v126, %v127
  %v129 = vsub.f32 1.0, %v128
  %v130 = vmul.f32 %v127, %v129
  %v131 = vadd.f32 %v127, %v130
  %vm132 = vweird.f32 %v126
  %vm133 = vweird.f32 %v127
  %vm134 = vmor %vm132, %vm133
  %v135 = vsel %vm134, %v127, %v131
  %v136 = vand.u32 2147483647, %v126
  %vm137 = vcmp.eq.f32.partialorder %v136, 8.507059e+37
  %v138 = vand.u32 %v126, 2147483648
  %v139 = vor.u32 1.1754944e-38, %v138
  %v140 = vsel %vm137, %v139, %v135
  %v141 = vmul.f32 %v108, %v140
  %v142 = vld [vmem:[%s2] sm:$0xff]
  %v143 = vld [vmem:[%s2 + $0x8] sm:$0xf]
  %v144 = vmul.f32 %v142, %v142
  %v145 = vmul.f32 %v143, %v143
  %vm146 = vcmask 261120
  %v147 = vsel %vm146, %v144, 0.0
  %148 = vadd.xlane.f32.xlu0 %v147
  %v149 = vpop.xlane.xlu0 %148
  %vm150 = vcmask 257024
  %v151 = vsel %vm150, %v145, 0.0
  %152 = vadd.xlane.f32.xlu0 %v151
  %v153 = vpop.xlane.xlu0 %152
  %v154 = vrsqrt.pop %v149
  %v155 = vmul.f32 %v154, %v149
  %v156 = vmul.f32 %v155, %v154
  %v157 = vmul.f32 0.5, %v156
  %v158 = vsub.f32 1.5, %v157
  %v159 = vmul.f32 %v154, %v158
  %v160 = vmul.f32 %v149, %v159
  %vm161 = vcmp.eq.f32.partialorder %v149, inf
  %v162 = vsel %vm161, %v149, %v160
  %vm163 = vcmp.eq.f32.partialorder %v149, 0.0
  %v164 = vand.u32 %v149, 2147483648
  %v165 = vsel %vm163, %v164, %v162
  %v166 = vrsqrt.pop %v153
  %v167 = vmul.f32 %v166, %v153
  %v168 = vmul.f32 %v167, %v166
  %v169 = vmul.f32 0.5, %v168
  %v170 = vsub.f32 1.5, %v169
  %v171 = vmul.f32 %v166, %v170
  %v172 = vmul.f32 %v153, %v171
  %vm173 = vcmp.eq.f32.partialorder %v153, inf
  %v174 = vsel %vm173, %v153, %v172
  %vm175 = vcmp.eq.f32.partialorder %v153, 0.0
  %v176 = vand.u32 %v153, 2147483648
  %v177 = vsel %vm175, %v176, %v174
  %v178 = vmax.f32 %v165, 1e-12
  %v179 = vmax.f32 %v177, 1e-12
  %v180 = vrcp.pop %v178
  %v181 = vmul.f32 %v178, %v180
  %v182 = vsub.f32 1.0, %v181
  %v183 = vmul.f32 %v180, %v182
  %v184 = vadd.f32 %v180, %v183
  %vm185 = vweird.f32 %v178
  %vm186 = vweird.f32 %v180
  %vm187 = vmor %vm185, %vm186
  %v188 = vsel %vm187, %v180, %v184
  %v189 = vand.u32 2147483647, %v178
  %vm190 = vcmp.eq.f32.partialorder %v189, 8.507059e+37
  %v191 = vand.u32 %v178, 2147483648
  %v192 = vor.u32 1.1754944e-38, %v191
  %v193 = vsel %vm190, %v192, %v188
  %v194 = vmul.f32 %v142, %v193
  %v195 = vrcp.pop %v179
  %v196 = vmul.f32 %v179, %v195
  %v197 = vsub.f32 1.0, %v196
  %v198 = vmul.f32 %v195, %v197
  %v199 = vadd.f32 %v195, %v198
  %vm200 = vweird.f32 %v179
  %vm201 = vweird.f32 %v195
  %vm202 = vmor %vm200, %vm201
  %v203 = vsel %vm202, %v195, %v199
  %v204 = vand.u32 2147483647, %v179
  %vm205 = vcmp.eq.f32.partialorder %v204, 8.507059e+37
  %v206 = vand.u32 %v179, 2147483648
  %v207 = vor.u32 1.1754944e-38, %v206
  %v208 = vsel %vm205, %v207, %v203
  %v209 = vmul.f32 %v143, %v208
  %v210 = vpack.c.bf16 %v141, %v141
  %v211 = vpack.c.bf16 %v209, %v194
  %v213 = vsel %vm146, %v210, 0
  %v216 = vsel %vm146, %v211, 0
  %218 = vmatpush.bf16.xpose.msra.mxu0 0
  %219 = vmatpush.bf16.xpose.msra.mxu0 0
  %220 = vmatpush.bf16.xpose.msra.mxu0 0
  %221 = vmatpush.bf16.xpose.msra.mxu0 0
  %222 = vmatpush.bf16.xpose.msra.mxu0 0
  %223 = vmatpush.bf16.xpose.msra.mxu0 0
  %224 = vmatpush.bf16.xpose.msra.mxu0 0
  %225 = vmatpush.bf16.xpose.msra.mxu0 %v216
  %226 = vmatmul.bf16.gmra.mxu0 %v213
  %v227 = vpop.f32.mrf.mxu0
  %v228 = vadd.f32 0.0, %v227
  %v229 = vpop.f32.mrf.mxu0
  %230 = vdwg.mxu0
  %vm231 = vcmask 91136
  %232 = vst.msk [vmem:[%s6] sm:$0x3] %vm231, %v228
  // Predicated region
  $region22: #{_lambda_.3} parent=0 // pred_check
    _
  $region23: #{_lambda_.3} parent=0 // pred_check_branch
    %234 = sbr.rel (0) target = $region25
  $region24: #{_lambda_.3} parent=0 // pred_region
    _
  $region25: #{_lambda_.3} parent=0 // pred_fallthru
    _
  // Predicated region
  $region26: #{_lambda_.3} parent=0 // pred_check
    _
  $region27: #{_lambda_.3} parent=0 // pred_check_branch
    %236 = sbr.rel (0) target = $region29
  $region28: #{_lambda_.3} parent=0 // pred_region
    _
  $region29: #{_lambda_.3} parent=0 // pred_fallthru
    _
  // Predicated region
  $region30: #{_lambda_.3} parent=0 // pred_check
    _
  $region31: #{_lambda_.3} parent=0 // pred_check_branch
    %238 = sbr.rel (0) target = $region33
  $region32: #{_lambda_.3} parent=0 // pred_region
    _
  $region33: #{_lambda_.3} parent=0 // pred_fallthru
    _
  // Predicated region
  $region34: #{_lambda_.3} parent=0 // pred_check
    _
  $region35: #{_lambda_.3} parent=0 // pred_check_branch
    %240 = sbr.rel (0) target = $region37
  $region36: #{_lambda_.3} parent=0 // pred_region
    _
  $region37: #{_lambda_.3} parent=0 // pred_fallthru
    _

// kernel: _lambda_.2
$region0: #{_lambda_.2}
  #allocation0 [shape = 'u32[]', space=smem, size = 0x4, offset = 0x4, fixed_abs, tag = 'smem constant byte address 0x4 - core index']
  #allocation1 [shape = 'u32[72,128]{1,0:T(1,128)}', space=vmem, size = 0x9000, scoped, tag = 'internal scratch']
  %s0 = inlined_call_operand.smem [shape: u32[45], index: -1, kind: input, shape index: {}]
  %s1 = sld [smem:[%s0]]
  %s2 = scalar_lea.smem %s0, 1
  %s3 = sld [smem:[%s2]]
  %s4 = scalar_lea.smem %s0, 2
  %s5 = sld [smem:[%s4]]
  %s6 = scalar_lea.smem %s0, 3
  %s7 = sld [smem:[%s6]]
  %s8 = scalar_lea.smem %s0, 4
  %s9 = sld [smem:[%s8]]
  %s10 = scalar_lea.smem %s0, 5
  %s11 = sld [smem:[%s10]]
  %s12 = scalar_lea.smem %s0, 6
  %s13 = sld [smem:[%s12]]
  %s14 = scalar_lea.smem %s0, 7
  %s15 = sld [smem:[%s14]]
  %s16 = scalar_lea.smem %s0, 8
  %s17 = sld [smem:[%s16]]
  %s18 = scalar_lea.smem %s0, 9
  %s19 = sld [smem:[%s18]]
  %s20 = scalar_lea.smem %s0, 10
  %s21 = sld [smem:[%s20]]
  %s22 = scalar_lea.smem %s0, 11
  %s23 = sld [smem:[%s22]]
  %s24 = scalar_lea.smem %s0, 12
  %s25 = sld [smem:[%s24]]
  %s26 = scalar_lea.smem %s0, 13
  %s27 = sld [smem:[%s26]]
  %s28 = scalar_lea.smem %s0, 14
  %s29 = sld [smem:[%s28]]
  %s30 = scalar_lea.smem %s0, 15
  %s31 = sld [smem:[%s30]]
  %s32 = scalar_lea.smem %s0, 16
  %s33 = sld [smem:[%s32]]
  %s34 = scalar_lea.smem %s0, 17
  %s35 = sld [smem:[%s34]]
  %s36 = scalar_lea.smem %s0, 18
  %s37 = sld [smem:[%s36]]
  %s38 = scalar_lea.smem %s0, 19
  %s39 = sld [smem:[%s38]]
  %s40 = scalar_lea.smem %s0, 20
  %s41 = sld [smem:[%s40]]
  %s42 = scalar_lea.smem %s0, 21
  %s43 = sld [smem:[%s42]]
  %s44 = scalar_lea.smem %s0, 22
  %s45 = sld [smem:[%s44]]
  %s46 = scalar_lea.smem %s0, 23
  %s47 = sld [smem:[%s46]]
  %s48 = scalar_lea.smem %s0, 24
  %s49 = sld [smem:[%s48]]
  %s50 = scalar_lea.smem %s0, 25
  %s51 = sld [smem:[%s50]]
  %s52 = scalar_lea.smem %s0, 26
  %s53 = sld [smem:[%s52]]
  %s54 = scalar_lea.smem %s0, 27
  %s55 = sld [smem:[%s54]]
  %s56 = scalar_lea.smem %s0, 28
  %s57 = sld [smem:[%s56]]
  %s58 = scalar_lea.smem %s0, 29
  %s59 = sld [smem:[%s58]]
  %s60 = scalar_lea.smem %s0, 30
  %s61 = sld [smem:[%s60]]
  %s62 = scalar_lea.smem %s0, 31
  %s63 = sld [smem:[%s62]]
  %s64 = scalar_lea.smem %s0, 32
  %s65 = sld [smem:[%s64]]
  %s66 = scalar_lea.smem %s0, 33
  %s67 = sld [smem:[%s66]]
  %s68 = scalar_lea.smem %s0, 34
  %s69 = sld [smem:[%s68]]
  %s70 = scalar_lea.smem %s0, 35
  %s71 = sld [smem:[%s70]]
  %s72 = scalar_lea.smem %s0, 36
  %s73 = sld [smem:[%s72]]
  %s74 = scalar_lea.smem %s0, 37
  %s75 = sld [smem:[%s74]]
  %s76 = scalar_lea.smem %s0, 38
  %s77 = sld [smem:[%s76]]
  %s78 = scalar_lea.smem %s0, 39
  %s79 = sld [smem:[%s78]]
  %s80 = scalar_lea.smem %s0, 40
  %s81 = sld [smem:[%s80]]
  %s82 = scalar_lea.smem %s0, 41
  %s83 = sld [smem:[%s82]]
  %s84 = scalar_lea.smem %s0, 42
  %s85 = sld [smem:[%s84]]
  %s86 = scalar_lea.smem %s0, 43
  %s87 = sld [smem:[%s86]]
  %s88 = scalar_lea.smem %s0, 44
  %s89 = sld [smem:[%s88]]
  %90 = xla_tuple %s85, %s87, %s89
  %s91 = sld [smem:[#allocation0]]
  $region194: #{_lambda_.2} parent=0
    _
  %s93 = ssub.s32 1, %s91
  %s94 = scalar_select 0, %s93, %s91
  // Predicated region
  $region2: #{_lambda_.2} parent=0 // pred_check
    _
  $region3: #{_lambda_.2} parent=0 // pred_check_branch
    %96 = sbr.rel (0) target = $region5
  $region4: #{_lambda_.2} parent=0 // pred_region
    _
  $region5: #{_lambda_.2} parent=0 // pred_fallthru
    _
  // Predicated region
  $region6: #{_lambda_.2} parent=0 // pred_check
    _
  $region7: #{_lambda_.2} parent=0 // pred_check_branch
    %98 = sbr.rel (0) target = $region9
  $region8: #{_lambda_.2} parent=0 // pred_region
    _
  $region9: #{_lambda_.2} parent=0 // pred_fallthru
    _
  // Predicated region
  $region10: #{_lambda_.2} parent=0 // pred_check
    _
  $region11: #{_lambda_.2} parent=0 // pred_check_branch
    %100 = sbr.rel (0) target = $region13
  $region12: #{_lambda_.2} parent=0 // pred_region
    _
  $region13: #{_lambda_.2} parent=0 // pred_fallthru
    _
  // Predicated region
  $region14: #{_lambda_.2} parent=0 // pred_check
    _
  $region15: #{_lambda_.2} parent=0 // pred_check_branch
    %102 = sbr.rel (0) target = $region17
  $region16: #{_lambda_.2} parent=0 // pred_region
    _
  $region17: #{_lambda_.2} parent=0 // pred_fallthru
    _
  // Predicated region
  $region18: #{_lambda_.2} parent=0 // pred_check
    _
  $region19: #{_lambda_.2} parent=0 // pred_check_branch
    %104 = sbr.rel (0) target = $region21
  $region20: #{_lambda_.2} parent=0 // pred_region
    _
  $region21: #{_lambda_.2} parent=0 // pred_fallthru
    _
  // Predicated region
  $region22: #{_lambda_.2} parent=0 // pred_check
    _
  $region23: #{_lambda_.2} parent=0 // pred_check_branch
    %106 = sbr.rel (0) target = $region25
  $region24: #{_lambda_.2} parent=0 // pred_region
    _
  $region25: #{_lambda_.2} parent=0 // pred_fallthru
    _
  // Predicated region
  $region26: #{_lambda_.2} parent=0 // pred_check
    _
  $region27: #{_lambda_.2} parent=0 // pred_check_branch
    %108 = sbr.rel (0) target = $region29
  $region28: #{_lambda_.2} parent=0 // pred_region
    _
  $region29: #{_lambda_.2} parent=0 // pred_fallthru
    _
  // Predicated region
  $region30: #{_lambda_.2} parent=0 // pred_check
    _
  $region31: #{_lambda_.2} parent=0 // pred_check_branch
    %110 = sbr.rel (0) target = $region33
  $region32: #{_lambda_.2} parent=0 // pred_region
    _
  $region33: #{_lambda_.2} parent=0 // pred_fallthru
    _
  // Predicated region
  $region34: #{_lambda_.2} parent=0 // pred_check
    _
  $region35: #{_lambda_.2} parent=0 // pred_check_branch
    %112 = sbr.rel (0) target = $region37
  $region36: #{_lambda_.2} parent=0 // pred_region
    _
  $region37: #{_lambda_.2} parent=0 // pred_fallthru
    _
  // Predicated region
  $region38: #{_lambda_.2} parent=0 // pred_check
    _
  $region39: #{_lambda_.2} parent=0 // pred_check_branch
    %114 = sbr.rel (0) target = $region41
  $region40: #{_lambda_.2} parent=0 // pred_region
    _
  $region41: #{_lambda_.2} parent=0 // pred_fallthru
    _
  // Predicated region
  $region42: #{_lambda_.2} parent=0 // pred_check
    _
  $region43: #{_lambda_.2} parent=0 // pred_check_branch
    %116 = sbr.rel (0) target = $region45
  $region44: #{_lambda_.2} parent=0 // pred_region
    _
  $region45: #{_lambda_.2} parent=0 // pred_fallthru
    _
  // Predicated region
  $region46: #{_lambda_.2} parent=0 // pred_check
    _
  $region47: #{_lambda_.2} parent=0 // pred_check_branch
    %118 = sbr.rel (0) target = $region49
  $region48: #{_lambda_.2} parent=0 // pred_region
    _
  $region49: #{_lambda_.2} parent=0 // pred_fallthru
    _
  // Predicated region
  $region50: #{_lambda_.2} parent=0 // pred_check
    _
  $region51: #{_lambda_.2} parent=0 // pred_check_branch
    %120 = sbr.rel (0) target = $region53
  $region52: #{_lambda_.2} parent=0 // pred_region
    _
  $region53: #{_lambda_.2} parent=0 // pred_fallthru
    _
  // Predicated region
  $region54: #{_lambda_.2} parent=0 // pred_check
    _
  $region55: #{_lambda_.2} parent=0 // pred_check_branch
    %122 = sbr.rel (0) target = $region57
  $region56: #{_lambda_.2} parent=0 // pred_region
    _
  $region57: #{_lambda_.2} parent=0 // pred_fallthru
    _
  // Predicated region
  $region58: #{_lambda_.2} parent=0 // pred_check
    _
  $region59: #{_lambda_.2} parent=0 // pred_check_branch
    %124 = sbr.rel (0) target = $region61
  $region60: #{_lambda_.2} parent=0 // pred_region
    _
  $region61: #{_lambda_.2} parent=0 // pred_fallthru
    _
  // Predicated region
  $region62: #{_lambda_.2} parent=0 // pred_check
    _
  $region63: #{_lambda_.2} parent=0 // pred_check_branch
    %126 = sbr.rel (0) target = $region65
  $region64: #{_lambda_.2} parent=0 // pred_region
    _
  $region65: #{_lambda_.2} parent=0 // pred_fallthru
    _
  // Predicated region
  $region66: #{_lambda_.2} parent=0 // pred_check
    _
  $region67: #{_lambda_.2} parent=0 // pred_check_branch
    %128 = sbr.rel (0) target = $region69
  $region68: #{_lambda_.2} parent=0 // pred_region
    _
  $region69: #{_lambda_.2} parent=0 // pred_fallthru
    _
  // Predicated region
  $region70: #{_lambda_.2} parent=0 // pred_check
    _
  $region71: #{_lambda_.2} parent=0 // pred_check_branch
    %130 = sbr.rel (0) target = $region73
  $region72: #{_lambda_.2} parent=0 // pred_region
    _
  $region73: #{_lambda_.2} parent=0 // pred_fallthru
    _
  // Predicated region
  $region74: #{_lambda_.2} parent=0 // pred_check
    _
  $region75: #{_lambda_.2} parent=0 // pred_check_branch
    %132 = sbr.rel (0) target = $region77
  $region76: #{_lambda_.2} parent=0 // pred_region
    _
  $region77: #{_lambda_.2} parent=0 // pred_fallthru
    _
  // Predicated region
  $region78: #{_lambda_.2} parent=0 // pred_check
    _
  $region79: #{_lambda_.2} parent=0 // pred_check_branch
    %134 = sbr.rel (0) target = $region81
  $region80: #{_lambda_.2} parent=0 // pred_region
    _
  $region81: #{_lambda_.2} parent=0 // pred_fallthru
    _
  // Predicated region
  $region82: #{_lambda_.2} parent=0 // pred_check
    _
  $region83: #{_lambda_.2} parent=0 // pred_check_branch
    %136 = sbr.rel (0) target = $region85
  $region84: #{_lambda_.2} parent=0 // pred_region
    _
  $region85: #{_lambda_.2} parent=0 // pred_fallthru
    _
  // Predicated region
  $region86: #{_lambda_.2} parent=0 // pred_check
    _
  $region87: #{_lambda_.2} parent=0 // pred_check_branch
    %138 = sbr.rel (0) target = $region89
  $region88: #{_lambda_.2} parent=0 // pred_region
    _
  $region89: #{_lambda_.2} parent=0 // pred_fallthru
    _
  // Predicated region
  $region90: #{_lambda_.2} parent=0 // pred_check
    _
  $region91: #{_lambda_.2} parent=0 // pred_check_branch
    %140 = sbr.rel (0) target = $region93
  $region92: #{_lambda_.2} parent=0 // pred_region
    _
  $region93: #{_lambda_.2} parent=0 // pred_fallthru
    _
  // Predicated region
  $region94: #{_lambda_.2} parent=0 // pred_check
    _
  $region95: #{_lambda_.2} parent=0 // pred_check_branch
    %142 = sbr.rel (0) target = $region97
  $region96: #{_lambda_.2} parent=0 // pred_region
    _
  $region97: #{_lambda_.2} parent=0 // pred_fallthru
    _
  // Predicated region
  $region98: #{_lambda_.2} parent=0 // pred_check
    _
  $region99: #{_lambda_.2} parent=0 // pred_check_branch
    %144 = sbr.rel (0) target = $region101
  $region100: #{_lambda_.2} parent=0 // pred_region
    _
  $region101: #{_lambda_.2} parent=0 // pred_fallthru
    _
  // Predicated region
  $region102: #{_lambda_.2} parent=0 // pred_check
    _
  $region103: #{_lambda_.2} parent=0 // pred_check_branch
    %146 = sbr.rel (0) target = $region105
  $region104: #{_lambda_.2} parent=0 // pred_region
    _
  $region105: #{_lambda_.2} parent=0 // pred_fallthru
    _
  // Predicated region
  $region106: #{_lambda_.2} parent=0 // pred_check
    _
  $region107: #{_lambda_.2} parent=0 // pred_check_branch
    %148 = sbr.rel (0) target = $region109
  $region108: #{_lambda_.2} parent=0 // pred_region
    _
  $region109: #{_lambda_.2} parent=0 // pred_fallthru
    _
  // Predicated region
  $region110: #{_lambda_.2} parent=0 // pred_check
    _
  $region111: #{_lambda_.2} parent=0 // pred_check_branch
    %150 = sbr.rel (0) target = $region113
  $region112: #{_lambda_.2} parent=0 // pred_region
    _
  $region113: #{_lambda_.2} parent=0 // pred_fallthru
    _
  // Predicated region
  $region114: #{_lambda_.2} parent=0 // pred_check
    _
  $region115: #{_lambda_.2} parent=0 // pred_check_branch
    %152 = sbr.rel (0) target = $region117
  $region116: #{_lambda_.2} parent=0 // pred_region
    _
  $region117: #{_lambda_.2} parent=0 // pred_fallthru
    _
  // Predicated region
  $region118: #{_lambda_.2} parent=0 // pred_check
    _
  $region119: #{_lambda_.2} parent=0 // pred_check_branch
    %154 = sbr.rel (0) target = $region121
  $region120: #{_lambda_.2} parent=0 // pred_region
    _
  $region121: #{_lambda_.2} parent=0 // pred_fallthru
    _
  // Predicated region
  $region122: #{_lambda_.2} parent=0 // pred_check
    _
  $region123: #{_lambda_.2} parent=0 // pred_check_branch
    %156 = sbr.rel (0) target = $region125
  $region124: #{_lambda_.2} parent=0 // pred_region
    _
  $region125: #{_lambda_.2} parent=0 // pred_fallthru
    _
  // Predicated region
  $region126: #{_lambda_.2} parent=0 // pred_check
    _
  $region127: #{_lambda_.2} parent=0 // pred_check_branch
    %158 = sbr.rel (0) target = $region129
  $region128: #{_lambda_.2} parent=0 // pred_region
    _
  $region129: #{_lambda_.2} parent=0 // pred_fallthru
    _
  // Predicated region
  $region130: #{_lambda_.2} parent=0 // pred_check
    _
  $region131: #{_lambda_.2} parent=0 // pred_check_branch
    %160 = sbr.rel (0) target = $region133
  $region132: #{_lambda_.2} parent=0 // pred_region
    _
  $region133: #{_lambda_.2} parent=0 // pred_fallthru
    _
  // Predicated region
  $region134: #{_lambda_.2} parent=0 // pred_check
    _
  $region135: #{_lambda_.2} parent=0 // pred_check_branch
    %162 = sbr.rel (0) target = $region137
  $region136: #{_lambda_.2} parent=0 // pred_region
    _
  $region137: #{_lambda_.2} parent=0 // pred_fallthru
    _
  // Predicated region
  $region138: #{_lambda_.2} parent=0 // pred_check
    _
  $region139: #{_lambda_.2} parent=0 // pred_check_branch
    %164 = sbr.rel (0) target = $region141
  $region140: #{_lambda_.2} parent=0 // pred_region
    _
  $region141: #{_lambda_.2} parent=0 // pred_fallthru
    _
  // Predicated region
  $region142: #{_lambda_.2} parent=0 // pred_check
    _
  $region143: #{_lambda_.2} parent=0 // pred_check_branch
    %166 = sbr.rel (0) target = $region145
  $region144: #{_lambda_.2} parent=0 // pred_region
    _
  $region145: #{_lambda_.2} parent=0 // pred_fallthru
    _
  // Predicated region
  $region146: #{_lambda_.2} parent=0 // pred_check
    _
  $region147: #{_lambda_.2} parent=0 // pred_check_branch
    %168 = sbr.rel (0) target = $region149
  $region148: #{_lambda_.2} parent=0 // pred_region
    _
  $region149: #{_lambda_.2} parent=0 // pred_fallthru
    _
  // Predicated region
  $region150: #{_lambda_.2} parent=0 // pred_check
    _
  $region151: #{_lambda_.2} parent=0 // pred_check_branch
    %170 = sbr.rel (0) target = $region153
  $region152: #{_lambda_.2} parent=0 // pred_region
    _
  $region153: #{_lambda_.2} parent=0 // pred_fallthru
    _
  // Predicated region
  $region154: #{_lambda_.2} parent=0 // pred_check
    _
  $region155: #{_lambda_.2} parent=0 // pred_check_branch
    %172 = sbr.rel (0) target = $region157
  $region156: #{_lambda_.2} parent=0 // pred_region
    _
  $region157: #{_lambda_.2} parent=0 // pred_fallthru
    _
  // Predicated region
  $region158: #{_lambda_.2} parent=0 // pred_check
    _
  $region159: #{_lambda_.2} parent=0 // pred_check_branch
    %174 = sbr.rel (0) target = $region161
  $region160: #{_lambda_.2} parent=0 // pred_region
    _
  $region161: #{_lambda_.2} parent=0 // pred_fallthru
    _
  // Predicated region
  $region162: #{_lambda_.2} parent=0 // pred_check
    _
  $region163: #{_lambda_.2} parent=0 // pred_check_branch
    %176 = sbr.rel (0) target = $region165
  $region164: #{_lambda_.2} parent=0 // pred_region
    _
  $region165: #{_lambda_.2} parent=0 // pred_fallthru
    _
  // Predicated region
  $region166: #{_lambda_.2} parent=0 // pred_check
    _
  $region167: #{_lambda_.2} parent=0 // pred_check_branch
    %178 = sbr.rel (0) target = $region169
  $region168: #{_lambda_.2} parent=0 // pred_region
    _
  $region169: #{_lambda_.2} parent=0 // pred_fallthru
    _
  %v180 = vld [vmem:[%s1] sm:$0xff]
  %v181 = vld [vmem:[%s1 + $0x8] sm:$0xff]
  %v182 = vld [vmem:[%s1 + $0x10] sm:$0xff]
  %v183 = vld [vmem:[%s1 + $0x18] sm:$0xff]
  %v184 = vld [vmem:[%s1 + $0x20] sm:$0xff]
  %v185 = vld [vmem:[%s1 + $0x28] sm:$0xff]
  %v186 = vld [vmem:[%s1 + $0x30] sm:$0xff]
  %v187 = vld [vmem:[%s1 + $0x38] sm:$0xff]
  %v188 = vld [vmem:[%s3] sm:$0xf]
  %v189 = vld [vmem:[%s3 + $0x4] sm:$0xf]
  %v190 = vld [vmem:[%s3 + $0x8] sm:$0xf]
  %v191 = vld [vmem:[%s3 + $0xc] sm:$0xf]
  %v192 = vld [vmem:[%s3 + $0x10] sm:$0xf]
  %v193 = vld [vmem:[%s3 + $0x14] sm:$0xf]
  %v194 = vld [vmem:[%s3 + $0x18] sm:$0xf]
  %v195 = vld [vmem:[%s3 + $0x1c] sm:$0xf]
  %v196 = vld [vmem:[%s3 + $0x20] sm:$0xf]
  %v197 = vld [vmem:[%s3 + $0x24] sm:$0xf]
  %v198 = vld [vmem:[%s3 + $0x28] sm:$0xf]
  %v199 = vld [vmem:[%s3 + $0x2c] sm:$0xf]
  %v200 = vld [vmem:[%s3 + $0x30] sm:$0xf]
  %v201 = vld [vmem:[%s3 + $0x34] sm:$0xf]
  %v202 = vld [vmem:[%s3 + $0x38] sm:$0xf]
  %v203 = vld [vmem:[%s3 + $0x3c] sm:$0xf]
  %v204 = vld [vmem:[%s3 + $0x40] sm:$0xf]
  %v205 = vld [vmem:[%s3 + $0x44] sm:$0xf]
  %v206 = vld [vmem:[%s3 + $0x48] sm:$0xf]
  %v207 = vld [vmem:[%s3 + $0x4c] sm:$0xf]
  %v208 = vld [vmem:[%s3 + $0x50] sm:$0xf]
  %v209 = vld [vmem:[%s3 + $0x54] sm:$0xf]
  %v210 = vld [vmem:[%s3 + $0x58] sm:$0xf]
  %v211 = vld [vmem:[%s3 + $0x5c] sm:$0xf]
  %v212 = vpack.c.bf16 %v182, %v180
  %v213 = vpack.c.bf16 %v183, %v181
  %v214 = vpack.c.bf16 %v186, %v184
  %v215 = vpack.c.bf16 %v187, %v185
  %v216 = vld [vmem:[%s5] sm:$0x1]
  %v218 = vperm.slane %v216, 0
  %v244 = vunpack.c.l.b16 %v188
  %v245 = vunpack.c.l.b16 %v189
  %v246 = vunpack.c.l.b16 %v190
  %v247 = vunpack.c.l.b16 %v191
  %v248 = vunpack.c.l.b16 %v192
  %v249 = vunpack.c.l.b16 %v193
  %v250 = vunpack.c.l.b16 %v194
  %v251 = vunpack.c.l.b16 %v195
  %v252 = vunpack.c.l.b16 %v196
  %v253 = vunpack.c.l.b16 %v197
  %v254 = vunpack.c.l.b16 %v198
  %v255 = vunpack.c.l.b16 %v199
  %v256 = vunpack.c.l.b16 %v200
  %v257 = vunpack.c.l.b16 %v201
  %v258 = vunpack.c.l.b16 %v202
  %v259 = vunpack.c.l.b16 %v203
  %v260 = vunpack.c.l.b16 %v204
  %v261 = vunpack.c.l.b16 %v205
  %v262 = vunpack.c.l.b16 %v206
  %v263 = vunpack.c.l.b16 %v207
  %v264 = vunpack.c.l.b16 %v208
  %v265 = vunpack.c.l.b16 %v209
  %v266 = vunpack.c.l.b16 %v210
  %v267 = vunpack.c.l.b16 %v211
  %v268 = vpack.c.b16 %v245, %v244
  %v269 = vpack.c.b16 %v247, %v246
  %v270 = vpack.c.b16 %v249, %v248
  %v271 = vpack.c.b16 %v251, %v250
  %v272 = vpack.c.b16 %v253, %v252
  %v273 = vpack.c.b16 %v255, %v254
  %v274 = vpack.c.b16 %v257, %v256
  %v275 = vpack.c.b16 %v259, %v258
  %v276 = vpack.c.b16 %v261, %v260
  %v277 = vpack.c.b16 %v263, %v262
  %v278 = vpack.c.b16 %v265, %v264
  %v279 = vpack.c.b16 %v267, %v266
  %vm292 = vcmask 523264
  %v294 = vsel %vm292, %v213, 0
  %v297 = vsel %vm292, %v215, 0
  %299 = vmatpush.bf16.msra.mxu0 %v275
  %300 = vmatpush.bf16.msra.mxu0 %v274
  %301 = vmatpush.bf16.msra.mxu0 %v273
  %302 = vmatpush.bf16.msra.mxu0 %v272
  %303 = vmatpush.bf16.msra.mxu0 %v271
  %304 = vmatpush.bf16.msra.mxu0 %v270
  %305 = vmatpush.bf16.msra.mxu0 %v269
  %306 = vmatpush.bf16.msra.mxu0 %v268
  %307 = vmatmul.bf16.gmra.mxu0 %v212
  %v308 = vpop.f32.mrf.mxu0
  %v309 = vadd.f32 %v218, %v308
  %v310 = vpop.f32.mrf.mxu0
  %v311 = vadd.f32 %v218, %v310
  %312 = vmatmul.bf16.gmra.mxu0 %v214
  %v313 = vpop.f32.mrf.mxu0
  %v314 = vadd.f32 %v218, %v313
  %v315 = vpop.f32.mrf.mxu0
  %v316 = vadd.f32 %v218, %v315
  %317 = vdwg.mxu0
  %318 = vmatpush.bf16.msra.mxu0 0
  %319 = vmatpush.bf16.msra.mxu0 0
  %320 = vmatpush.bf16.msra.mxu0 0
  %321 = vmatpush.bf16.msra.mxu0 0
  %322 = vmatpush.bf16.msra.mxu0 %v279
  %323 = vmatpush.bf16.msra.mxu0 %v278
  %324 = vmatpush.bf16.msra.mxu0 %v277
  %325 = vmatpush.bf16.msra.mxu0 %v276
  %326 = vmatmul.bf16.gmra.mxu0 %v294
  %v327 = vpop.f32.mrf.mxu0
  %v328 = vadd.f32 %v309, %v327
  %v329 = vpop.f32.mrf.mxu0
  %v330 = vadd.f32 %v311, %v329
  %331 = vmatmul.bf16.gmra.mxu0 %v297
  %v332 = vpop.f32.mrf.mxu0
  %v333 = vadd.f32 %v314, %v332
  %v334 = vpop.f32.mrf.mxu0
  %v335 = vadd.f32 %v316, %v334
  %336 = vdwg.mxu0
  %v337 = vld [vmem:[%s7] sm:$0xf]
  %v338 = vld [vmem:[%s7 + $0x4] sm:$0xf]
  %v339 = vld [vmem:[%s7 + $0x8] sm:$0xf]
  %v340 = vld [vmem:[%s7 + $0xc] sm:$0xf]
  %v341 = vld [vmem:[%s7 + $0x10] sm:$0xf]
  %v342 = vld [vmem:[%s7 + $0x14] sm:$0xf]
  %v343 = vld [vmem:[%s7 + $0x18] sm:$0xf]
  %v344 = vld [vmem:[%s7 + $0x1c] sm:$0xf]
  %v345 = vpack.c.bf16 %v330, %v328
  %v346 = vpack.c.bf16 %v335, %v333
  %v347 = vld [vmem:[%s9] sm:$0x1]
  %v349 = vperm.slane %v347, 0
  %v359 = vunpack.c.l.b16 %v337
  %v360 = vunpack.c.l.b16 %v338
  %v361 = vunpack.c.l.b16 %v339
  %v362 = vunpack.c.l.b16 %v340
  %v363 = vunpack.c.l.b16 %v341
  %v364 = vunpack.c.l.b16 %v342
  %v365 = vunpack.c.l.b16 %v343
  %v366 = vunpack.c.l.b16 %v344
  %v367 = vpack.c.b16 %v360, %v359
  %v368 = vpack.c.b16 %v362, %v361
  %v369 = vpack.c.b16 %v364, %v363
  %v370 = vpack.c.b16 %v366, %v365
  %v376 = vsel %vm292, %v345, 0
  %v379 = vsel %vm292, %v346, 0
  %381 = vmatpush.bf16.msra.mxu0 0
  %382 = vmatpush.bf16.msra.mxu0 0
  %383 = vmatpush.bf16.msra.mxu0 0
  %384 = vmatpush.bf16.msra.mxu0 0
  %385 = vmatpush.bf16.msra.mxu0 %v370
  %386 = vmatpush.bf16.msra.mxu0 %v369
  %387 = vmatpush.bf16.msra.mxu0 %v368
  %388 = vmatpush.bf16.msra.mxu0 %v367
  %389 = vmatmul.bf16.gmra.mxu0 %v376
  %v390 = vpop.f32.mrf.mxu0
  %v391 = vadd.f32 %v349, %v390
  %v392 = vpop.f32.mrf.mxu0
  %v393 = vadd.f32 %v349, %v392
  %394 = vmatmul.bf16.gmra.mxu0 %v379
  %v395 = vpop.f32.mrf.mxu0
  %v396 = vadd.f32 %v349, %v395
  %v397 = vpop.f32.mrf.mxu0
  %v398 = vadd.f32 %v349, %v397
  %399 = vdwg.mxu0
  %vm400 = vcmp.ge.f32.partialorder %v391, 0.0
  %vm401 = vcmp.ge.f32.partialorder %v393, 0.0
  %vm402 = vcmp.ge.f32.partialorder %v396, 0.0
  %vm403 = vcmp.ge.f32.partialorder %v398, 0.0
  %v404 = vmul.f32 %v391, 0.25
  %v405 = vmul.f32 %v393, 0.25
  %v406 = vmul.f32 %v396, 0.25
  %v407 = vmul.f32 %v398, 0.25
  %v408 = vsel %vm400, %v391, %v404
  %v409 = vsel %vm401, %v393, %v405
  %v410 = vsel %vm402, %v396, %v406
  %v411 = vsel %vm403, %v398, %v407
  %v412 = vld [vmem:[%s11] sm:$0xf]
  %v413 = vld [vmem:[%s11 + $0x4] sm:$0xf]
  %v414 = vld [vmem:[%s11 + $0x8] sm:$0xf]
  %v415 = vld [vmem:[%s11 + $0xc] sm:$0xf]
  %v416 = vld [vmem:[%s11 + $0x10] sm:$0xf]
  %v417 = vld [vmem:[%s11 + $0x14] sm:$0xf]
  %v418 = vld [vmem:[%s11 + $0x18] sm:$0xf]
  %v419 = vld [vmem:[%s11 + $0x1c] sm:$0xf]
  %v420 = vpack.c.bf16 %v409, %v408
  %v421 = vpack.c.bf16 %v411, %v410
  %v422 = vld [vmem:[%s13] sm:$0x1]
  %v424 = vperm.slane %v422, 0
  %v434 = vunpack.c.l.b16 %v412
  %v435 = vunpack.c.l.b16 %v413
  %v436 = vunpack.c.l.b16 %v414
  %v437 = vunpack.c.l.b16 %v415
  %v438 = vunpack.c.l.b16 %v416
  %v439 = vunpack.c.l.b16 %v417
  %v440 = vunpack.c.l.b16 %v418
  %v441 = vunpack.c.l.b16 %v419
  %v442 = vpack.c.b16 %v435, %v434
  %v443 = vpack.c.b16 %v437, %v436
  %v444 = vpack.c.b16 %v439, %v438
  %v445 = vpack.c.b16 %v441, %v440
  %v451 = vsel %vm292, %v420, 0
  %v454 = vsel %vm292, %v421, 0
  %456 = vmatpush.bf16.msra.mxu0 0
  %457 = vmatpush.bf16.msra.mxu0 0
  %458 = vmatpush.bf16.msra.mxu0 0
  %459 = vmatpush.bf16.msra.mxu0 0
  %460 = vmatpush.bf16.msra.mxu0 %v445
  %461 = vmatpush.bf16.msra.mxu0 %v444
  %462 = vmatpush.bf16.msra.mxu0 %v443
  %463 = vmatpush.bf16.msra.mxu0 %v442
  %464 = vmatmul.bf16.gmra.mxu0 %v451
  %v465 = vpop.f32.mrf.mxu0
  %v466 = vadd.f32 %v424, %v465
  %v467 = vpop.f32.mrf.mxu0
  %v468 = vadd.f32 %v424, %v467
  %469 = vmatmul.bf16.gmra.mxu0 %v454
  %v470 = vpop.f32.mrf.mxu0
  %v471 = vadd.f32 %v424, %v470
  %v472 = vpop.f32.mrf.mxu0
  %v473 = vadd.f32 %v424, %v472
  %474 = vdwg.mxu0
  %v475 = vld [vmem:[%s37] sm:$0xf]
  %v476 = vld [vmem:[%s37 + $0x4] sm:$0xf]
  %v477 = vld [vmem:[%s37 + $0x8] sm:$0xf]
  %v478 = vld [vmem:[%s37 + $0xc] sm:$0xf]
  %v479 = vld [vmem:[%s37 + $0x10] sm:$0xf]
  %v480 = vld [vmem:[%s37 + $0x14] sm:$0xf]
  %v481 = vld [vmem:[%s37 + $0x18] sm:$0xf]
  %v482 = vld [vmem:[%s37 + $0x1c] sm:$0xf]
  %v483 = vld [vmem:[%s39] sm:$0xf]
  %v484 = vld [vmem:[%s35] sm:$0x1]
  %v485 = vld [vmem:[%s15] sm:$0x1]
  %v487 = vperm.slane %v485, 0
  %vm489 = vcmask 261120
  %v491 = vsel %vm489, %v484, 0
  %493 = vmatpush.bf16.msra.mxu0 0
  %494 = vmatpush.bf16.msra.mxu0 0
  %495 = vmatpush.bf16.msra.mxu0 0
  %496 = vmatpush.bf16.msra.mxu0 0
  %497 = vmatpush.bf16.msra.mxu0 0
  %498 = vmatpush.bf16.msra.mxu0 0
  %499 = vmatpush.bf16.msra.mxu0 %v346
  %500 = vmatpush.bf16.msra.mxu0 %v345
  %501 = vmatmul.bf16.gmra.mxu0 %v491
  %v502 = vpop.f32.mrf.mxu0
  %v503 = vadd.f32 %v487, %v502
  %v504 = vpop.f32.mrf.mxu0
  %505 = vdwg.mxu0
  %v506 = vld [vmem:[%s19] sm:$0xf]
  %v507 = vld [vmem:[%s19 + $0x4] sm:$0xf]
  %v508 = vld [vmem:[%s19 + $0x8] sm:$0xf]
  %v509 = vld [vmem:[%s19 + $0xc] sm:$0xf]
  %v510 = vld [vmem:[%s19 + $0x10] sm:$0xf]
  %v511 = vld [vmem:[%s19 + $0x14] sm:$0xf]
  %v512 = vld [vmem:[%s19 + $0x18] sm:$0xf]
  %v513 = vld [vmem:[%s19 + $0x1c] sm:$0xf]
  %v514 = vpack.c.bf16 %v503, %v503
  %v515 = vld [vmem:[%s21] sm:$0x1]
  %v517 = vperm.slane %v515, 0
  %v527 = vunpack.c.l.b16 %v506
  %v528 = vunpack.c.l.b16 %v507
  %v529 = vunpack.c.l.b16 %v508
  %v530 = vunpack.c.l.b16 %v509
  %v531 = vunpack.c.l.b16 %v510
  %v532 = vunpack.c.l.b16 %v511
  %v533 = vunpack.c.l.b16 %v512
  %v534 = vunpack.c.l.b16 %v513
  %v535 = vpack.c.b16 %v528, %v527
  %v536 = vpack.c.b16 %v530, %v529
  %v537 = vpack.c.b16 %v532, %v531
  %v538 = vpack.c.b16 %v534, %v533
  %v544 = vsel %vm292, %v514, 0
  %546 = vmatpush.bf16.msra.mxu0 0
  %547 = vmatpush.bf16.msra.mxu0 0
  %548 = vmatpush.bf16.msra.mxu0 0
  %549 = vmatpush.bf16.msra.mxu0 0
  %550 = vmatpush.bf16.msra.mxu0 %v538
  %551 = vmatpush.bf16.msra.mxu0 %v537
  %552 = vmatpush.bf16.msra.mxu0 %v536
  %553 = vmatpush.bf16.msra.mxu0 %v535
  %554 = vmatmul.bf16.gmra.mxu0 %v544
  %v555 = vpop.f32.mrf.mxu0
  %v556 = vadd.f32 %v517, %v555
  %v557 = vpop.f32.mrf.mxu0
  %558 = vdwg.mxu0
  %v559 = vld [vmem:[%s23] sm:$0xf]
  %v560 = vld [vmem:[%s23 + $0x4] sm:$0xf]
  %v561 = vld [vmem:[%s23 + $0x8] sm:$0xf]
  %v562 = vld [vmem:[%s23 + $0xc] sm:$0xf]
  %v563 = vld [vmem:[%s23 + $0x10] sm:$0xf]
  %v564 = vld [vmem:[%s23 + $0x14] sm:$0xf]
  %v565 = vld [vmem:[%s23 + $0x18] sm:$0xf]
  %v566 = vld [vmem:[%s23 + $0x1c] sm:$0xf]
  %v567 = vld [vmem:[%s25] sm:$0x1]
  %v569 = vperm.slane %v567, 0
  %v579 = vunpack.c.l.b16 %v559
  %v580 = vunpack.c.l.b16 %v560
  %v581 = vunpack.c.l.b16 %v561
  %v582 = vunpack.c.l.b16 %v562
  %v583 = vunpack.c.l.b16 %v563
  %v584 = vunpack.c.l.b16 %v564
  %v585 = vunpack.c.l.b16 %v565
  %v586 = vunpack.c.l.b16 %v566
  %v587 = vpack.c.b16 %v580, %v579
  %v588 = vpack.c.b16 %v582, %v581
  %v589 = vpack.c.b16 %v584, %v583
  %v590 = vpack.c.b16 %v586, %v585
  %595 = vmatpush.bf16.msra.mxu0 0
  %596 = vmatpush.bf16.msra.mxu0 0
  %597 = vmatpush.bf16.msra.mxu0 0
  %598 = vmatpush.bf16.msra.mxu0 0
  %599 = vmatpush.bf16.msra.mxu0 %v590
  %600 = vmatpush.bf16.msra.mxu0 %v589
  %601 = vmatpush.bf16.msra.mxu0 %v588
  %602 = vmatpush.bf16.msra.mxu0 %v587
  %603 = vmatmul.bf16.gmra.mxu0 %v544
  %v604 = vpop.f32.mrf.mxu0
  %v605 = vadd.f32 %v569, %v604
  %v606 = vpop.f32.mrf.mxu0
  %607 = vdwg.mxu0
  %v608 = vld [vmem:[%s27] sm:$0xf]
  %v609 = vld [vmem:[%s27 + $0x4] sm:$0xf]
  %v610 = vld [vmem:[%s27 + $0x8] sm:$0xf]
  %v611 = vld [vmem:[%s27 + $0xc] sm:$0xf]
  %v612 = vld [vmem:[%s27 + $0x10] sm:$0xf]
  %v613 = vld [vmem:[%s27 + $0x14] sm:$0xf]
  %v614 = vld [vmem:[%s27 + $0x18] sm:$0xf]
  %v615 = vld [vmem:[%s27 + $0x1c] sm:$0xf]
  %v616 = vld [vmem:[%s29] sm:$0x1]
  %v618 = vperm.slane %v616, 0
  %v628 = vunpack.c.l.b16 %v608
  %v629 = vunpack.c.l.b16 %v609
  %v630 = vunpack.c.l.b16 %v610
  %v631 = vunpack.c.l.b16 %v611
  %v632 = vunpack.c.l.b16 %v612
  %v633 = vunpack.c.l.b16 %v613
  %v634 = vunpack.c.l.b16 %v614
  %v635 = vunpack.c.l.b16 %v615
  %v636 = vpack.c.b16 %v629, %v628
  %v637 = vpack.c.b16 %v631, %v630
  %v638 = vpack.c.b16 %v633, %v632
  %v639 = vpack.c.b16 %v635, %v634
  %644 = vmatpush.bf16.msra.mxu0 0
  %645 = vmatpush.bf16.msra.mxu0 0
  %646 = vmatpush.bf16.msra.mxu0 0
  %647 = vmatpush.bf16.msra.mxu0 0
  %648 = vmatpush.bf16.msra.mxu0 %v639
  %649 = vmatpush.bf16.msra.mxu0 %v638
  %650 = vmatpush.bf16.msra.mxu0 %v637
  %651 = vmatpush.bf16.msra.mxu0 %v636
  %652 = vmatmul.bf16.gmra.mxu0 %v544
  %v653 = vpop.f32.mrf.mxu0
  %v654 = vadd.f32 %v618, %v653
  %v655 = vpop.f32.mrf.mxu0
  %656 = vdwg.mxu0
  %657 = vmatpush.bf16.msra.mxu0 0
  %658 = vmatpush.bf16.msra.mxu0 0
  %659 = vmatpush.bf16.msra.mxu0 0
  %660 = vmatpush.bf16.msra.mxu0 0
  %661 = vmatpush.bf16.msra.mxu0 %v590
  %662 = vmatpush.bf16.msra.mxu0 %v589
  %663 = vmatpush.bf16.msra.mxu0 %v588
  %664 = vmatpush.bf16.msra.mxu0 %v587
  %665 = vmatmul.bf16.gmra.mxu0 %v376
  %v666 = vpop.f32.mrf.mxu0
  %v667 = vadd.f32 0.0, %v666
  %v668 = vpop.f32.mrf.mxu0
  %v669 = vadd.f32 0.0, %v668
  %670 = vmatmul.bf16.gmra.mxu0 %v379
  %v671 = vpop.f32.mrf.mxu0
  %v672 = vadd.f32 0.0, %v671
  %v673 = vpop.f32.mrf.mxu0
  %v674 = vadd.f32 0.0, %v673
  %675 = vdwg.mxu0
  %676 = vmatpush.bf16.msra.mxu0 0
  %677 = vmatpush.bf16.msra.mxu0 0
  %678 = vmatpush.bf16.msra.mxu0 0
  %679 = vmatpush.bf16.msra.mxu0 0
  %680 = vmatpush.bf16.msra.mxu0 %v639
  %681 = vmatpush.bf16.msra.mxu0 %v638
  %682 = vmatpush.bf16.msra.mxu0 %v637
  %683 = vmatpush.bf16.msra.mxu0 %v636
  %684 = vmatmul.bf16.gmra.mxu0 %v376
  %v685 = vpop.f32.mrf.mxu0
  %v686 = vadd.f32 0.0, %v685
  %v687 = vpop.f32.mrf.mxu0
  %v688 = vadd.f32 0.0, %v687
  %689 = vmatmul.bf16.gmra.mxu0 %v379
  %v690 = vpop.f32.mrf.mxu0
  %v691 = vadd.f32 0.0, %v690
  %v692 = vpop.f32.mrf.mxu0
  %v693 = vadd.f32 0.0, %v692
  %694 = vdwg.mxu0
  %v695 = vld [vmem:[%s17] sm:$0xff]
  %v696 = vld [vmem:[%s17 + $0x8] sm:$0xff]
  %v697 = vpack.c.bf16 %v696, %v695
  %v699 = vsel %vm292, %v697, 0
  %701 = vmatpush.bf16.msra.mxu0 0
  %702 = vmatpush.bf16.msra.mxu0 0
  %703 = vmatpush.bf16.msra.mxu0 0
  %704 = vmatpush.bf16.msra.mxu0 0
  %705 = vmatpush.bf16.msra.mxu0 %v590
  %706 = vmatpush.bf16.msra.mxu0 %v589
  %707 = vmatpush.bf16.msra.mxu0 %v588
  %708 = vmatpush.bf16.msra.mxu0 %v587
  %709 = vmatmul.bf16.gmra.mxu0 %v699
  %v710 = vpop.f32.mrf.mxu0
  %v711 = vadd.f32 %v569, %v710
  %v712 = vpop.f32.mrf.mxu0
  %v713 = vadd.f32 %v569, %v712
  %714 = vdwg.mxu0
  %715 = vmatpush.bf16.msra.mxu0 0
  %716 = vmatpush.bf16.msra.mxu0 0
  %717 = vmatpush.bf16.msra.mxu0 0
  %718 = vmatpush.bf16.msra.mxu0 0
  %719 = vmatpush.bf16.msra.mxu0 %v639
  %720 = vmatpush.bf16.msra.mxu0 %v638
  %721 = vmatpush.bf16.msra.mxu0 %v637
  %722 = vmatpush.bf16.msra.mxu0 %v636
  %723 = vmatmul.bf16.gmra.mxu0 %v699
  %v724 = vpop.f32.mrf.mxu0
  %v725 = vadd.f32 %v618, %v724
  %v726 = vpop.f32.mrf.mxu0
  %v727 = vadd.f32 %v618, %v726
  %728 = vdwg.mxu0
  %v729 = vmul.f32 %v605, %v556
  %v730 = vpack.c.bf16 %v729, %v729
  %v739 = vunpack.c.l.b16 %v475
  %v740 = vunpack.c.l.b16 %v476
  %v741 = vunpack.c.l.b16 %v477
  %v742 = vunpack.c.l.b16 %v478
  %v743 = vunpack.c.l.b16 %v479
  %v744 = vunpack.c.l.b16 %v480
  %v745 = vunpack.c.l.b16 %v481
  %v746 = vunpack.c.l.b16 %v482
  %v747 = vpack.c.b16 %v740, %v739
  %v748 = vpack.c.b16 %v742, %v741
  %v749 = vpack.c.b16 %v744, %v743
  %v750 = vpack.c.b16 %v746, %v745
  %v756 = vsel %vm292, %v730, 0
  %758 = vmatpush.bf16.msra.mxu0 0
  %759 = vmatpush.bf16.msra.mxu0 0
  %760 = vmatpush.bf16.msra.mxu0 0
  %761 = vmatpush.bf16.msra.mxu0 0
  %762 = vmatpush.bf16.msra.mxu0 %v750
  %763 = vmatpush.bf16.msra.mxu0 %v749
  %764 = vmatpush.bf16.msra.mxu0 %v748
  %765 = vmatpush.bf16.msra.mxu0 %v747
  %766 = vmatmul.bf16.gmra.mxu0 %v756
  %v767 = vpop.f32.mrf.mxu0
  %v768 = vadd.f32 0.0, %v767
  %v769 = vpop.f32.mrf.mxu0
  %770 = vdwg.mxu0
  %v771 = vmul.f32 %v768, 0.35355338
  %v772 = vadd.f32 %v667, %v711
  %v773 = vadd.f32 %v669, %v713
  %v774 = vadd.f32 %v686, %v725
  %v775 = vadd.f32 %v688, %v727
  %v776 = vperm.slane %v556, 0
  %v777 = vmul.f32 %v772, %v776
  %v778 = vmul.f32 %v773, %v776
  %v779 = vpack.c.bf16 %v778, %v777
  %v781 = vsel %vm292, %v779, 0
  %783 = vmatpush.bf16.msra.mxu0 0
  %784 = vmatpush.bf16.msra.mxu0 0
  %785 = vmatpush.bf16.msra.mxu0 0
  %786 = vmatpush.bf16.msra.mxu0 0
  %787 = vmatpush.bf16.msra.mxu0 %v750
  %788 = vmatpush.bf16.msra.mxu0 %v749
  %789 = vmatpush.bf16.msra.mxu0 %v748
  %790 = vmatpush.bf16.msra.mxu0 %v747
  %791 = vmatmul.bf16.gmra.mxu0 %v781
  %v792 = vpop.f32.mrf.mxu0
  %v793 = vadd.f32 0.0, %v792
  %v794 = vpop.f32.mrf.mxu0
  %v795 = vadd.f32 0.0, %v794
  %796 = vdwg.mxu0
  %v797 = vmul.f32 %v793, 0.35355338
  %v798 = vmul.f32 %v795, 0.35355338
  %vm799 = vcmask 64512
  %v800 = vsel %vm799, %v797, -inf
  %v801 = vsel %vm799, %v798, -inf
  %v802 = vmax.f32 %v800, %v801
  %v803 = vrot.slane %v802, 4
  %v804 = vmax.f32 %v802, %v803
  %v805 = vrot.slane %v804, 2
  %v806 = vmax.f32 %v804, %v805
  %v807 = vrot.slane %v806, 1
  %v808 = vmax.f32 %v806, %v807
  %v809 = vmax.f32 %v808, %v771
  %v810 = vperm.slane %v809, 0
  %v811 = vsub.f32 %v797, %v810
  %v812 = vsub.f32 %v798, %v810
  %v813 = vmul.f32 %v811, 1.442695
  %v814 = vpow.pop %v813
  %v815 = vmul.f32 %v812, 1.442695
  %v816 = vpow.pop %v815
  %v817 = vsub.f32 %v771, %v809
  %v818 = vmul.f32 %v817, 1.442695
  %v819 = vpow.pop %v818
  %v820 = vsel %vm799, %v814, 0.0
  %v821 = vsel %vm799, %v816, 0.0
  %v822 = vadd.f32 %v820, %v821
  %v823 = vrot.slane %v822, 4
  %v824 = vadd.f32 %v822, %v823
  %v825 = vrot.slane %v824, 2
  %v826 = vadd.f32 %v824, %v825
  %v827 = vrot.slane %v826, 1
  %v828 = vadd.f32 %v826, %v827
  %v829 = vadd.f32 %v819, %v828
  %v830 = vrcp.pop %v829
  %v831 = vperm.slane %v830, 0
  %v832 = vmul.f32 %v814, %v831
  %v833 = vmul.f32 %v816, %v831
  %v834 = vpack.c.bf16 %v833, %v832
  %v836 = vsel %vm799, %v834, 0
  %vm838 = vcmask 1043456
  %v840 = vsel %vm838, %v483, 0
  %842 = vmatpush.bf16.msra.mxu0 0
  %843 = vmatpush.bf16.msra.mxu0 0
  %844 = vmatpush.bf16.msra.mxu0 0
  %845 = vmatpush.bf16.msra.mxu0 0
  %846 = vmatpush.bf16.msra.mxu0 0
  %847 = vmatpush.bf16.msra.mxu0 0
  %848 = vmatpush.bf16.msra.mxu0 0
  %849 = vmatpush.bf16.msra.mxu0 %v840
  %850 = vmatmul.bf16.gmra.mxu0 %v836
  %v851 = vpop.f32.mrf.mxu0
  %v852 = vadd.f32 0.0, %v851
  %v853 = vpop.f32.mrf.mxu0
  %v854 = vadd.f32 0.0, %v853
  %855 = vdwg.mxu0
  %v856 = vmul.f32 %v819, %v830
  %v857 = vpack.c.bf16 %v856, %v856
  %v859 = vsel %vm799, %v857, 0
  %861 = vmatpush.bf16.msra.mxu0 0
  %862 = vmatpush.bf16.msra.mxu0 0
  %863 = vmatpush.bf16.msra.mxu0 0
  %864 = vmatpush.bf16.msra.mxu0 0
  %865 = vmatpush.bf16.msra.mxu0 0
  %866 = vmatpush.bf16.msra.mxu0 0
  %867 = vmatpush.bf16.msra.mxu0 0
  %868 = vmatpush.bf16.msra.mxu0 %v840
  %869 = vmatmul.bf16.gmra.mxu0 %v859
  %v870 = vpop.f32.mrf.mxu0
  %v871 = vadd.f32 0.0, %v870
  %v872 = vpop.f32.mrf.mxu0
  %873 = vdwg.mxu0
  %v874 = vmul.f32 %v871, %v654
  %v875 = vmul.f32 %v852, %v774
  %v876 = vmul.f32 %v854, %v775
  %v877 = vsel %vm292, %v875, 0.0
  %v878 = vsel %vm292, %v876, 0.0
  %v879 = vadd.f32 %v877, %v878
  %v880 = vrot.slane %v879, 4
  %v881 = vadd.f32 %v879, %v880
  %v882 = vrot.slane %v881, 2
  %v883 = vadd.f32 %v881, %v882
  %v884 = vrot.slane %v883, 1
  %v885 = vadd.f32 %v883, %v884
  %v886 = vadd.f32 %v874, %v885
  %v887 = vadd.f32 %v672, %v711
  %v888 = vadd.f32 %v674, %v713
  %v889 = vadd.f32 %v691, %v725
  %v890 = vadd.f32 %v693, %v727
  %v891 = vperm.slane %v556, 1
  %v892 = vmul.f32 %v887, %v891
  %v893 = vmul.f32 %v888, %v891
  %v894 = vpack.c.bf16 %v893, %v892
  %v896 = vsel %vm292, %v894, 0
  %898 = vmatpush.bf16.msra.mxu0 0
  %899 = vmatpush.bf16.msra.mxu0 0
  %900 = vmatpush.bf16.msra.mxu0 0
  %901 = vmatpush.bf16.msra.mxu0 0
  %902 = vmatpush.bf16.msra.mxu0 %v750
  %903 = vmatpush.bf16.msra.mxu0 %v749
  %904 = vmatpush.bf16.msra.mxu0 %v748
  %905 = vmatpush.bf16.msra.mxu0 %v747
  %906 = vmatmul.bf16.gmra.mxu0 %v896
  %v907 = vpop.f32.mrf.mxu0
  %v908 = vadd.f32 0.0, %v907
  %v909 = vpop.f32.mrf.mxu0
  %v910 = vadd.f32 0.0, %v909
  %911 = vdwg.mxu0
  %v912 = vmul.f32 %v908, 0.35355338
  %v913 = vmul.f32 %v910, 0.35355338
  %v914 = vsel %vm799, %v912, -inf
  %v915 = vsel %vm799, %v913, -inf
  %v916 = vmax.f32 %v914, %v915
  %v917 = vrot.slane %v916, 4
  %v918 = vmax.f32 %v916, %v917
  %v919 = vrot.slane %v918, 2
  %v920 = vmax.f32 %v918, %v919
  %v921 = vrot.slane %v920, 1
  %v922 = vmax.f32 %v920, %v921
  %v923 = vmax.f32 %v922, %v771
  %v924 = vperm.slane %v923, 1
  %v925 = vsub.f32 %v912, %v924
  %v926 = vsub.f32 %v913, %v924
  %v927 = vmul.f32 %v925, 1.442695
  %v928 = vpow.pop %v927
  %v929 = vmul.f32 %v926, 1.442695
  %v930 = vpow.pop %v929
  %v931 = vsub.f32 %v771, %v923
  %v932 = vmul.f32 %v931, 1.442695
  %v933 = vpow.pop %v932
  %v934 = vsel %vm799, %v928, 0.0
  %v935 = vsel %vm799, %v930, 0.0
  %v936 = vadd.f32 %v934, %v935
  %v937 = vrot.slane %v936, 4
  %v938 = vadd.f32 %v936, %v937
  %v939 = vrot.slane %v938, 2
  %v940 = vadd.f32 %v938, %v939
  %v941 = vrot.slane %v940, 1
  %v942 = vadd.f32 %v940, %v941
  %v943 = vadd.f32 %v933, %v942
  %v944 = vrcp.pop %v943
  %v945 = vperm.slane %v944, 1
  %v946 = vmul.f32 %v928, %v945
  %v947 = vmul.f32 %v930, %v945
  %v948 = vpack.c.bf16 %v947, %v946
  %v950 = vsel %vm799, %v948, 0
  %952 = vmatpush.bf16.msra.mxu0 0
  %953 = vmatpush.bf16.msra.mxu0 0
  %954 = vmatpush.bf16.msra.mxu0 0
  %955 = vmatpush.bf16.msra.mxu0 0
  %956 = vmatpush.bf16.msra.mxu0 0
  %957 = vmatpush.bf16.msra.mxu0 0
  %958 = vmatpush.bf16.msra.mxu0 0
  %959 = vmatpush.bf16.msra.mxu0 %v840
  %960 = vmatmul.bf16.gmra.mxu0 %v950
  %v961 = vpop.f32.mrf.mxu0
  %v962 = vadd.f32 0.0, %v961
  %v963 = vpop.f32.mrf.mxu0
  %v964 = vadd.f32 0.0, %v963
  %965 = vdwg.mxu0
  %v966 = vmul.f32 %v933, %v944
  %v967 = vpack.c.bf16 %v966, %v966
  %v969 = vshrl.u32 %v967, 16
  %v972 = vsel %vm799, %v969, 0
  %974 = vmatpush.bf16.msra.mxu0 0
  %975 = vmatpush.bf16.msra.mxu0 0
  %976 = vmatpush.bf16.msra.mxu0 0
  %977 = vmatpush.bf16.msra.mxu0 0
  %978 = vmatpush.bf16.msra.mxu0 0
  %979 = vmatpush.bf16.msra.mxu0 0
  %980 = vmatpush.bf16.msra.mxu0 0
  %981 = vmatpush.bf16.msra.mxu0 %v840
  %982 = vmatmul.bf16.gmra.mxu0 %v972
  %v983 = vpop.f32.mrf.mxu0
  %v984 = vadd.f32 0.0, %v983
  %v985 = vpop.f32.mrf.mxu0
  %986 = vdwg.mxu0
  %v988 = vrot.slane %v654, 1
  %v990 = vmul.f32 %v984, %v988
  %v991 = vmul.f32 %v962, %v889
  %v992 = vmul.f32 %v964, %v890
  %v993 = vsel %vm292, %v991, 0.0
  %v994 = vsel %vm292, %v992, 0.0
  %v995 = vadd.f32 %v993, %v994
  %v996 = vrot.slane %v995, 4
  %v997 = vadd.f32 %v995, %v996
  %v998 = vrot.slane %v997, 2
  %v999 = vadd.f32 %v997, %v998
  %v1000 = vrot.slane %v999, 1
  %v1001 = vadd.f32 %v999, %v1000
  %v1002 = vadd.f32 %v990, %v1001
  %v1004 = vrot.slane %v1002, 7
  %vm1006 = vcmask 1040384
  %v1007 = vsel %vm1006, %v886, %v1004
  %v1008 = vld [vmem:[%s31] sm:$0xf]
  %v1009 = vld [vmem:[%s31 + $0x4] sm:$0xf]
  %v1010 = vld [vmem:[%s31 + $0x8] sm:$0xf]
  %v1011 = vld [vmem:[%s31 + $0xc] sm:$0xf]
  %v1012 = vld [vmem:[%s31 + $0x10] sm:$0xf]
  %v1013 = vld [vmem:[%s31 + $0x14] sm:$0xf]
  %v1014 = vld [vmem:[%s31 + $0x18] sm:$0xf]
  %v1015 = vld [vmem:[%s31 + $0x1c] sm:$0xf]
  %v1016 = vpack.c.bf16 %v1007, %v1007
  %v1017 = vld [vmem:[%s33] sm:$0x1]
  %v1019 = vperm.slane %v1017, 0
  %v1029 = vunpack.c.l.b16 %v1008
  %v1030 = vunpack.c.l.b16 %v1009
  %v1031 = vunpack.c.l.b16 %v1010
  %v1032 = vunpack.c.l.b16 %v1011
  %v1033 = vunpack.c.l.b16 %v1012
  %v1034 = vunpack.c.l.b16 %v1013
  %v1035 = vunpack.c.l.b16 %v1014
  %v1036 = vunpack.c.l.b16 %v1015
  %v1037 = vpack.c.b16 %v1030, %v1029
  %v1038 = vpack.c.b16 %v1032, %v1031
  %v1039 = vpack.c.b16 %v1034, %v1033
  %v1040 = vpack.c.b16 %v1036, %v1035
  %v1046 = vsel %vm292, %v1016, 0
  %1048 = vmatpush.bf16.msra.mxu0 0
  %1049 = vmatpush.bf16.msra.mxu0 0
  %1050 = vmatpush.bf16.msra.mxu0 0
  %1051 = vmatpush.bf16.msra.mxu0 0
  %1052 = vmatpush.bf16.msra.mxu0 %v1040
  %1053 = vmatpush.bf16.msra.mxu0 %v1039
  %1054 = vmatpush.bf16.msra.mxu0 %v1038
  %1055 = vmatpush.bf16.msra.mxu0 %v1037
  %1056 = vmatmul.bf16.gmra.mxu0 %v1046
  %v1057 = vpop.f32.mrf.mxu0
  %v1058 = vadd.f32 %v1019, %v1057
  %v1059 = vpop.f32.mrf.mxu0
  %1060 = vdwg.mxu0
  %vm1061 = vcmask 254976
  %1062 = vst.msk [vmem:[%s85] sm:$0x3] %vm1061, %v1058
  %v1063 = vld [vmem:[%s41] sm:$0xff]
  %v1064 = vld [vmem:[%s41 + $0x8] sm:$0xff]
  %v1065 = vld [vmem:[%s41 + $0x10] sm:$0xff]
  %v1066 = vld [vmem:[%s41 + $0x18] sm:$0xff]
  %v1067 = vld [vmem:[%s41 + $0x20] sm:$0xff]
  %v1068 = vld [vmem:[%s41 + $0x28] sm:$0xff]
  %v1069 = vld [vmem:[%s41 + $0x30] sm:$0xf]
  %v1070 = vld [vmem:[%s41 + $0x38] sm:$0xf]
  %v1071 = vld [vmem:[%s41 + $0x40] sm:$0xf]
  %v1072 = vld [vmem:[%s41 + $0x48] sm:$0xf]
  %v1073 = vld [vmem:[%s41 + $0x50] sm:$0xf]
  %v1074 = vld [vmem:[%s41 + $0x58] sm:$0xf]
  %v1075 = vld [vmem:[%s43] sm:$0xf]
  %v1076 = vld [vmem:[%s43 + $0x4] sm:$0xf]
  %v1077 = vld [vmem:[%s43 + $0x8] sm:$0xf]
  %v1078 = vld [vmem:[%s43 + $0xc] sm:$0xf]
  %v1079 = vld [vmem:[%s43 + $0x10] sm:$0xf]
  %v1080 = vld [vmem:[%s43 + $0x14] sm:$0xf]
  %v1081 = vld [vmem:[%s43 + $0x18] sm:$0xf]
  %v1082 = vld [vmem:[%s43 + $0x1c] sm:$0xf]
  %v1083 = vld [vmem:[%s43 + $0x20] sm:$0xf]
  %v1084 = vld [vmem:[%s43 + $0x24] sm:$0xf]
  %v1085 = vld [vmem:[%s43 + $0x28] sm:$0xf]
  %v1086 = vld [vmem:[%s43 + $0x2c] sm:$0xf]
  %v1087 = vld [vmem:[%s43 + $0x30] sm:$0xf]
  %v1088 = vld [vmem:[%s43 + $0x34] sm:$0xf]
  %v1089 = vld [vmem:[%s43 + $0x38] sm:$0xf]
  %v1090 = vld [vmem:[%s43 + $0x3c] sm:$0xf]
  %v1091 = vld [vmem:[%s43 + $0x40] sm:$0xf]
  %v1092 = vld [vmem:[%s43 + $0x44] sm:$0xf]
  %v1093 = vld [vmem:[%s43 + $0x48] sm:$0xf]
  %v1094 = vld [vmem:[%s43 + $0x4c] sm:$0xf]
  %v1095 = vld [vmem:[%s43 + $0x50] sm:$0xf]
  %v1096 = vld [vmem:[%s43 + $0x54] sm:$0xf]
  %v1097 = vld [vmem:[%s43 + $0x58] sm:$0xf]
  %v1098 = vld [vmem:[%s43 + $0x5c] sm:$0xf]
  %v1099 = vld [vmem:[%s43 + $0x60] sm:$0xf]
  %v1100 = vld [vmem:[%s43 + $0x64] sm:$0xf]
  %v1101 = vld [vmem:[%s43 + $0x68] sm:$0xf]
  %v1102 = vld [vmem:[%s43 + $0x6c] sm:$0xf]
  %v1103 = vld [vmem:[%s43 + $0x70] sm:$0xf]
  %v1104 = vld [vmem:[%s43 + $0x74] sm:$0xf]
  %v1105 = vld [vmem:[%s43 + $0x78] sm:$0xf]
  %v1106 = vld [vmem:[%s43 + $0x7c] sm:$0xf]
  %v1107 = vld [vmem:[%s43 + $0x80] sm:$0xf]
  %v1108 = vld [vmem:[%s43 + $0x84] sm:$0xf]
  %v1109 = vld [vmem:[%s43 + $0x88] sm:$0xf]
  %v1110 = vld [vmem:[%s43 + $0x8c] sm:$0xf]
  %v1111 = vld [vmem:[%s43 + $0x90] sm:$0xf]
  %v1112 = vld [vmem:[%s43 + $0x94] sm:$0xf]
  %v1113 = vld [vmem:[%s43 + $0x98] sm:$0xf]
  %v1114 = vld [vmem:[%s43 + $0x9c] sm:$0xf]
  %v1115 = vld [vmem:[%s43 + $0xa0] sm:$0xf]
  %v1116 = vld [vmem:[%s43 + $0xa4] sm:$0xf]
  %v1117 = vld [vmem:[%s43 + $0xa8] sm:$0xf]
  %v1118 = vld [vmem:[%s43 + $0xac] sm:$0xf]
  %v1119 = vld [vmem:[%s43 + $0xb0] sm:$0xf]
  %v1120 = vld [vmem:[%s43 + $0xb4] sm:$0xf]
  %v1121 = vld [vmem:[%s43 + $0xb8] sm:$0xf]
  %v1122 = vld [vmem:[%s43 + $0xbc] sm:$0xf]
  %v1123 = vld [vmem:[%s43 + $0xc0] sm:$0xf]
  %v1124 = vld [vmem:[%s43 + $0xc4] sm:$0xf]
  %v1125 = vld [vmem:[%s43 + $0xc8] sm:$0xf]
  %v1126 = vld [vmem:[%s43 + $0xcc] sm:$0xf]
  %v1127 = vld [vmem:[%s43 + $0xd0] sm:$0xf]
  %v1128 = vld [vmem:[%s43 + $0xd4] sm:$0xf]
  %v1129 = vld [vmem:[%s43 + $0xd8] sm:$0xf]
  %v1130 = vld [vmem:[%s43 + $0xdc] sm:$0xf]
  %v1131 = vld [vmem:[%s43 + $0xe0] sm:$0xf]
  %v1132 = vld [vmem:[%s43 + $0xe4] sm:$0xf]
  %v1133 = vld [vmem:[%s43 + $0xe8] sm:$0xf]
  %v1134 = vld [vmem:[%s43 + $0xec] sm:$0xf]
  %v1135 = vld [vmem:[%s43 + $0xf0] sm:$0xf]
  %v1136 = vld [vmem:[%s43 + $0xf4] sm:$0xf]
  %v1137 = vld [vmem:[%s43 + $0xf8] sm:$0xf]
  %v1138 = vld [vmem:[%s43 + $0xfc] sm:$0xf]
  %v1139 = vld [vmem:[%s43 + $0x100] sm:$0xf]
  %v1140 = vld [vmem:[%s43 + $0x104] sm:$0xf]
  %v1141 = vld [vmem:[%s43 + $0x108] sm:$0xf]
  %v1142 = vld [vmem:[%s43 + $0x10c] sm:$0xf]
  %v1143 = vld [vmem:[%s43 + $0x110] sm:$0xf]
  %v1144 = vld [vmem:[%s43 + $0x114] sm:$0xf]
  %v1145 = vld [vmem:[%s43 + $0x118] sm:$0xf]
  %v1146 = vld [vmem:[%s43 + $0x11c] sm:$0xf]
  %v1147 = vld [vmem:[%s43 + $0x120] sm:$0xf]
  %v1148 = vld [vmem:[%s43 + $0x124] sm:$0xf]
  %v1149 = vld [vmem:[%s43 + $0x128] sm:$0xf]
  %v1150 = vld [vmem:[%s43 + $0x12c] sm:$0xf]
  %v1151 = vld [vmem:[%s43 + $0x130] sm:$0xf]
  %v1152 = vld [vmem:[%s43 + $0x134] sm:$0xf]
  %v1153 = vld [vmem:[%s43 + $0x138] sm:$0xf]
  %v1154 = vld [vmem:[%s43 + $0x13c] sm:$0xf]
  %v1155 = vld [vmem:[%s43 + $0x140] sm:$0xf]
  %v1156 = vld [vmem:[%s43 + $0x144] sm:$0xf]
  %v1157 = vld [vmem:[%s43 + $0x148] sm:$0xf]
  %v1158 = vld [vmem:[%s43 + $0x14c] sm:$0xf]
  %v1159 = vld [vmem:[%s43 + $0x150] sm:$0xf]
  %v1160 = vld [vmem:[%s43 + $0x154] sm:$0xf]
  %v1161 = vld [vmem:[%s43 + $0x158] sm:$0xf]
  %v1162 = vld [vmem:[%s43 + $0x15c] sm:$0xf]
  %v1163 = vld [vmem:[%s43 + $0x160] sm:$0xf]
  %v1164 = vld [vmem:[%s43 + $0x164] sm:$0xf]
  %v1165 = vld [vmem:[%s43 + $0x168] sm:$0xf]
  %v1166 = vld [vmem:[%s43 + $0x16c] sm:$0xf]
  %v1167 = vld [vmem:[%s43 + $0x170] sm:$0xf]
  %v1168 = vld [vmem:[%s43 + $0x174] sm:$0xf]
  %v1169 = vld [vmem:[%s43 + $0x178] sm:$0xf]
  %v1170 = vld [vmem:[%s43 + $0x17c] sm:$0xf]
  %v1171 = vpack.c.bf16 %v1069, %v1063
  %v1172 = vpack.c.bf16 %v1070, %v1064
  %v1173 = vpack.c.bf16 %v1071, %v1065
  %v1174 = vpack.c.bf16 %v1072, %v1066
  %v1175 = vpack.c.bf16 %v1073, %v1067
  %v1176 = vpack.c.bf16 %v1074, %v1068
  %v1177 = vld [vmem:[%s45] sm:$0x1]
  %v1179 = vperm.slane %v1177, 0
  %v1277 = vunpack.c.l.b16 %v1075
  %v1278 = vunpack.c.l.b16 %v1076
  %v1279 = vunpack.c.l.b16 %v1077
  %v1280 = vunpack.c.l.b16 %v1078
  %v1281 = vunpack.c.l.b16 %v1079
  %v1282 = vunpack.c.l.b16 %v1080
  %v1283 = vunpack.c.l.b16 %v1081
  %v1284 = vunpack.c.l.b16 %v1082
  %v1285 = vunpack.c.l.b16 %v1083
  %v1286 = vunpack.c.l.b16 %v1084
  %v1287 = vunpack.c.l.b16 %v1085
  %v1288 = vunpack.c.l.b16 %v1086
  %v1289 = vunpack.c.l.b16 %v1087
  %v1290 = vunpack.c.l.b16 %v1088
  %v1291 = vunpack.c.l.b16 %v1089
  %v1292 = vunpack.c.l.b16 %v1090
  %v1293 = vunpack.c.l.b16 %v1091
  %v1294 = vunpack.c.l.b16 %v1092
  %v1295 = vunpack.c.l.b16 %v1093
  %v1296 = vunpack.c.l.b16 %v1094
  %v1297 = vunpack.c.l.b16 %v1095
  %v1298 = vunpack.c.l.b16 %v1096
  %v1299 = vunpack.c.l.b16 %v1097
  %v1300 = vunpack.c.l.b16 %v1098
  %v1301 = vunpack.c.l.b16 %v1099
  %v1302 = vunpack.c.l.b16 %v1100
  %v1303 = vunpack.c.l.b16 %v1101
  %v1304 = vunpack.c.l.b16 %v1102
  %v1305 = vunpack.c.l.b16 %v1103
  %v1306 = vunpack.c.l.b16 %v1104
  %v1307 = vunpack.c.l.b16 %v1105
  %v1308 = vunpack.c.l.b16 %v1106
  %v1309 = vunpack.c.l.b16 %v1107
  %v1310 = vunpack.c.l.b16 %v1108
  %v1311 = vunpack.c.l.b16 %v1109
  %v1312 = vunpack.c.l.b16 %v1110
  %v1313 = vunpack.c.l.b16 %v1111
  %v1314 = vunpack.c.l.b16 %v1112
  %v1315 = vunpack.c.l.b16 %v1113
  %v1316 = vunpack.c.l.b16 %v1114
  %v1317 = vunpack.c.l.b16 %v1115
  %v1318 = vunpack.c.l.b16 %v1116
  %v1319 = vunpack.c.l.b16 %v1117
  %v1320 = vunpack.c.l.b16 %v1118
  %v1321 = vunpack.c.l.b16 %v1119
  %v1322 = vunpack.c.l.b16 %v1120
  %v1323 = vunpack.c.l.b16 %v1121
  %v1324 = vunpack.c.l.b16 %v1122
  %v1325 = vunpack.c.l.b16 %v1123
  %v1326 = vunpack.c.l.b16 %v1124
  %v1327 = vunpack.c.l.b16 %v1125
  %v1328 = vunpack.c.l.b16 %v1126
  %v1329 = vunpack.c.l.b16 %v1127
  %v1330 = vunpack.c.l.b16 %v1128
  %v1331 = vunpack.c.l.b16 %v1129
  %v1332 = vunpack.c.l.b16 %v1130
  %v1333 = vunpack.c.l.b16 %v1131
  %v1334 = vunpack.c.l.b16 %v1132
  %v1335 = vunpack.c.l.b16 %v1133
  %v1336 = vunpack.c.l.b16 %v1134
  %v1337 = vunpack.c.l.b16 %v1135
  %v1338 = vunpack.c.l.b16 %v1136
  %v1339 = vunpack.c.l.b16 %v1137
  %v1340 = vunpack.c.l.b16 %v1138
  %v1341 = vunpack.c.l.b16 %v1139
  %v1342 = vunpack.c.l.b16 %v1140
  %v1343 = vunpack.c.l.b16 %v1141
  %v1344 = vunpack.c.l.b16 %v1142
  %v1345 = vunpack.c.l.b16 %v1143
  %v1346 = vunpack.c.l.b16 %v1144
  %v1347 = vunpack.c.l.b16 %v1145
  %v1348 = vunpack.c.l.b16 %v1146
  %v1349 = vunpack.c.l.b16 %v1147
  %v1350 = vunpack.c.l.b16 %v1148
  %v1351 = vunpack.c.l.b16 %v1149
  %v1352 = vunpack.c.l.b16 %v1150
  %v1353 = vunpack.c.l.b16 %v1151
  %v1354 = vunpack.c.l.b16 %v1152
  %v1355 = vunpack.c.l.b16 %v1153
  %v1356 = vunpack.c.l.b16 %v1154
  %v1357 = vunpack.c.l.b16 %v1155
  %v1358 = vunpack.c.l.b16 %v1156
  %v1359 = vunpack.c.l.b16 %v1157
  %v1360 = vunpack.c.l.b16 %v1158
  %v1361 = vunpack.c.l.b16 %v1159
  %v1362 = vunpack.c.l.b16 %v1160
  %v1363 = vunpack.c.l.b16 %v1161
  %v1364 = vunpack.c.l.b16 %v1162
  %v1365 = vunpack.c.l.b16 %v1163
  %v1366 = vunpack.c.l.b16 %v1164
  %v1367 = vunpack.c.l.b16 %v1165
  %v1368 = vunpack.c.l.b16 %v1166
  %v1369 = vunpack.c.l.b16 %v1167
  %v1370 = vunpack.c.l.b16 %v1168
  %v1371 = vunpack.c.l.b16 %v1169
  %v1372 = vunpack.c.l.b16 %v1170
  %v1373 = vpack.c.b16 %v1278, %v1277
  %v1374 = vpack.c.b16 %v1280, %v1279
  %v1375 = vpack.c.b16 %v1282, %v1281
  %v1376 = vpack.c.b16 %v1284, %v1283
  %v1377 = vpack.c.b16 %v1286, %v1285
  %v1378 = vpack.c.b16 %v1288, %v1287
  %v1379 = vpack.c.b16 %v1290, %v1289
  %v1380 = vpack.c.b16 %v1292, %v1291
  %v1381 = vpack.c.b16 %v1294, %v1293
  %v1382 = vpack.c.b16 %v1296, %v1295
  %v1383 = vpack.c.b16 %v1298, %v1297
  %v1384 = vpack.c.b16 %v1300, %v1299
  %v1385 = vpack.c.b16 %v1302, %v1301
  %v1386 = vpack.c.b16 %v1304, %v1303
  %v1387 = vpack.c.b16 %v1306, %v1305
  %v1388 = vpack.c.b16 %v1308, %v1307
  %v1389 = vpack.c.b16 %v1310, %v1309
  %v1390 = vpack.c.b16 %v1312, %v1311
  %v1391 = vpack.c.b16 %v1314, %v1313
  %v1392 = vpack.c.b16 %v1316, %v1315
  %v1393 = vpack.c.b16 %v1318, %v1317
  %v1394 = vpack.c.b16 %v1320, %v1319
  %v1395 = vpack.c.b16 %v1322, %v1321
  %v1396 = vpack.c.b16 %v1324, %v1323
  %v1397 = vpack.c.b16 %v1326, %v1325
  %v1398 = vpack.c.b16 %v1328, %v1327
  %v1399 = vpack.c.b16 %v1330, %v1329
  %v1400 = vpack.c.b16 %v1332, %v1331
  %v1401 = vpack.c.b16 %v1334, %v1333
  %v1402 = vpack.c.b16 %v1336, %v1335
  %v1403 = vpack.c.b16 %v1338, %v1337
  %v1404 = vpack.c.b16 %v1340, %v1339
  %v1405 = vpack.c.b16 %v1342, %v1341
  %v1406 = vpack.c.b16 %v1344, %v1343
  %v1407 = vpack.c.b16 %v1346, %v1345
  %v1408 = vpack.c.b16 %v1348, %v1347
  %v1409 = vpack.c.b16 %v1350, %v1349
  %v1410 = vpack.c.b16 %v1352, %v1351
  %v1411 = vpack.c.b16 %v1354, %v1353
  %v1412 = vpack.c.b16 %v1356, %v1355
  %v1413 = vpack.c.b16 %v1358, %v1357
  %v1414 = vpack.c.b16 %v1360, %v1359
  %v1415 = vpack.c.b16 %v1362, %v1361
  %v1416 = vpack.c.b16 %v1364, %v1363
  %v1417 = vpack.c.b16 %v1366, %v1365
  %v1418 = vpack.c.b16 %v1368, %v1367
  %v1419 = vpack.c.b16 %v1370, %v1369
  %v1420 = vpack.c.b16 %v1372, %v1371
  %1469 = vmatpush.bf16.msra.mxu0 %v1380
  %1470 = vmatpush.bf16.msra.mxu0 %v1379
  %1471 = vmatpush.bf16.msra.mxu0 %v1378
  %1472 = vmatpush.bf16.msra.mxu0 %v1377
  %1473 = vmatpush.bf16.msra.mxu0 %v1376
  %1474 = vmatpush.bf16.msra.mxu0 %v1375
  %1475 = vmatpush.bf16.msra.mxu0 %v1374
  %1476 = vmatpush.bf16.msra.mxu0 %v1373
  %1477 = vmatmul.bf16.gmra.mxu0 %v1171
  %v1478 = vpop.f32.mrf.mxu0
  %v1479 = vadd.f32 %v1179, %v1478
  %v1480 = vpop.f32.mrf.mxu0
  %v1481 = vadd.f32 %v1179, %v1480
  %1482 = vdwg.mxu0
  %1483 = vmatpush.bf16.msra.mxu0 %v1388
  %1484 = vmatpush.bf16.msra.mxu0 %v1387
  %1485 = vmatpush.bf16.msra.mxu0 %v1386
  %1486 = vmatpush.bf16.msra.mxu0 %v1385
  %1487 = vmatpush.bf16.msra.mxu0 %v1384
  %1488 = vmatpush.bf16.msra.mxu0 %v1383
  %1489 = vmatpush.bf16.msra.mxu0 %v1382
  %1490 = vmatpush.bf16.msra.mxu0 %v1381
  %1491 = vmatmul.bf16.gmra.mxu0 %v1172
  %v1492 = vpop.f32.mrf.mxu0
  %v1493 = vadd.f32 %v1479, %v1492
  %v1494 = vpop.f32.mrf.mxu0
  %v1495 = vadd.f32 %v1481, %v1494
  %1496 = vdwg.mxu0
  %1497 = vmatpush.bf16.msra.mxu0 %v1396
  %1498 = vmatpush.bf16.msra.mxu0 %v1395
  %1499 = vmatpush.bf16.msra.mxu0 %v1394
  %1500 = vmatpush.bf16.msra.mxu0 %v1393
  %1501 = vmatpush.bf16.msra.mxu0 %v1392
  %1502 = vmatpush.bf16.msra.mxu0 %v1391
  %1503 = vmatpush.bf16.msra.mxu0 %v1390
  %1504 = vmatpush.bf16.msra.mxu0 %v1389
  %1505 = vmatmul.bf16.gmra.mxu0 %v1173
  %v1506 = vpop.f32.mrf.mxu0
  %v1507 = vadd.f32 %v1493, %v1506
  %v1508 = vpop.f32.mrf.mxu0
  %v1509 = vadd.f32 %v1495, %v1508
  %1510 = vdwg.mxu0
  %1511 = vmatpush.bf16.msra.mxu0 %v1404
  %1512 = vmatpush.bf16.msra.mxu0 %v1403
  %1513 = vmatpush.bf16.msra.mxu0 %v1402
  %1514 = vmatpush.bf16.msra.mxu0 %v1401
  %1515 = vmatpush.bf16.msra.mxu0 %v1400
  %1516 = vmatpush.bf16.msra.mxu0 %v1399
  %1517 = vmatpush.bf16.msra.mxu0 %v1398
  %1518 = vmatpush.bf16.msra.mxu0 %v1397
  %1519 = vmatmul.bf16.gmra.mxu0 %v1174
  %v1520 = vpop.f32.mrf.mxu0
  %v1521 = vadd.f32 %v1507, %v1520
  %v1522 = vpop.f32.mrf.mxu0
  %v1523 = vadd.f32 %v1509, %v1522
  %1524 = vdwg.mxu0
  %1525 = vmatpush.bf16.msra.mxu0 %v1412
  %1526 = vmatpush.bf16.msra.mxu0 %v1411
  %1527 = vmatpush.bf16.msra.mxu0 %v1410
  %1528 = vmatpush.bf16.msra.mxu0 %v1409
  %1529 = vmatpush.bf16.msra.mxu0 %v1408
  %1530 = vmatpush.bf16.msra.mxu0 %v1407
  %1531 = vmatpush.bf16.msra.mxu0 %v1406
  %1532 = vmatpush.bf16.msra.mxu0 %v1405
  %1533 = vmatmul.bf16.gmra.mxu0 %v1175
  %v1534 = vpop.f32.mrf.mxu0
  %v1535 = vadd.f32 %v1521, %v1534
  %v1536 = vpop.f32.mrf.mxu0
  %v1537 = vadd.f32 %v1523, %v1536
  %1538 = vdwg.mxu0
  %1539 = vmatpush.bf16.msra.mxu0 %v1420
  %1540 = vmatpush.bf16.msra.mxu0 %v1419
  %1541 = vmatpush.bf16.msra.mxu0 %v1418
  %1542 = vmatpush.bf16.msra.mxu0 %v1417
  %1543 = vmatpush.bf16.msra.mxu0 %v1416
  %1544 = vmatpush.bf16.msra.mxu0 %v1415
  %1545 = vmatpush.bf16.msra.mxu0 %v1414
  %1546 = vmatpush.bf16.msra.mxu0 %v1413
  %1547 = vmatmul.bf16.gmra.mxu0 %v1176
  %v1548 = vpop.f32.mrf.mxu0
  %v1549 = vadd.f32 %v1535, %v1548
  %v1550 = vpop.f32.mrf.mxu0
  %v1551 = vadd.f32 %v1537, %v1550
  %1552 = vdwg.mxu0
  %1553 = vst.msk [vmem:[%s89] sm:$0xff] %vm489, %v1549
  %vm1554 = vcmask 257024
  %1555 = vst.msk [vmem:[%s89 + $0x8] sm:$0xf] %vm1554, %v1551
  %v1556 = vld [vmem:[%s47] sm:$0x1]
  %v1557 = vld [vmem:[%s49] sm:$0x1]
  %v1558 = vsel %vm489, %v1549, 0.0
  %1559 = vadd.xlane.f32.xlu0 %v1558
  %v1560 = vpop.xlane.xlu0 %1559
  %v1561 = vsel %vm1554, %v1551, 0.0
  %1562 = vadd.xlane.f32.xlu0 %v1561
  %v1563 = vpop.xlane.xlu0 %1562
  %v1564 = vrcp.pop 32.0
  %v1565 = vmul.f32 32.0, %v1564
  %v1566 = vsub.f32 1.0, %v1565
  %v1567 = vmul.f32 %v1564, %v1566
  %v1568 = vadd.f32 %v1564, %v1567
  %vm1569 = vweird.f32 %v1564
  %v1570 = vsel %vm1569, %v1564, %v1568
  %v1571 = vmul.f32 %v1560, %v1570
  %v1572 = vmul.f32 %v1563, %v1570
  %v1573 = vsub.f32 %v1549, %v1571
  %v1574 = vsub.f32 %v1551, %v1572
  %v1575 = vmul.f32 %v1573, %v1573
  %v1576 = vmul.f32 %v1574, %v1574
  %v1577 = vsel %vm489, %v1575, 0.0
  %1578 = vadd.xlane.f32.xlu0 %v1577
  %v1579 = vpop.xlane.xlu0 %1578
  %v1580 = vsel %vm1554, %v1576, 0.0
  %1581 = vadd.xlane.f32.xlu0 %v1580
  %v1582 = vpop.xlane.xlu0 %1581
  %v1583 = vmul.f32 %v1579, %v1570
  %v1584 = vmul.f32 %v1582, %v1570
  %v1585 = vadd.f32 %v1583, 1e-05
  %v1586 = vadd.f32 %v1584, 1e-05
  %v1587 = vrsqrt.pop %v1585
  %v1588 = vmul.f32 %v1587, %v1585
  %v1589 = vmul.f32 %v1588, %v1587
  %v1590 = vmul.f32 0.5, %v1589
  %v1591 = vsub.f32 1.5, %v1590
  %v1592 = vmul.f32 %v1587, %v1591
  %vm1593 = vweird.f32 %v1585
  %vm1594 = vweird.f32 %v1587
  %vm1595 = vmor %vm1593, %vm1594
  %v1596 = vsel %vm1595, %v1587, %v1592
  %v1597 = vrsqrt.pop %v1586
  %v1598 = vmul.f32 %v1597, %v1586
  %v1599 = vmul.f32 %v1598, %v1597
  %v1600 = vmul.f32 0.5, %v1599
  %v1601 = vsub.f32 1.5, %v1600
  %v1602 = vmul.f32 %v1597, %v1601
  %vm1603 = vweird.f32 %v1586
  %vm1604 = vweird.f32 %v1597
  %vm1605 = vmor %vm1603, %vm1604
  %v1606 = vsel %vm1605, %v1597, %v1602
  %v1607 = vmul.f32 %v1573, %v1596
  %v1608 = vmul.f32 %v1574, %v1606
  %v1610 = vperm.slane %v1556, 0
  %v1612 = vmul.f32 %v1607, %v1610
  %v1613 = vmul.f32 %v1608, %v1610
  %v1615 = vperm.slane %v1557, 0
  %v1617 = vadd.f32 %v1612, %v1615
  %v1618 = vadd.f32 %v1613, %v1615
  %v1619 = vld [vmem:[%s51] sm:$0xf]
  %v1620 = vld [vmem:[%s51 + $0x4] sm:$0xf]
  %v1621 = vld [vmem:[%s51 + $0x8] sm:$0xf]
  %v1622 = vld [vmem:[%s51 + $0xc] sm:$0xf]
  %v1623 = vpack.c.bf16 %v1618, %v1617
  %v1624 = vld [vmem:[%s53] sm:$0x1]
  %v1626 = vperm.slane %v1624, 0
  %v1632 = vunpack.c.l.b16 %v1619
  %v1633 = vunpack.c.l.b16 %v1620
  %v1634 = vunpack.c.l.b16 %v1621
  %v1635 = vunpack.c.l.b16 %v1622
  %v1636 = vpack.c.b16 %v1633, %v1632
  %v1637 = vpack.c.b16 %v1635, %v1634
  %v1641 = vsel %vm489, %v1623, 0
  %1643 = vmatpush.bf16.msra.mxu0 0
  %1644 = vmatpush.bf16.msra.mxu0 0
  %1645 = vmatpush.bf16.msra.mxu0 0
  %1646 = vmatpush.bf16.msra.mxu0 0
  %1647 = vmatpush.bf16.msra.mxu0 0
  %1648 = vmatpush.bf16.msra.mxu0 0
  %1649 = vmatpush.bf16.msra.mxu0 %v1637
  %1650 = vmatpush.bf16.msra.mxu0 %v1636
  %1651 = vmatmul.bf16.gmra.mxu0 %v1641
  %v1652 = vpop.f32.mrf.mxu0
  %v1653 = vadd.f32 %v1626, %v1652
  %v1654 = vpop.f32.mrf.mxu0
  %v1655 = vadd.f32 %v1626, %v1654
  %1656 = vdwg.mxu0
  %v1657 = vld [vmem:[%s55] sm:$0xf]
  %v1658 = vld [vmem:[%s55 + $0x4] sm:$0xf]
  %v1659 = vld [vmem:[%s55 + $0x8] sm:$0xf]
  %v1660 = vld [vmem:[%s55 + $0xc] sm:$0xf]
  %v1661 = vpack.c.bf16 %v468, %v466
  %v1662 = vpack.c.bf16 %v473, %v471
  %v1663 = vld [vmem:[%s57] sm:$0x1]
  %v1665 = vperm.slane %v1663, 0
  %v1671 = vunpack.c.l.b16 %v1657
  %v1672 = vunpack.c.l.b16 %v1658
  %v1673 = vunpack.c.l.b16 %v1659
  %v1674 = vunpack.c.l.b16 %v1660
  %v1675 = vpack.c.b16 %v1672, %v1671
  %v1676 = vpack.c.b16 %v1674, %v1673
  %v1680 = vsel %vm489, %v1661, 0
  %v1683 = vsel %vm489, %v1662, 0
  %1685 = vmatpush.bf16.msra.mxu0 0
  %1686 = vmatpush.bf16.msra.mxu0 0
  %1687 = vmatpush.bf16.msra.mxu0 0
  %1688 = vmatpush.bf16.msra.mxu0 0
  %1689 = vmatpush.bf16.msra.mxu0 0
  %1690 = vmatpush.bf16.msra.mxu0 0
  %1691 = vmatpush.bf16.msra.mxu0 %v1676
  %1692 = vmatpush.bf16.msra.mxu0 %v1675
  %1693 = vmatmul.bf16.gmra.mxu0 %v1680
  %v1694 = vpop.f32.mrf.mxu0
  %v1695 = vadd.f32 %v1665, %v1694
  %v1696 = vpop.f32.mrf.mxu0
  %v1697 = vadd.f32 %v1665, %v1696
  %1698 = vmatmul.bf16.gmra.mxu0 %v1683
  %v1699 = vpop.f32.mrf.mxu0
  %v1700 = vadd.f32 %v1665, %v1699
  %v1701 = vpop.f32.mrf.mxu0
  %v1702 = vadd.f32 %v1665, %v1701
  %1703 = vdwg.mxu0
  %v1704 = vld [vmem:[%s59] sm:$0xf]
  %v1705 = vld [vmem:[%s59 + $0x4] sm:$0xf]
  %v1706 = vld [vmem:[%s59 + $0x8] sm:$0xf]
  %v1707 = vld [vmem:[%s59 + $0xc] sm:$0xf]
  %v1708 = vld [vmem:[%s61] sm:$0x1]
  %v1710 = vperm.slane %v1708, 0
  %v1716 = vunpack.c.l.b16 %v1704
  %v1717 = vunpack.c.l.b16 %v1705
  %v1718 = vunpack.c.l.b16 %v1706
  %v1719 = vunpack.c.l.b16 %v1707
  %v1720 = vpack.c.b16 %v1717, %v1716
  %v1721 = vpack.c.b16 %v1719, %v1718
  %1724 = vmatpush.bf16.msra.mxu0 0
  %1725 = vmatpush.bf16.msra.mxu0 0
  %1726 = vmatpush.bf16.msra.mxu0 0
  %1727 = vmatpush.bf16.msra.mxu0 0
  %1728 = vmatpush.bf16.msra.mxu0 0
  %1729 = vmatpush.bf16.msra.mxu0 0
  %1730 = vmatpush.bf16.msra.mxu0 %v1721
  %1731 = vmatpush.bf16.msra.mxu0 %v1720
  %1732 = vmatmul.bf16.gmra.mxu0 %v1680
  %v1733 = vpop.f32.mrf.mxu0
  %v1734 = vadd.f32 %v1710, %v1733
  %v1735 = vpop.f32.mrf.mxu0
  %v1736 = vadd.f32 %v1710, %v1735
  %1737 = vmatmul.bf16.gmra.mxu0 %v1683
  %v1738 = vpop.f32.mrf.mxu0
  %v1739 = vadd.f32 %v1710, %v1738
  %v1740 = vpop.f32.mrf.mxu0
  %v1741 = vadd.f32 %v1710, %v1740
  %1742 = vdwg.mxu0
  %v1743 = vld [vmem:[%s67] sm:$0x1]
  %v1744 = vld [vmem:[%s67 + $0x1] sm:$0x1]
  %v1745 = vld [vmem:[%s67 + $0x2] sm:$0x1]
  %v1746 = vld [vmem:[%s67 + $0x3] sm:$0x1]
  %v1748 = vperm.slane %v1743, 0
  %v1750 = vmul.f32 %v1653, %v1748
  %v1751 = vmul.f32 %v1655, %v1748
  %v1753 = vperm.slane %v1744, 0
  %v1755 = vmul.f32 %v1653, %v1753
  %v1756 = vmul.f32 %v1655, %v1753
  %v1758 = vperm.slane %v1745, 0
  %v1760 = vmul.f32 %v1653, %v1758
  %v1761 = vmul.f32 %v1655, %v1758
  %v1763 = vperm.slane %v1746, 0
  %v1765 = vmul.f32 %v1653, %v1763
  %v1766 = vmul.f32 %v1655, %v1763
  %v1767 = vpack.c.bf16 %v1751, %v1750
  %v1768 = vpack.c.bf16 %v1697, %v1695
  %v1770 = vsel %vm489, %v1767, 0
  %v1773 = vsel %vm489, %v1768, 0
  %1775 = vmatpush.bf16.xpose.msra.mxu0 0
  %1776 = vmatpush.bf16.xpose.msra.mxu0 0
  %1777 = vmatpush.bf16.xpose.msra.mxu0 0
  %1778 = vmatpush.bf16.xpose.msra.mxu0 0
  %1779 = vmatpush.bf16.xpose.msra.mxu0 0
  %1780 = vmatpush.bf16.xpose.msra.mxu0 0
  %1781 = vmatpush.bf16.xpose.msra.mxu0 0
  %1782 = vmatpush.bf16.xpose.msra.mxu0 %v1773
  %1783 = vmatmul.bf16.gmra.mxu0 %v1770
  %v1784 = vpop.f32.mrf.mxu0
  %v1785 = vadd.f32 0.0, %v1784
  %v1786 = vpop.f32.mrf.mxu0
  %v1787 = vadd.f32 0.0, %v1786
  %1788 = vdwg.mxu0
  %v1789 = vmul.f32 %v1785, 0.35355338
  %v1790 = vmul.f32 %v1787, 0.35355338
  %vm1791 = vcmask 130048
  %v1792 = vsel %vm1791, %v1789, -inf
  %1793 = vmax.xlane.f32.xlu0 %v1792
  %v1794 = vpop.xlane.xlu0 %1793
  %vm1795 = vcmask 125952
  %v1796 = vsel %vm1795, %v1790, -inf
  %1797 = vmax.xlane.f32.xlu0 %v1796
  %v1798 = vpop.xlane.xlu0 %1797
  %v1799 = vsub.f32 %v1789, %v1794
  %v1800 = vsub.f32 %v1790, %v1798
  %v1801 = vmul.f32 %v1799, 1.442695
  %v1802 = vpow.pop %v1801
  %v1803 = vmul.f32 %v1800, 1.442695
  %v1804 = vpow.pop %v1803
  %v1805 = vsel %vm1791, %v1802, 0.0
  %1806 = vadd.xlane.f32.xlu0 %v1805
  %v1807 = vpop.xlane.xlu0 %1806
  %v1808 = vsel %vm1795, %v1804, 0.0
  %1809 = vadd.xlane.f32.xlu0 %v1808
  %v1810 = vpop.xlane.xlu0 %1809
  %v1811 = vrcp.pop %v1807
  %v1812 = vrcp.pop %v1810
  %v1813 = vmul.f32 %v1802, %v1811
  %v1814 = vmul.f32 %v1804, %v1812
  %v1815 = vpack.c.bf16 %v1814, %v1813
  %v1816 = vpack.c.bf16 %v1736, %v1734
  %v1818 = vsel %vm1791, %v1815, 0
  %1820 = vmatpush.bf16.msra.mxu0 0
  %1821 = vmatpush.bf16.msra.mxu0 0
  %1822 = vmatpush.bf16.msra.mxu0 0
  %1823 = vmatpush.bf16.msra.mxu0 0
  %1824 = vmatpush.bf16.msra.mxu0 0
  %1825 = vmatpush.bf16.msra.mxu0 0
  %1826 = vmatpush.bf16.msra.mxu0 0
  %1827 = vmatpush.bf16.msra.mxu0 %v1816
  %1828 = vmatmul.bf16.gmra.mxu0 %v1818
  %v1829 = vpop.f32.mrf.mxu0
  %v1830 = vadd.f32 0.0, %v1829
  %v1831 = vpop.f32.mrf.mxu0
  %v1832 = vadd.f32 0.0, %v1831
  %1833 = vdwg.mxu0
  %v1834 = vmul.f32 %v1830, %v1748
  %v1835 = vmul.f32 %v1832, %v1748
  %v1836 = vadd.f32 %v1834, 0.0
  %v1837 = vadd.f32 %v1835, 0.0
  %v1838 = vpack.c.bf16 %v1756, %v1755
  %v1840 = vsel %vm489, %v1838, 0
  %1842 = vmatpush.bf16.xpose.msra.mxu0 0
  %1843 = vmatpush.bf16.xpose.msra.mxu0 0
  %1844 = vmatpush.bf16.xpose.msra.mxu0 0
  %1845 = vmatpush.bf16.xpose.msra.mxu0 0
  %1846 = vmatpush.bf16.xpose.msra.mxu0 0
  %1847 = vmatpush.bf16.xpose.msra.mxu0 0
  %1848 = vmatpush.bf16.xpose.msra.mxu0 0
  %1849 = vmatpush.bf16.xpose.msra.mxu0 %v1773
  %1850 = vmatmul.bf16.gmra.mxu0 %v1840
  %v1851 = vpop.f32.mrf.mxu0
  %v1852 = vadd.f32 0.0, %v1851
  %v1853 = vpop.f32.mrf.mxu0
  %v1854 = vadd.f32 0.0, %v1853
  %1855 = vdwg.mxu0
  %v1856 = vmul.f32 %v1852, 0.35355338
  %v1857 = vmul.f32 %v1854, 0.35355338
  %v1858 = vsel %vm1791, %v1856, -inf
  %1859 = vmax.xlane.f32.xlu0 %v1858
  %v1860 = vpop.xlane.xlu0 %1859
  %v1861 = vsel %vm1795, %v1857, -inf
  %1862 = vmax.xlane.f32.xlu0 %v1861
  %v1863 = vpop.xlane.xlu0 %1862
  %v1864 = vsub.f32 %v1856, %v1860
  %v1865 = vsub.f32 %v1857, %v1863
  %v1866 = vmul.f32 %v1864, 1.442695
  %v1867 = vpow.pop %v1866
  %v1868 = vmul.f32 %v1865, 1.442695
  %v1869 = vpow.pop %v1868
  %v1870 = vsel %vm1791, %v1867, 0.0
  %1871 = vadd.xlane.f32.xlu0 %v1870
  %v1872 = vpop.xlane.xlu0 %1871
  %v1873 = vsel %vm1795, %v1869, 0.0
  %1874 = vadd.xlane.f32.xlu0 %v1873
  %v1875 = vpop.xlane.xlu0 %1874
  %v1876 = vrcp.pop %v1872
  %v1877 = vrcp.pop %v1875
  %v1878 = vmul.f32 %v1867, %v1876
  %v1879 = vmul.f32 %v1869, %v1877
  %v1880 = vpack.c.bf16 %v1879, %v1878
  %v1882 = vsel %vm1791, %v1880, 0
  %1884 = vmatpush.bf16.msra.mxu0 0
  %1885 = vmatpush.bf16.msra.mxu0 0
  %1886 = vmatpush.bf16.msra.mxu0 0
  %1887 = vmatpush.bf16.msra.mxu0 0
  %1888 = vmatpush.bf16.msra.mxu0 0
  %1889 = vmatpush.bf16.msra.mxu0 0
  %1890 = vmatpush.bf16.msra.mxu0 0
  %1891 = vmatpush.bf16.msra.mxu0 %v1816
  %1892 = vmatmul.bf16.gmra.mxu0 %v1882
  %v1893 = vpop.f32.mrf.mxu0
  %v1894 = vadd.f32 0.0, %v1893
  %v1895 = vpop.f32.mrf.mxu0
  %v1896 = vadd.f32 0.0, %v1895
  %1897 = vdwg.mxu0
  %v1898 = vmul.f32 %v1894, %v1753
  %v1899 = vmul.f32 %v1896, %v1753
  %v1900 = vadd.f32 %v1836, %v1898
  %v1901 = vadd.f32 %v1837, %v1899
  %v1902 = vpack.c.bf16 %v1761, %v1760
  %v1904 = vsel %vm489, %v1902, 0
  %1906 = vmatpush.bf16.xpose.msra.mxu0 0
  %1907 = vmatpush.bf16.xpose.msra.mxu0 0
  %1908 = vmatpush.bf16.xpose.msra.mxu0 0
  %1909 = vmatpush.bf16.xpose.msra.mxu0 0
  %1910 = vmatpush.bf16.xpose.msra.mxu0 0
  %1911 = vmatpush.bf16.xpose.msra.mxu0 0
  %1912 = vmatpush.bf16.xpose.msra.mxu0 0
  %1913 = vmatpush.bf16.xpose.msra.mxu0 %v1773
  %1914 = vmatmul.bf16.gmra.mxu0 %v1904
  %v1915 = vpop.f32.mrf.mxu0
  %v1916 = vadd.f32 0.0, %v1915
  %v1917 = vpop.f32.mrf.mxu0
  %v1918 = vadd.f32 0.0, %v1917
  %1919 = vdwg.mxu0
  %v1920 = vmul.f32 %v1916, 0.35355338
  %v1921 = vmul.f32 %v1918, 0.35355338
  %v1922 = vsel %vm1791, %v1920, -inf
  %1923 = vmax.xlane.f32.xlu0 %v1922
  %v1924 = vpop.xlane.xlu0 %1923
  %v1925 = vsel %vm1795, %v1921, -inf
  %1926 = vmax.xlane.f32.xlu0 %v1925
  %v1927 = vpop.xlane.xlu0 %1926
  %v1928 = vsub.f32 %v1920, %v1924
  %v1929 = vsub.f32 %v1921, %v1927
  %v1930 = vmul.f32 %v1928, 1.442695
  %v1931 = vpow.pop %v1930
  %v1932 = vmul.f32 %v1929, 1.442695
  %v1933 = vpow.pop %v1932
  %v1934 = vsel %vm1791, %v1931, 0.0
  %1935 = vadd.xlane.f32.xlu0 %v1934
  %v1936 = vpop.xlane.xlu0 %1935
  %v1937 = vsel %vm1795, %v1933, 0.0
  %1938 = vadd.xlane.f32.xlu0 %v1937
  %v1939 = vpop.xlane.xlu0 %1938
  %v1940 = vrcp.pop %v1936
  %v1941 = vrcp.pop %v1939
  %v1942 = vmul.f32 %v1931, %v1940
  %v1943 = vmul.f32 %v1933, %v1941
  %v1944 = vpack.c.bf16 %v1943, %v1942
  %v1946 = vsel %vm1791, %v1944, 0
  %1948 = vmatpush.bf16.msra.mxu0 0
  %1949 = vmatpush.bf16.msra.mxu0 0
  %1950 = vmatpush.bf16.msra.mxu0 0
  %1951 = vmatpush.bf16.msra.mxu0 0
  %1952 = vmatpush.bf16.msra.mxu0 0
  %1953 = vmatpush.bf16.msra.mxu0 0
  %1954 = vmatpush.bf16.msra.mxu0 0
  %1955 = vmatpush.bf16.msra.mxu0 %v1816
  %1956 = vmatmul.bf16.gmra.mxu0 %v1946
  %v1957 = vpop.f32.mrf.mxu0
  %v1958 = vadd.f32 0.0, %v1957
  %v1959 = vpop.f32.mrf.mxu0
  %v1960 = vadd.f32 0.0, %v1959
  %1961 = vdwg.mxu0
  %v1962 = vmul.f32 %v1958, %v1758
  %v1963 = vmul.f32 %v1960, %v1758
  %v1964 = vadd.f32 %v1900, %v1962
  %v1965 = vadd.f32 %v1901, %v1963
  %v1966 = vpack.c.bf16 %v1766, %v1765
  %v1968 = vsel %vm489, %v1966, 0
  %1970 = vmatpush.bf16.xpose.msra.mxu0 0
  %1971 = vmatpush.bf16.xpose.msra.mxu0 0
  %1972 = vmatpush.bf16.xpose.msra.mxu0 0
  %1973 = vmatpush.bf16.xpose.msra.mxu0 0
  %1974 = vmatpush.bf16.xpose.msra.mxu0 0
  %1975 = vmatpush.bf16.xpose.msra.mxu0 0
  %1976 = vmatpush.bf16.xpose.msra.mxu0 0
  %1977 = vmatpush.bf16.xpose.msra.mxu0 %v1773
  %1978 = vmatmul.bf16.gmra.mxu0 %v1968
  %v1979 = vpop.f32.mrf.mxu0
  %v1980 = vadd.f32 0.0, %v1979
  %v1981 = vpop.f32.mrf.mxu0
  %v1982 = vadd.f32 0.0, %v1981
  %1983 = vdwg.mxu0
  %v1984 = vmul.f32 %v1980, 0.35355338
  %v1985 = vmul.f32 %v1982, 0.35355338
  %v1986 = vsel %vm1791, %v1984, -inf
  %1987 = vmax.xlane.f32.xlu0 %v1986
  %v1988 = vpop.xlane.xlu0 %1987
  %v1989 = vsel %vm1795, %v1985, -inf
  %1990 = vmax.xlane.f32.xlu0 %v1989
  %v1991 = vpop.xlane.xlu0 %1990
  %v1992 = vsub.f32 %v1984, %v1988
  %v1993 = vsub.f32 %v1985, %v1991
  %v1994 = vmul.f32 %v1992, 1.442695
  %v1995 = vpow.pop %v1994
  %v1996 = vmul.f32 %v1993, 1.442695
  %v1997 = vpow.pop %v1996
  %v1998 = vsel %vm1791, %v1995, 0.0
  %1999 = vadd.xlane.f32.xlu0 %v1998
  %v2000 = vpop.xlane.xlu0 %1999
  %v2001 = vsel %vm1795, %v1997, 0.0
  %2002 = vadd.xlane.f32.xlu0 %v2001
  %v2003 = vpop.xlane.xlu0 %2002
  %v2004 = vrcp.pop %v2000
  %v2005 = vrcp.pop %v2003
  %v2006 = vmul.f32 %v1995, %v2004
  %v2007 = vmul.f32 %v1997, %v2005
  %v2008 = vpack.c.bf16 %v2007, %v2006
  %v2010 = vsel %vm1791, %v2008, 0
  %2012 = vmatpush.bf16.msra.mxu0 0
  %2013 = vmatpush.bf16.msra.mxu0 0
  %2014 = vmatpush.bf16.msra.mxu0 0
  %2015 = vmatpush.bf16.msra.mxu0 0
  %2016 = vmatpush.bf16.msra.mxu0 0
  %2017 = vmatpush.bf16.msra.mxu0 0
  %2018 = vmatpush.bf16.msra.mxu0 0
  %2019 = vmatpush.bf16.msra.mxu0 %v1816
  %2020 = vmatmul.bf16.gmra.mxu0 %v2010
  %v2021 = vpop.f32.mrf.mxu0
  %v2022 = vadd.f32 0.0, %v2021
  %v2023 = vpop.f32.mrf.mxu0
  %v2024 = vadd.f32 0.0, %v2023
  %2025 = vdwg.mxu0
  %v2026 = vmul.f32 %v2022, %v1763
  %v2027 = vmul.f32 %v2024, %v1763
  %v2028 = vadd.f32 %v1964, %v2026
  %v2029 = vadd.f32 %v1965, %v2027
  %v2030 = vpack.c.bf16 %v1702, %v1700
  %v2032 = vsel %vm489, %v2030, 0
  %2034 = vmatpush.bf16.xpose.msra.mxu0 0
  %2035 = vmatpush.bf16.xpose.msra.mxu0 0
  %2036 = vmatpush.bf16.xpose.msra.mxu0 0
  %2037 = vmatpush.bf16.xpose.msra.mxu0 0
  %2038 = vmatpush.bf16.xpose.msra.mxu0 0
  %2039 = vmatpush.bf16.xpose.msra.mxu0 0
  %2040 = vmatpush.bf16.xpose.msra.mxu0 0
  %2041 = vmatpush.bf16.xpose.msra.mxu0 %v2032
  %2042 = vmatmul.bf16.gmra.mxu0 %v1770
  %v2043 = vpop.f32.mrf.mxu0
  %v2044 = vadd.f32 0.0, %v2043
  %v2045 = vpop.f32.mrf.mxu0
  %v2046 = vadd.f32 0.0, %v2045
  %2047 = vdwg.mxu0
  %v2048 = vmul.f32 %v2044, 0.35355338
  %v2049 = vmul.f32 %v2046, 0.35355338
  %v2050 = vsel %vm1791, %v2048, -inf
  %2051 = vmax.xlane.f32.xlu0 %v2050
  %v2052 = vpop.xlane.xlu0 %2051
  %v2053 = vsel %vm1795, %v2049, -inf
  %2054 = vmax.xlane.f32.xlu0 %v2053
  %v2055 = vpop.xlane.xlu0 %2054
  %v2056 = vsub.f32 %v2048, %v2052
  %v2057 = vsub.f32 %v2049, %v2055
  %v2058 = vmul.f32 %v2056, 1.442695
  %v2059 = vpow.pop %v2058
  %v2060 = vmul.f32 %v2057, 1.442695
  %v2061 = vpow.pop %v2060
  %v2062 = vsel %vm1791, %v2059, 0.0
  %2063 = vadd.xlane.f32.xlu0 %v2062
  %v2064 = vpop.xlane.xlu0 %2063
  %v2065 = vsel %vm1795, %v2061, 0.0
  %2066 = vadd.xlane.f32.xlu0 %v2065
  %v2067 = vpop.xlane.xlu0 %2066
  %v2068 = vrcp.pop %v2064
  %v2069 = vrcp.pop %v2067
  %v2070 = vmul.f32 %v2059, %v2068
  %v2071 = vmul.f32 %v2061, %v2069
  %v2072 = vpack.c.bf16 %v2071, %v2070
  %v2073 = vpack.c.bf16 %v1741, %v1739
  %v2075 = vsel %vm1791, %v2072, 0
  %2077 = vmatpush.bf16.msra.mxu0 0
  %2078 = vmatpush.bf16.msra.mxu0 0
  %2079 = vmatpush.bf16.msra.mxu0 0
  %2080 = vmatpush.bf16.msra.mxu0 0
  %2081 = vmatpush.bf16.msra.mxu0 0
  %2082 = vmatpush.bf16.msra.mxu0 0
  %2083 = vmatpush.bf16.msra.mxu0 0
  %2084 = vmatpush.bf16.msra.mxu0 %v2073
  %2085 = vmatmul.bf16.gmra.mxu0 %v2075
  %v2086 = vpop.f32.mrf.mxu0
  %v2087 = vadd.f32 0.0, %v2086
  %v2088 = vpop.f32.mrf.mxu0
  %v2089 = vadd.f32 0.0, %v2088
  %2090 = vdwg.mxu0
  %v2091 = vmul.f32 %v2087, %v1748
  %v2092 = vmul.f32 %v2089, %v1748
  %v2093 = vadd.f32 %v2091, 0.0
  %v2094 = vadd.f32 %v2092, 0.0
  %2095 = vmatpush.bf16.xpose.msra.mxu0 0
  %2096 = vmatpush.bf16.xpose.msra.mxu0 0
  %2097 = vmatpush.bf16.xpose.msra.mxu0 0
  %2098 = vmatpush.bf16.xpose.msra.mxu0 0
  %2099 = vmatpush.bf16.xpose.msra.mxu0 0
  %2100 = vmatpush.bf16.xpose.msra.mxu0 0
  %2101 = vmatpush.bf16.xpose.msra.mxu0 0
  %2102 = vmatpush.bf16.xpose.msra.mxu0 %v2032
  %2103 = vmatmul.bf16.gmra.mxu0 %v1840
  %v2104 = vpop.f32.mrf.mxu0
  %v2105 = vadd.f32 0.0, %v2104
  %v2106 = vpop.f32.mrf.mxu0
  %v2107 = vadd.f32 0.0, %v2106
  %2108 = vdwg.mxu0
  %v2109 = vmul.f32 %v2105, 0.35355338
  %v2110 = vmul.f32 %v2107, 0.35355338
  %v2111 = vsel %vm1791, %v2109, -inf
  %2112 = vmax.xlane.f32.xlu0 %v2111
  %v2113 = vpop.xlane.xlu0 %2112
  %v2114 = vsel %vm1795, %v2110, -inf
  %2115 = vmax.xlane.f32.xlu0 %v2114
  %v2116 = vpop.xlane.xlu0 %2115
  %v2117 = vsub.f32 %v2109, %v2113
  %v2118 = vsub.f32 %v2110, %v2116
  %v2119 = vmul.f32 %v2117, 1.442695
  %v2120 = vpow.pop %v2119
  %v2121 = vmul.f32 %v2118, 1.442695
  %v2122 = vpow.pop %v2121
  %v2123 = vsel %vm1791, %v2120, 0.0
  %2124 = vadd.xlane.f32.xlu0 %v2123
  %v2125 = vpop.xlane.xlu0 %2124
  %v2126 = vsel %vm1795, %v2122, 0.0
  %2127 = vadd.xlane.f32.xlu0 %v2126
  %v2128 = vpop.xlane.xlu0 %2127
  %v2129 = vrcp.pop %v2125
  %v2130 = vrcp.pop %v2128
  %v2131 = vmul.f32 %v2120, %v2129
  %v2132 = vmul.f32 %v2122, %v2130
  %v2133 = vpack.c.bf16 %v2132, %v2131
  %v2135 = vsel %vm1791, %v2133, 0
  %2137 = vmatpush.bf16.msra.mxu0 0
  %2138 = vmatpush.bf16.msra.mxu0 0
  %2139 = vmatpush.bf16.msra.mxu0 0
  %2140 = vmatpush.bf16.msra.mxu0 0
  %2141 = vmatpush.bf16.msra.mxu0 0
  %2142 = vmatpush.bf16.msra.mxu0 0
  %2143 = vmatpush.bf16.msra.mxu0 0
  %2144 = vmatpush.bf16.msra.mxu0 %v2073
  %2145 = vmatmul.bf16.gmra.mxu0 %v2135
  %v2146 = vpop.f32.mrf.mxu0
  %v2147 = vadd.f32 0.0, %v2146
  %v2148 = vpop.f32.mrf.mxu0
  %v2149 = vadd.f32 0.0, %v2148
  %2150 = vdwg.mxu0
  %v2151 = vmul.f32 %v2147, %v1753
  %v2152 = vmul.f32 %v2149, %v1753
  %v2153 = vadd.f32 %v2093, %v2151
  %v2154 = vadd.f32 %v2094, %v2152
  %2155 = vmatpush.bf16.xpose.msra.mxu0 0
  %2156 = vmatpush.bf16.xpose.msra.mxu0 0
  %2157 = vmatpush.bf16.xpose.msra.mxu0 0
  %2158 = vmatpush.bf16.xpose.msra.mxu0 0
  %2159 = vmatpush.bf16.xpose.msra.mxu0 0
  %2160 = vmatpush.bf16.xpose.msra.mxu0 0
  %2161 = vmatpush.bf16.xpose.msra.mxu0 0
  %2162 = vmatpush.bf16.xpose.msra.mxu0 %v2032
  %2163 = vmatmul.bf16.gmra.mxu0 %v1904
  %v2164 = vpop.f32.mrf.mxu0
  %v2165 = vadd.f32 0.0, %v2164
  %v2166 = vpop.f32.mrf.mxu0
  %v2167 = vadd.f32 0.0, %v2166
  %2168 = vdwg.mxu0
  %v2169 = vmul.f32 %v2165, 0.35355338
  %v2170 = vmul.f32 %v2167, 0.35355338
  %v2171 = vsel %vm1791, %v2169, -inf
  %2172 = vmax.xlane.f32.xlu0 %v2171
  %v2173 = vpop.xlane.xlu0 %2172
  %v2174 = vsel %vm1795, %v2170, -inf
  %2175 = vmax.xlane.f32.xlu0 %v2174
  %v2176 = vpop.xlane.xlu0 %2175
  %v2177 = vsub.f32 %v2169, %v2173
  %v2178 = vsub.f32 %v2170, %v2176
  %v2179 = vmul.f32 %v2177, 1.442695
  %v2180 = vpow.pop %v2179
  %v2181 = vmul.f32 %v2178, 1.442695
  %v2182 = vpow.pop %v2181
  %v2183 = vsel %vm1791, %v2180, 0.0
  %2184 = vadd.xlane.f32.xlu0 %v2183
  %v2185 = vpop.xlane.xlu0 %2184
  %v2186 = vsel %vm1795, %v2182, 0.0
  %2187 = vadd.xlane.f32.xlu0 %v2186
  %v2188 = vpop.xlane.xlu0 %2187
  %v2189 = vrcp.pop %v2185
  %v2190 = vrcp.pop %v2188
  %v2191 = vmul.f32 %v2180, %v2189
  %v2192 = vmul.f32 %v2182, %v2190
  %v2193 = vpack.c.bf16 %v2192, %v2191
  %v2195 = vsel %vm1791, %v2193, 0
  %2197 = vmatpush.bf16.msra.mxu0 0
  %2198 = vmatpush.bf16.msra.mxu0 0
  %2199 = vmatpush.bf16.msra.mxu0 0
  %2200 = vmatpush.bf16.msra.mxu0 0
  %2201 = vmatpush.bf16.msra.mxu0 0
  %2202 = vmatpush.bf16.msra.mxu0 0
  %2203 = vmatpush.bf16.msra.mxu0 0
  %2204 = vmatpush.bf16.msra.mxu0 %v2073
  %2205 = vmatmul.bf16.gmra.mxu0 %v2195
  %v2206 = vpop.f32.mrf.mxu0
  %v2207 = vadd.f32 0.0, %v2206
  %v2208 = vpop.f32.mrf.mxu0
  %v2209 = vadd.f32 0.0, %v2208
  %2210 = vdwg.mxu0
  %v2211 = vmul.f32 %v2207, %v1758
  %v2212 = vmul.f32 %v2209, %v1758
  %v2213 = vadd.f32 %v2153, %v2211
  %v2214 = vadd.f32 %v2154, %v2212
  %2215 = vmatpush.bf16.xpose.msra.mxu0 0
  %2216 = vmatpush.bf16.xpose.msra.mxu0 0
  %2217 = vmatpush.bf16.xpose.msra.mxu0 0
  %2218 = vmatpush.bf16.xpose.msra.mxu0 0
  %2219 = vmatpush.bf16.xpose.msra.mxu0 0
  %2220 = vmatpush.bf16.xpose.msra.mxu0 0
  %2221 = vmatpush.bf16.xpose.msra.mxu0 0
  %2222 = vmatpush.bf16.xpose.msra.mxu0 %v2032
  %2223 = vmatmul.bf16.gmra.mxu0 %v1968
  %v2224 = vpop.f32.mrf.mxu0
  %v2225 = vadd.f32 0.0, %v2224
  %v2226 = vpop.f32.mrf.mxu0
  %v2227 = vadd.f32 0.0, %v2226
  %2228 = vdwg.mxu0
  %v2229 = vmul.f32 %v2225, 0.35355338
  %v2230 = vmul.f32 %v2227, 0.35355338
  %v2231 = vsel %vm1791, %v2229, -inf
  %2232 = vmax.xlane.f32.xlu0 %v2231
  %v2233 = vpop.xlane.xlu0 %2232
  %v2234 = vsel %vm1795, %v2230, -inf
  %2235 = vmax.xlane.f32.xlu0 %v2234
  %v2236 = vpop.xlane.xlu0 %2235
  %v2237 = vsub.f32 %v2229, %v2233
  %v2238 = vsub.f32 %v2230, %v2236
  %v2239 = vmul.f32 %v2237, 1.442695
  %v2240 = vpow.pop %v2239
  %v2241 = vmul.f32 %v2238, 1.442695
  %v2242 = vpow.pop %v2241
  %v2243 = vsel %vm1791, %v2240, 0.0
  %2244 = vadd.xlane.f32.xlu0 %v2243
  %v2245 = vpop.xlane.xlu0 %2244
  %v2246 = vsel %vm1795, %v2242, 0.0
  %2247 = vadd.xlane.f32.xlu0 %v2246
  %v2248 = vpop.xlane.xlu0 %2247
  %v2249 = vrcp.pop %v2245
  %v2250 = vrcp.pop %v2248
  %v2251 = vmul.f32 %v2240, %v2249
  %v2252 = vmul.f32 %v2242, %v2250
  %v2253 = vpack.c.bf16 %v2252, %v2251
  %v2255 = vsel %vm1791, %v2253, 0
  %2257 = vmatpush.bf16.msra.mxu0 0
  %2258 = vmatpush.bf16.msra.mxu0 0
  %2259 = vmatpush.bf16.msra.mxu0 0
  %2260 = vmatpush.bf16.msra.mxu0 0
  %2261 = vmatpush.bf16.msra.mxu0 0
  %2262 = vmatpush.bf16.msra.mxu0 0
  %2263 = vmatpush.bf16.msra.mxu0 0
  %2264 = vmatpush.bf16.msra.mxu0 %v2073
  %2265 = vmatmul.bf16.gmra.mxu0 %v2255
  %v2266 = vpop.f32.mrf.mxu0
  %v2267 = vadd.f32 0.0, %v2266
  %v2268 = vpop.f32.mrf.mxu0
  %v2269 = vadd.f32 0.0, %v2268
  %2270 = vdwg.mxu0
  %v2271 = vmul.f32 %v2267, %v1763
  %v2272 = vmul.f32 %v2269, %v1763
  %v2273 = vadd.f32 %v2213, %v2271
  %v2274 = vadd.f32 %v2214, %v2272
  %v2277 = vrot.slane %v2273, 4
  %v2278 = vrot.slane %v2274, 4
  %v2279 = vsel %vm838, %v2277, %v2278
  %v2282 = vsel %vm838, %v2029, %v2277
  %v2285 = vrot.slane %v1549, 4
  %v2286 = vrot.slane %v1551, 4
  %v2287 = vsel %vm838, %v2285, %v2286
  %v2290 = vsel %vm838, %v1551, %v2285
  %v2291 = vld [vmem:[%s63] sm:$0xf]
  %v2292 = vld [vmem:[%s63 + $0x4] sm:$0xf]
  %v2293 = vld [vmem:[%s63 + $0x8] sm:$0xf]
  %v2294 = vld [vmem:[%s63 + $0xc] sm:$0xf]
  %v2295 = vpack.c.bf16 %v2282, %v2028
  %v2296 = vpack.c.bf16 %v2279, %v2279
  %v2301 = vunpack.c.l.b16 %v2291
  %v2302 = vunpack.c.l.b16 %v2292
  %v2303 = vunpack.c.l.b16 %v2293
  %v2304 = vunpack.c.l.b16 %v2294
  %v2305 = vpack.c.b16 %v2302, %v2301
  %v2306 = vpack.c.b16 %v2304, %v2303
  %v2310 = vsel %vm489, %v2295, 0
  %v2313 = vsel %vm489, %v2296, 0
  %2315 = vmatpush.bf16.msra.mxu0 0
  %2316 = vmatpush.bf16.msra.mxu0 0
  %2317 = vmatpush.bf16.msra.mxu0 0
  %2318 = vmatpush.bf16.msra.mxu0 0
  %2319 = vmatpush.bf16.msra.mxu0 0
  %2320 = vmatpush.bf16.msra.mxu0 0
  %2321 = vmatpush.bf16.msra.mxu0 %v2306
  %2322 = vmatpush.bf16.msra.mxu0 %v2305
  %2323 = vmatmul.bf16.gmra.mxu0 %v2310
  %v2324 = vpop.f32.mrf.mxu0
  %v2325 = vadd.f32 0.0, %v2324
  %v2326 = vpop.f32.mrf.mxu0
  %v2327 = vadd.f32 0.0, %v2326
  %2328 = vmatmul.bf16.gmra.mxu0 %v2313
  %v2329 = vpop.f32.mrf.mxu0
  %v2330 = vadd.f32 0.0, %v2329
  %v2331 = vpop.f32.mrf.mxu0
  %2332 = vdwg.mxu0
  %v2333 = vadd.f32 %v1549, %v2325
  %v2334 = vadd.f32 %v2290, %v2327
  %v2335 = vadd.f32 %v2287, %v2330
  %v2336 = vld [vmem:[%s65] sm:$0x1]
  %v2338 = vperm.slane %v2336, 0
  %v2340 = vadd.f32 %v2333, %v2338
  %v2341 = vadd.f32 %v2334, %v2338
  %v2342 = vadd.f32 %v2335, %v2338
  %v2343 = vld [vmem:[%s69] sm:$0x1]
  %v2344 = vld [vmem:[%s71] sm:$0x1]
  %v2345 = vsel %vm489, %v2340, 0.0
  %2346 = vadd.xlane.f32.xlu0 %v2345
  %v2347 = vpop.xlane.xlu0 %2346
  %v2348 = vsel %vm489, %v2341, 0.0
  %2349 = vadd.xlane.f32.xlu0 %v2348
  %v2350 = vpop.xlane.xlu0 %2349
  %v2351 = vsel %vm489, %v2342, 0.0
  %2352 = vadd.xlane.f32.xlu0 %v2351
  %v2353 = vpop.xlane.xlu0 %2352
  %v2354 = vmul.f32 %v2347, %v1570
  %v2355 = vmul.f32 %v2350, %v1570
  %v2356 = vmul.f32 %v2353, %v1570
  %v2357 = vsub.f32 %v2340, %v2354
  %v2358 = vsub.f32 %v2341, %v2355
  %v2359 = vsub.f32 %v2342, %v2356
  %v2360 = vmul.f32 %v2357, %v2357
  %v2361 = vmul.f32 %v2358, %v2358
  %v2362 = vmul.f32 %v2359, %v2359
  %v2363 = vsel %vm489, %v2360, 0.0
  %2364 = vadd.xlane.f32.xlu0 %v2363
  %v2365 = vpop.xlane.xlu0 %2364
  %v2366 = vsel %vm489, %v2361, 0.0
  %2367 = vadd.xlane.f32.xlu0 %v2366
  %v2368 = vpop.xlane.xlu0 %2367
  %v2369 = vsel %vm489, %v2362, 0.0
  %2370 = vadd.xlane.f32.xlu0 %v2369
  %v2371 = vpop.xlane.xlu0 %2370
  %v2372 = vmul.f32 %v2365, %v1570
  %v2373 = vmul.f32 %v2368, %v1570
  %v2374 = vmul.f32 %v2371, %v1570
  %v2375 = vadd.f32 %v2372, 1e-05
  %v2376 = vadd.f32 %v2373, 1e-05
  %v2377 = vadd.f32 %v2374, 1e-05
  %v2378 = vrsqrt.pop %v2375
  %v2379 = vmul.f32 %v2378, %v2375
  %v2380 = vmul.f32 %v2379, %v2378
  %v2381 = vmul.f32 0.5, %v2380
  %v2382 = vsub.f32 1.5, %v2381
  %v2383 = vmul.f32 %v2378, %v2382
  %vm2384 = vweird.f32 %v2375
  %vm2385 = vweird.f32 %v2378
  %vm2386 = vmor %vm2384, %vm2385
  %v2387 = vsel %vm2386, %v2378, %v2383
  %v2388 = vrsqrt.pop %v2376
  %v2389 = vmul.f32 %v2388, %v2376
  %v2390 = vmul.f32 %v2389, %v2388
  %v2391 = vmul.f32 0.5, %v2390
  %v2392 = vsub.f32 1.5, %v2391
  %v2393 = vmul.f32 %v2388, %v2392
  %vm2394 = vweird.f32 %v2376
  %vm2395 = vweird.f32 %v2388
  %vm2396 = vmor %vm2394, %vm2395
  %v2397 = vsel %vm2396, %v2388, %v2393
  %v2398 = vrsqrt.pop %v2377
  %v2399 = vmul.f32 %v2398, %v2377
  %v2400 = vmul.f32 %v2399, %v2398
  %v2401 = vmul.f32 0.5, %v2400
  %v2402 = vsub.f32 1.5, %v2401
  %v2403 = vmul.f32 %v2398, %v2402
  %vm2404 = vweird.f32 %v2377
  %vm2405 = vweird.f32 %v2398
  %vm2406 = vmor %vm2404, %vm2405
  %v2407 = vsel %vm2406, %v2398, %v2403
  %v2408 = vmul.f32 %v2357, %v2387
  %v2409 = vmul.f32 %v2358, %v2397
  %v2410 = vmul.f32 %v2359, %v2407
  %v2412 = vperm.slane %v2343, 0
  %v2414 = vmul.f32 %v2408, %v2412
  %v2415 = vmul.f32 %v2409, %v2412
  %v2416 = vmul.f32 %v2410, %v2412
  %v2418 = vperm.slane %v2344, 0
  %v2420 = vadd.f32 %v2414, %v2418
  %v2421 = vadd.f32 %v2415, %v2418
  %v2422 = vadd.f32 %v2416, %v2418
  %v2423 = vld [vmem:[%s73] sm:$0xf]
  %v2424 = vld [vmem:[%s73 + $0x4] sm:$0xf]
  %v2425 = vld [vmem:[%s73 + $0x8] sm:$0xf]
  %v2426 = vld [vmem:[%s73 + $0xc] sm:$0xf]
  %v2427 = vpack.c.bf16 %v2421, %v2420
  %v2428 = vpack.c.bf16 %v2422, %v2422
  %v2429 = vld [vmem:[%s75] sm:$0x1]
  %v2431 = vperm.slane %v2429, 0
  %v2437 = vunpack.c.l.b16 %v2423
  %v2438 = vunpack.c.l.b16 %v2424
  %v2439 = vunpack.c.l.b16 %v2425
  %v2440 = vunpack.c.l.b16 %v2426
  %v2441 = vpack.c.b16 %v2438, %v2437
  %v2442 = vpack.c.b16 %v2440, %v2439
  %v2446 = vsel %vm489, %v2427, 0
  %v2449 = vsel %vm489, %v2428, 0
  %2451 = vmatpush.bf16.msra.mxu0 0
  %2452 = vmatpush.bf16.msra.mxu0 0
  %2453 = vmatpush.bf16.msra.mxu0 0
  %2454 = vmatpush.bf16.msra.mxu0 0
  %2455 = vmatpush.bf16.msra.mxu0 0
  %2456 = vmatpush.bf16.msra.mxu0 0
  %2457 = vmatpush.bf16.msra.mxu0 %v2442
  %2458 = vmatpush.bf16.msra.mxu0 %v2441
  %2459 = vmatmul.bf16.gmra.mxu0 %v2446
  %v2460 = vpop.f32.mrf.mxu0
  %v2461 = vadd.f32 %v2431, %v2460
  %v2462 = vpop.f32.mrf.mxu0
  %v2463 = vadd.f32 %v2431, %v2462
  %2464 = vmatmul.bf16.gmra.mxu0 %v2449
  %v2465 = vpop.f32.mrf.mxu0
  %v2466 = vadd.f32 %v2431, %v2465
  %v2467 = vpop.f32.mrf.mxu0
  %2468 = vdwg.mxu0
  %v2469 = vmax.f32 %v2461, 0.0
  %v2470 = vmax.f32 %v2463, 0.0
  %v2471 = vmax.f32 %v2466, 0.0
  %v2472 = vld [vmem:[%s77] sm:$0xf]
  %v2473 = vld [vmem:[%s77 + $0x4] sm:$0xf]
  %v2474 = vld [vmem:[%s77 + $0x8] sm:$0xf]
  %v2475 = vld [vmem:[%s77 + $0xc] sm:$0xf]
  %v2476 = vld [vmem:[%s77 + $0x10] sm:$0xf]
  %v2477 = vld [vmem:[%s77 + $0x14] sm:$0xf]
  %v2478 = vld [vmem:[%s77 + $0x18] sm:$0xf]
  %v2479 = vld [vmem:[%s77 + $0x1c] sm:$0xf]
  %v2480 = vpack.c.bf16 %v2470, %v2469
  %v2481 = vpack.c.bf16 %v2471, %v2471
  %v2490 = vunpack.c.l.b16 %v2472
  %v2491 = vunpack.c.l.b16 %v2473
  %v2492 = vunpack.c.l.b16 %v2474
  %v2493 = vunpack.c.l.b16 %v2475
  %v2494 = vunpack.c.l.b16 %v2476
  %v2495 = vunpack.c.l.b16 %v2477
  %v2496 = vunpack.c.l.b16 %v2478
  %v2497 = vunpack.c.l.b16 %v2479
  %v2498 = vpack.c.b16 %v2491, %v2490
  %v2499 = vpack.c.b16 %v2493, %v2492
  %v2500 = vpack.c.b16 %v2495, %v2494
  %v2501 = vpack.c.b16 %v2497, %v2496
  %v2507 = vsel %vm292, %v2480, 0
  %v2510 = vsel %vm292, %v2481, 0
  %2512 = vmatpush.bf16.msra.mxu0 0
  %2513 = vmatpush.bf16.msra.mxu0 0
  %2514 = vmatpush.bf16.msra.mxu0 0
  %2515 = vmatpush.bf16.msra.mxu0 0
  %2516 = vmatpush.bf16.msra.mxu0 %v2501
  %2517 = vmatpush.bf16.msra.mxu0 %v2500
  %2518 = vmatpush.bf16.msra.mxu0 %v2499
  %2519 = vmatpush.bf16.msra.mxu0 %v2498
  %2520 = vmatmul.bf16.gmra.mxu0 %v2507
  %v2521 = vpop.f32.mrf.mxu0
  %v2522 = vadd.f32 0.0, %v2521
  %v2523 = vpop.f32.mrf.mxu0
  %v2524 = vadd.f32 0.0, %v2523
  %2525 = vmatmul.bf16.gmra.mxu0 %v2510
  %v2526 = vpop.f32.mrf.mxu0
  %v2527 = vadd.f32 0.0, %v2526
  %v2528 = vpop.f32.mrf.mxu0
  %2529 = vdwg.mxu0
  %v2530 = vadd.f32 %v2340, %v2522
  %v2531 = vadd.f32 %v2341, %v2524
  %v2532 = vadd.f32 %v2342, %v2527
  %v2533 = vld [vmem:[%s79] sm:$0x1]
  %v2535 = vperm.slane %v2533, 0
  %v2537 = vadd.f32 %v2530, %v2535
  %v2538 = vadd.f32 %v2531, %v2535
  %v2539 = vadd.f32 %v2532, %v2535
  %v2540 = vld [vmem:[%s81] sm:$0x1]
  %v2541 = vld [vmem:[%s83] sm:$0x1]
  %v2542 = vsel %vm489, %v2537, 0.0
  %2543 = vadd.xlane.f32.xlu0 %v2542
  %v2544 = vpop.xlane.xlu0 %2543
  %v2545 = vsel %vm489, %v2538, 0.0
  %2546 = vadd.xlane.f32.xlu0 %v2545
  %v2547 = vpop.xlane.xlu0 %2546
  %v2548 = vsel %vm489, %v2539, 0.0
  %2549 = vadd.xlane.f32.xlu0 %v2548
  %v2550 = vpop.xlane.xlu0 %2549
  %v2551 = vmul.f32 %v2544, %v1570
  %v2552 = vmul.f32 %v2547, %v1570
  %v2553 = vmul.f32 %v2550, %v1570
  %v2554 = vsub.f32 %v2537, %v2551
  %v2555 = vsub.f32 %v2538, %v2552
  %v2556 = vsub.f32 %v2539, %v2553
  %v2557 = vmul.f32 %v2554, %v2554
  %v2558 = vmul.f32 %v2555, %v2555
  %v2559 = vmul.f32 %v2556, %v2556
  %v2560 = vsel %vm489, %v2557, 0.0
  %2561 = vadd.xlane.f32.xlu0 %v2560
  %v2562 = vpop.xlane.xlu0 %2561
  %v2563 = vsel %vm489, %v2558, 0.0
  %2564 = vadd.xlane.f32.xlu0 %v2563
  %v2565 = vpop.xlane.xlu0 %2564
  %v2566 = vsel %vm489, %v2559, 0.0
  %2567 = vadd.xlane.f32.xlu0 %v2566
  %v2568 = vpop.xlane.xlu0 %2567
  %v2569 = vmul.f32 %v2562, %v1570
  %v2570 = vmul.f32 %v2565, %v1570
  %v2571 = vmul.f32 %v2568, %v1570
  %v2572 = vadd.f32 %v2569, 1e-05
  %v2573 = vadd.f32 %v2570, 1e-05
  %v2574 = vadd.f32 %v2571, 1e-05
  %v2575 = vrsqrt.pop %v2572
  %v2576 = vmul.f32 %v2575, %v2572
  %v2577 = vmul.f32 %v2576, %v2575
  %v2578 = vmul.f32 0.5, %v2577
  %v2579 = vsub.f32 1.5, %v2578
  %v2580 = vmul.f32 %v2575, %v2579
  %vm2581 = vweird.f32 %v2572
  %vm2582 = vweird.f32 %v2575
  %vm2583 = vmor %vm2581, %vm2582
  %v2584 = vsel %vm2583, %v2575, %v2580
  %v2585 = vrsqrt.pop %v2573
  %v2586 = vmul.f32 %v2585, %v2573
  %v2587 = vmul.f32 %v2586, %v2585
  %v2588 = vmul.f32 0.5, %v2587
  %v2589 = vsub.f32 1.5, %v2588
  %v2590 = vmul.f32 %v2585, %v2589
  %vm2591 = vweird.f32 %v2573
  %vm2592 = vweird.f32 %v2585
  %vm2593 = vmor %vm2591, %vm2592
  %v2594 = vsel %vm2593, %v2585, %v2590
  %v2595 = vrsqrt.pop %v2574
  %v2596 = vmul.f32 %v2595, %v2574
  %v2597 = vmul.f32 %v2596, %v2595
  %v2598 = vmul.f32 0.5, %v2597
  %v2599 = vsub.f32 1.5, %v2598
  %v2600 = vmul.f32 %v2595, %v2599
  %vm2601 = vweird.f32 %v2574
  %vm2602 = vweird.f32 %v2595
  %vm2603 = vmor %vm2601, %vm2602
  %v2604 = vsel %vm2603, %v2595, %v2600
  %v2605 = vmul.f32 %v2554, %v2584
  %v2606 = vmul.f32 %v2555, %v2594
  %v2607 = vmul.f32 %v2556, %v2604
  %v2609 = vperm.slane %v2540, 0
  %v2611 = vmul.f32 %v2605, %v2609
  %v2612 = vmul.f32 %v2606, %v2609
  %v2613 = vmul.f32 %v2607, %v2609
  %v2615 = vperm.slane %v2541, 0
  %v2617 = vadd.f32 %v2611, %v2615
  %v2618 = vadd.f32 %v2612, %v2615
  %v2619 = vadd.f32 %v2613, %v2615
  %2620 = vst.msk [vmem:[%s87] sm:$0xff] %vm489, %v2617
  %2621 = vst.msk [vmem:[%s87 + $0x8] sm:$0xff] %vm489, %v2618
  %2622 = vst.msk [vmem:[%s87 + $0x10] sm:$0xff] %vm489, %v2619
  // Predicated region
  $region170: #{_lambda_.2} parent=0 // pred_check
    _
  $region171: #{_lambda_.2} parent=0 // pred_check_branch
    %2624 = sbr.rel (0) target = $region173
  $region172: #{_lambda_.2} parent=0 // pred_region
    _
  $region173: #{_lambda_.2} parent=0 // pred_fallthru
    _
  // Predicated region
  $region174: #{_lambda_.2} parent=0 // pred_check
    _
  $region175: #{_lambda_.2} parent=0 // pred_check_branch
    %2626 = sbr.rel (0) target = $region177
  $region176: #{_lambda_.2} parent=0 // pred_region
    _
  $region177: #{_lambda_.2} parent=0 // pred_fallthru
    _
  // Predicated region
  $region178: #{_lambda_.2} parent=0 // pred_check
    _
  $region179: #{_lambda_.2} parent=0 // pred_check_branch
    %2628 = sbr.rel (0) target = $region181
  $region180: #{_lambda_.2} parent=0 // pred_region
    _
  $region181: #{_lambda_.2} parent=0 // pred_fallthru
    _
  // Predicated region
  $region182: #{_lambda_.2} parent=0 // pred_check
    _
  $region183: #{_lambda_.2} parent=0 // pred_check_branch
    %2630 = sbr.rel (0) target = $region185
  $region184: #{_lambda_.2} parent=0 // pred_region
    _
  $region185: #{_lambda_.2} parent=0 // pred_fallthru
    _
  // Predicated region
  $region186: #{_lambda_.2} parent=0 // pred_check
    _
  $region187: #{_lambda_.2} parent=0 // pred_check_branch
    %2632 = sbr.rel (0) target = $region189
  $region188: #{_lambda_.2} parent=0 // pred_region
    _
  $region189: #{_lambda_.2} parent=0 // pred_fallthru
    _
  // Predicated region
  $region190: #{_lambda_.2} parent=0 // pred_check
    _
  $region191: #{_lambda_.2} parent=0 // pred_check_branch
    %2634 = sbr.rel (0) target = $region193
  $region192: #{_lambda_.2} parent=0 // pred_region
    _
  $region193: #{_lambda_.2} parent=0 // pred_fallthru
    _

</llo_original>
